<compile_context>
chip_gen: v7x
topology: tpu7x:2x2x1
jax: 0.10.0
libtpu: 0.0.40
codegen_flags: <defaults>
</compile_context>

<pallas_src>
import jax
import jax.numpy as jnp
from jax import lax
from jax.experimental import pallas as pl
from jax.experimental.pallas import tpu as pltpu

BN_EPS = 1e-5
BN_SCALE = 1.0 / (1.0 + BN_EPS) ** 0.5        # folded BatchNorm (eval / default stats)
RECEPTIVE_SIZES = (3, 5, 7)                   # static receptive sizes of branch1/2/3
_HIGH = jax.lax.Precision.HIGHEST


# ----------------------------------------------------------------------------
# Static helpers (host-side layout plumbing; nothing here runs inside the kernel).
# ----------------------------------------------------------------------------
def _offsets(kh, kw, dil):
    """PyTorch 'same'-padded conv tap offsets (dy, dx), ky-major / kx-minor order."""
    ph = ((kh - 1) * dil) // 2
    pw = ((kw - 1) * dil) // 2
    return [(ky * dil - ph, kx * dil - pw) for ky in range(kh) for kx in range(kw)]


def _taps(w_pt):
    """(Cout, Ci, KH, KW) -> (KH*KW, Cout, Ci), tap order matching _offsets()."""
    co, ci, kh, kw = w_pt.shape
    return jnp.transpose(w_pt, (2, 3, 0, 1)).reshape(kh * kw, co, ci)


def _fold_1x1(w_taps, w_1x1):
    """conv(w_taps) o conv1x1(w_1x1):  (T,Co,Cm),(Cm,Ci) -> (T,Co,Ci)."""
    return jnp.einsum("tom,mi->toi", w_taps, w_1x1, precision=_HIGH)


def _stage_matrix(w_taps, k_pad):
    """(T, Cout, Ci) -> (Cout, k_pad) im2col matmul weight, zero padded along K."""
    t, co, ci = w_taps.shape
    w = jnp.transpose(w_taps, (1, 0, 2)).reshape(co, t * ci)
    return jnp.pad(w, ((0, 0), (0, k_pad - t * ci)))


def _prepare_stages(params):
    """Fold / pack all SPFF weights into one (n_stage, Cout, K_pad) array + static plan.

    Folding (exact up to fp reassociation):
      * conv_cat on concat(x0, x01, x012, x0123) == sum_i cat_eff[i](x_i) with
        cat_eff[i] = sum_{g >= i} conv_cat_group[g]   (suffix sums),
      * branch_i.conv0 (1x1) is folded into branch_i.conv1,
      * branch0 (1x1) is folded into cat_eff[0]; conv_res (1x1) is added to that
        stage's centre tap  ->  the whole "x path" becomes a single 3x3 stage.
    Weights are assumed already BatchNorm-folded (see make_spff_params).
    """
    cout, cin = params["branch0"].shape[:2]

    wcat = params["conv_cat"]                                    # (Cout, 4*Cout, 3, 3)
    groups = [wcat[:, g * cout:(g + 1) * cout] for g in range(4)]
    cat_eff = [sum(groups[g:]) for g in range(4)]                # suffix sums

    w_b0 = params["branch0"][:, :, 0, 0]                         # (Cout, Cin)
    w_res = params["conv_res"][:, :, 0, 0]                       # (Cout, Cin)

    stages = []                                                  # (w_taps, offsets, Ci)
    # stage 0: x-path  =  cat_eff[0] o branch0  (+ conv_res folded into centre tap)
    t0 = _fold_1x1(_taps(cat_eff[0]), w_b0)                      # (9, Cout, Cin)
    t0 = t0.at[4].add(w_res)                                     # centre tap (dy,dx)=(0,0)
    stages.append((t0, _offsets(3, 3, 1), cin))

    for b, rs in enumerate(RECEPTIVE_SIZES):
        bp = params[f"branch{b + 1}"]
        w1 = _fold_1x1(_taps(bp["conv1"]), bp["conv0"][:, :, 0, 0])      # conv0 -> conv1
        stages.append((w1, _offsets(1, rs, 1), cin))                     # (1, rs)
        stages.append((_taps(bp["conv2"]), _offsets(rs, 1, 1), cout))    # (rs, 1)
        stages.append((_taps(bp["conv3"]), _offsets(3, 3, rs), cout))    # 3x3, dil rs
        stages.append((_taps(cat_eff[b + 1]), _offsets(3, 3, 1), cout))  # conv_cat chunk

    k_pad = max(w.shape[0] * ci for w, _, ci in stages)
    w_packed = jnp.stack([_stage_matrix(w, k_pad) for w, _, _ in stages])
    offs = tuple(tuple(o) for _, o, _ in stages)
    cins = tuple(ci for _, _, ci in stages)
    return w_packed, offs, cins, k_pad


# ----------------------------------------------------------------------------
# The fused SPFF Pallas kernel.
# ----------------------------------------------------------------------------
def _spff_pallas(x2d, w_packed, offs, cins, cout, H, W, k_pad):
    N, cin, HW = x2d.shape
    n_stage = w_packed.shape[0]
    cmax = max(cin, cout)

    dx_max = max(abs(dx) for o in offs for _, dx in o)
    assert dx_max < W, "horizontal taps must be narrower than the image width"
    shift_max = max(abs(dy) * W + abs(dx) for o in offs for dy, dx in o)
    M = ((shift_max + 127) // 128) * 128          # lane-aligned flat zero halo
    k0 = len(offs[0]) * cins[0]                   # im2col rows written by stage 0

    def kernel(x_ref, w_ref, o_ref, pad_ref, col_ref):
        # Zero only the halo strips (every grid step, so correctness does not depend
        # on program_id ordering when the parallel axis is sharded across cores).
        pad_ref[:, :M] = jnp.zeros((cmax, M), jnp.float32)
        pad_ref[:, M + HW:] = jnp.zeros((cmax, M), jnp.float32)
        if k0 < k_pad:                            # stage 0 initialises rows [0, k0)
            col_ref[k0:, :] = jnp.zeros((k_pad - k0, HW), jnp.float32)

        # Column-validity masks generated in-kernel (no extra HBM input).  The f32
        # floor-div is exact for these sizes.
        colf = lax.broadcasted_iota(jnp.int32, (1, HW), 1).astype(jnp.float32)
        colf = colf - jnp.floor(colf / jnp.float32(W)) * jnp.float32(W)
        mask_cache = {}

        def col_mask(dx):
            if dx not in mask_cache:
                mask_cache[dx] = (colf < jnp.float32(W - dx)) if dx > 0 \
                    else (colf >= jnp.float32(-dx))
            return mask_cache[dx]

        def conv_stage(act, s):
            """One 'same'-padded conv as a single K-stacked (im2col) MXU dot."""
            ci = cins[s]
            pad_ref[:ci, M:M + HW] = act
            for t, (dy, dx) in enumerate(offs[s]):
                off = M + dy * W + dx             # static flat tap shift
                v = pad_ref[:ci, off:off + HW]
                if dx != 0:                       # zero row-boundary wrap
                    v = jnp.where(col_mask(dx), v, 0.0)
                col_ref[t * ci:(t + 1) * ci, :] = v
            # Zero weight columns beyond this stage's K kill any stale im2col rows.
            return jnp.dot(w_ref[s], col_ref[...],
                           preferred_element_type=jnp.float32)

        x_in = x_ref[0].astype(jnp.float32)       # (Cin, HW), lane dense

        # x path: branch0 + conv_res folded into cumulative conv_cat group 0.
        # Runs first: its K == k_pad (for Cin >= Cout) or the tail zero above covers
        # the rest, so every col_ref row is defined before the first dot.
        acc = conv_stage(x_in, 0)
        for b in range(len(RECEPTIVE_SIZES)):
            s = 1 + 4 * b
            t = conv_stage(x_in, s)               # (1, rs) conv (conv0 folded in)
            t = conv_stage(t, s + 1)              # (rs, 1) conv
            t = conv_stage(t, s + 2)              # 3x3 conv, dilation rs
            acc = acc + conv_stage(t, s + 3)      # cumulative conv_cat chunk
        o_ref[0] = jnp.maximum(acc, 0.0).astype(o_ref.dtype)

    # TODO(synk): for large H*W add a spatially tiled grid axis with halo-aware
    # index_maps (re-derive the tile budget against v7x's 64 MiB VMEM); at these
    # shapes one whole image per grid step easily fits VMEM.
    # TODO(synk): optional bf16 matmul operands (f32 accumulation) for v5e/v6e MXU.
    return pl.pallas_call(
        kernel,
        out_shape=jax.ShapeDtypeStruct((N, cout, HW), x2d.dtype),
        grid=(N,),
        in_specs=[pl.BlockSpec((1, cin, HW), lambda n: (n, 0, 0)),
                  pl.BlockSpec((n_stage, cout, k_pad), lambda n: (0, 0, 0))],
        out_specs=pl.BlockSpec((1, cout, HW), lambda n: (n, 0, 0)),
        scratch_shapes=[pltpu.VMEM((cmax, HW + 2 * M), jnp.float32),   # flat halo line
                        pltpu.VMEM((k_pad, HW), jnp.float32)],          # im2col stack
        compiler_params=pltpu.CompilerParams(
            dimension_semantics=("parallel",),
            vmem_limit_bytes=32 * 1024 * 1024),
    )(x2d, w_packed)


# ----------------------------------------------------------------------------
# Parameters (PyTorch layout, BN folded) and forward wrapper.
# ----------------------------------------------------------------------------
def _conv_w(key, cin, cout, kh, kw):
    # TODO(synk): with trained BN stats fold the per-channel scale AND bias here.
    w = jax.random.normal(key, (cout, cin, kh, kw), jnp.float32) * 0.1
    return w * BN_SCALE     # fold BatchNorm (eval mode, default stats); bias folds to 0


def make_spff_params(key, cin, cout):
    ks = jax.random.split(key, 15)
    p = {"branch0": _conv_w(ks[0], cin, cout, 1, 1)}
    i = 1
    for name, rs in zip(("branch1", "branch2", "branch3"), RECEPTIVE_SIZES):
        p[name] = {
            "conv0": _conv_w(ks[i + 0], cin, cout, 1, 1),
            "conv1": _conv_w(ks[i + 1], cout, cout, 1, rs),
            "conv2": _conv_w(ks[i + 2], cout, cout, rs, 1),
            "conv3": _conv_w(ks[i + 3], cout, cout, 3, 3),
        }
        i += 4
    p["conv_cat"] = _conv_w(ks[13], 4 * cout, cout, 3, 3)
    p["conv_res"] = _conv_w(ks[14], cin, cout, 1, 1)
    return p


@jax.jit
def spff_forward(params, x_nchw):
    N, cin, H, W = x_nchw.shape
    cout = params["branch0"].shape[0]
    w_packed, offs, cins, k_pad = _prepare_stages(params)      # host-side weight folding
    x2d = x_nchw.reshape(N, cin, H * W)                        # NCHW, flattened (lane dense)
    out2d = _spff_pallas(x2d, w_packed, offs, cins, cout, H, W, k_pad)
    return out2d.reshape(N, cout, H, W)                        # already NCHW


# ----------------------------------------------------------------------------
# Pure-JAX reference (for a correctness self-check only).
# ----------------------------------------------------------------------------
def spff_reference(params, x):
    def cv(t, w, dil=(1, 1)):
        kh, kw = w.shape[2], w.shape[3]
        ph = ((kh - 1) * dil[0]) // 2
        pw = ((kw - 1) * dil[1]) // 2
        return jax.lax.conv_general_dilated(
            t, w, window_strides=(1, 1), padding=((ph, ph), (pw, pw)),
            rhs_dilation=dil, dimension_numbers=("NCHW", "OIHW", "NCHW"),
            precision=jax.lax.Precision.HIGHEST)

    def branch(bp, rs):
        t = cv(x, bp["conv0"]); t = cv(t, bp["conv1"]); t = cv(t, bp["conv2"])
        return cv(t, bp["conv3"], (rs, rs))

    x0 = cv(x, params["branch0"])
    x1 = branch(params["branch1"], 3)
    x2 = branch(params["branch2"], 5)
    x3 = branch(params["branch3"], 7)
    x01 = x0 + x1
    x012 = x01 + x2
    x0123 = x012 + x3
    xc = cv(jnp.concatenate((x0, x01, x012, x0123), axis=1), params["conv_cat"])
    return jnp.maximum(xc + cv(x, params["conv_res"]), 0.0)


if __name__ == "__main__":
    key = jax.random.PRNGKey(0)
    kx, kp = jax.random.split(key)

    N, Cin, Cout, H, W = 2, 4, 4, 16, 16
    x = jax.random.normal(kx, (N, Cin, H, W), jnp.float32)     # PyTorch-style NCHW input
    params = make_spff_params(kp, Cin, Cout)

    y = spff_forward(params, x)
    jax.block_until_ready(y)
    assert y.shape == (N, Cout, H, W)

    y_ref = jax.jit(spff_reference)(params, x)
    err = float(jnp.max(jnp.abs(y - y_ref)))
    assert err < 1e-2, f"max abs error vs reference: {err}"

    print("KERNEL_OK")
</pallas_src>

<mosaic_0001>
module attributes {stable_mosaic.version = 11 : i64} {
  func.func @kernel(%arg0: i32, %arg1: memref<1x4x256xf32, #tpu.memory_space<vmem>>, %arg2: memref<13x4x36xf32, #tpu.memory_space<vmem>>, %arg3: memref<1x4x256xf32, #tpu.memory_space<vmem>>, %arg4: memref<4x512xf32, #tpu.memory_space<vmem>>, %arg5: memref<36x256xf32, #tpu.memory_space<vmem>>) attributes {dimension_semantics = [#tpu.dimension_semantics<parallel>], iteration_bounds = array<i64: 2>, scalar_prefetch = 0 : i64, scratch_operands = 2 : i64, tpu.core_type = #tpu.core_type<tc>, window_params = [{transform_indices = @transform_0, window_bounds = array<i64: 1, 4, 256>}, {pipeline_mode = #tpu.pipeline_mode<synchronous>, transform_indices = @transform_1, window_bounds = array<i64: 13, 4, 36>}, {transform_indices = @transform_2, window_bounds = array<i64: 1, 4, 256>}]} {
    %cst = arith.constant 0.000000e+00 : f32
    %0 = vector.broadcast %cst : f32 to vector<4x128xf32>
    %c0 = arith.constant 0 : index
    %c0_0 = arith.constant 0 : index
    %1 = vector.load %arg4[%c0, %c0_0] : memref<4x512xf32, #tpu.memory_space<vmem>>, vector<4x128xf32>
    tpu.vector_store %arg4[%c0, %c0_0], %0 {strides = array<i32>} : memref<4x512xf32, #tpu.memory_space<vmem>>, vector<4x128xf32>,
    %cst_1 = arith.constant 0.000000e+00 : f32
    %2 = vector.broadcast %cst_1 : f32 to vector<4x128xf32>
    %c0_2 = arith.constant 0 : index
    %c384 = arith.constant 384 : index
    %3 = vector.load %arg4[%c0_2, %c384] : memref<4x512xf32, #tpu.memory_space<vmem>>, vector<4x128xf32>
    tpu.vector_store %arg4[%c0_2, %c384], %2 {strides = array<i32>} : memref<4x512xf32, #tpu.memory_space<vmem>>, vector<4x128xf32>,
    %4 = tpu.iota {dimensions = array<i32: 1>} : vector<1x256xi32>
    %5 = arith.sitofp %4 : vector<1x256xi32> to vector<1x256xf32>
    %cst_3 = arith.constant 1.600000e+01 : f32
    %6 = vector.broadcast %cst_3 : f32 to vector<1x256xf32>
    %7 = arith.divf %5, %6 : vector<1x256xf32>
    %8 = math.floor %7 : vector<1x256xf32>
    %cst_4 = arith.constant 1.600000e+01 : f32
    %9 = vector.broadcast %cst_4 : f32 to vector<1x256xf32>
    %10 = arith.mulf %8, %9 : vector<1x256xf32>
    %11 = arith.subf %5, %10 : vector<1x256xf32>
    %c0_5 = arith.constant 0 : index
    %c0_6 = arith.constant 0 : index
    %c0_7 = arith.constant 0 : index
    %12 = vector.load %arg1[%c0_5, %c0_6, %c0_7] : memref<1x4x256xf32, #tpu.memory_space<vmem>>, vector<1x4x256xf32>
    %13 = vector.shape_cast %12 : vector<1x4x256xf32> to vector<4x256xf32>
    %c0_8 = arith.constant 0 : index
    %c128 = arith.constant 128 : index
    %14 = vector.load %arg4[%c0_8, %c128] : memref<4x512xf32, #tpu.memory_space<vmem>>, vector<4x256xf32>
    tpu.vector_store %arg4[%c0_8, %c128], %13 {strides = array<i32>} : memref<4x512xf32, #tpu.memory_space<vmem>>, vector<4x256xf32>,
    %c0_9 = arith.constant 0 : index
    %c111 = arith.constant 111 : index
    %15 = vector.load %arg4[%c0_9, %c111] : memref<4x512xf32, #tpu.memory_space<vmem>>, vector<4x256xf32>
    %cst_10 = arith.constant 1.000000e+00 : f32
    %16 = vector.broadcast %cst_10 : f32 to vector<1x256xf32>
    %17 = arith.cmpf oge, %11, %16 : vector<1x256xf32>
    %cst_11 = arith.constant 0.000000e+00 : f32
    %18 = vector.shape_cast %17 : vector<1x256xi1> to vector<1x256xi1>
    %19 = vector.broadcast %18 : vector<1x256xi1> to vector<4x256xi1>
    %20 = vector.broadcast %cst_11 : f32 to vector<4x256xf32>
    %21 = arith.select %19, %15, %20 : vector<4x256xi1>, vector<4x256xf32>
    %c0_12 = arith.constant 0 : index
    %c0_13 = arith.constant 0 : index
    %22 = vector.load %arg5[%c0_12, %c0_13] : memref<36x256xf32, #tpu.memory_space<vmem>>, vector<4x256xf32>
    tpu.vector_store %arg5[%c0_12, %c0_13], %21 {strides = array<i32>} : memref<36x256xf32, #tpu.memory_space<vmem>>, vector<4x256xf32>,
    %c0_14 = arith.constant 0 : index
    %c112 = arith.constant 112 : index
    %23 = vector.load %arg4[%c0_14, %c112] : memref<4x512xf32, #tpu.memory_space<vmem>>, vector<4x256xf32>
    %c4 = arith.constant 4 : index
    %c0_15 = arith.constant 0 : index
    %24 = vector.load %arg5[%c4, %c0_15] : memref<36x256xf32, #tpu.memory_space<vmem>>, vector<4x256xf32>
    tpu.vector_store %arg5[%c4, %c0_15], %23 {strides = array<i32>} : memref<36x256xf32, #tpu.memory_space<vmem>>, vector<4x256xf32>,
    %c0_16 = arith.constant 0 : index
    %c113 = arith.constant 113 : index
    %25 = vector.load %arg4[%c0_16, %c113] : memref<4x512xf32, #tpu.memory_space<vmem>>, vector<4x256xf32>
    %cst_17 = arith.constant 1.500000e+01 : f32
    %26 = vector.broadcast %cst_17 : f32 to vector<1x256xf32>
    %27 = arith.cmpf olt, %11, %26 : vector<1x256xf32>
    %cst_18 = arith.constant 0.000000e+00 : f32
    %28 = vector.shape_cast %27 : vector<1x256xi1> to vector<1x256xi1>
    %29 = vector.broadcast %28 : vector<1x256xi1> to vector<4x256xi1>
    %30 = vector.broadcast %cst_18 : f32 to vector<4x256xf32>
    %31 = arith.select %29, %25, %30 : vector<4x256xi1>, vector<4x256xf32>
    %c8 = arith.constant 8 : index
    %c0_19 = arith.constant 0 : index
    %32 = vector.load %arg5[%c8, %c0_19] : memref<36x256xf32, #tpu.memory_space<vmem>>, vector<4x256xf32>
    tpu.vector_store %arg5[%c8, %c0_19], %31 {strides = array<i32>} : memref<36x256xf32, #tpu.memory_space<vmem>>, vector<4x256xf32>,
    %c0_20 = arith.constant 0 : index
    %c127 = arith.constant 127 : index
    %33 = vector.load %arg4[%c0_20, %c127] : memref<4x512xf32, #tpu.memory_space<vmem>>, vector<4x256xf32>
    %cst_21 = arith.constant 0.000000e+00 : f32
    %34 = vector.shape_cast %17 : vector<1x256xi1> to vector<1x256xi1>
    %35 = vector.broadcast %34 : vector<1x256xi1> to vector<4x256xi1>
    %36 = vector.broadcast %cst_21 : f32 to vector<4x256xf32>
    %37 = arith.select %35, %33, %36 : vector<4x256xi1>, vector<4x256xf32>
    %c12 = arith.constant 12 : index
    %c0_22 = arith.constant 0 : index
    %38 = vector.load %arg5[%c12, %c0_22] : memref<36x256xf32, #tpu.memory_space<vmem>>, vector<4x256xf32>
    tpu.vector_store %arg5[%c12, %c0_22], %37 {strides = array<i32>} : memref<36x256xf32, #tpu.memory_space<vmem>>, vector<4x256xf32>,
    %c0_23 = arith.constant 0 : index
    %c128_24 = arith.constant 128 : index
    %39 = vector.load %arg4[%c0_23, %c128_24] : memref<4x512xf32, #tpu.memory_space<vmem>>, vector<4x256xf32>
    %c16 = arith.constant 16 : index
    %c0_25 = arith.constant 0 : index
    %40 = vector.load %arg5[%c16, %c0_25] : memref<36x256xf32, #tpu.memory_space<vmem>>, vector<4x256xf32>
    tpu.vector_store %arg5[%c16, %c0_25], %39 {strides = array<i32>} : memref<36x256xf32, #tpu.memory_space<vmem>>, vector<4x256xf32>,
    %c0_26 = arith.constant 0 : index
    %c129 = arith.constant 129 : index
    %41 = vector.load %arg4[%c0_26, %c129] : memref<4x512xf32, #tpu.memory_space<vmem>>, vector<4x256xf32>
    %cst_27 = arith.constant 0.000000e+00 : f32
    %42 = vector.shape_cast %27 : vector<1x256xi1> to vector<1x256xi1>
    %43 = vector.broadcast %42 : vector<1x256xi1> to vector<4x256xi1>
    %44 = vector.broadcast %cst_27 : f32 to vector<4x256xf32>
    %45 = arith.select %43, %41, %44 : vector<4x256xi1>, vector<4x256xf32>
    %c20 = arith.constant 20 : index
    %c0_28 = arith.constant 0 : index
    %46 = vector.load %arg5[%c20, %c0_28] : memref<36x256xf32, #tpu.memory_space<vmem>>, vector<4x256xf32>
    tpu.vector_store %arg5[%c20, %c0_28], %45 {strides = array<i32>} : memref<36x256xf32, #tpu.memory_space<vmem>>, vector<4x256xf32>,
    %c0_29 = arith.constant 0 : index
    %c143 = arith.constant 143 : index
    %47 = vector.load %arg4[%c0_29, %c143] : memref<4x512xf32, #tpu.memory_space<vmem>>, vector<4x256xf32>
    %cst_30 = arith.constant 0.000000e+00 : f32
    %48 = vector.shape_cast %17 : vector<1x256xi1> to vector<1x256xi1>
    %49 = vector.broadcast %48 : vector<1x256xi1> to vector<4x256xi1>
    %50 = vector.broadcast %cst_30 : f32 to vector<4x256xf32>
    %51 = arith.select %49, %47, %50 : vector<4x256xi1>, vector<4x256xf32>
    %c24 = arith.constant 24 : index
    %c0_31 = arith.constant 0 : index
    %52 = vector.load %arg5[%c24, %c0_31] : memref<36x256xf32, #tpu.memory_space<vmem>>, vector<4x256xf32>
    tpu.vector_store %arg5[%c24, %c0_31], %51 {strides = array<i32>} : memref<36x256xf32, #tpu.memory_space<vmem>>, vector<4x256xf32>,
    %c0_32 = arith.constant 0 : index
    %c144 = arith.constant 144 : index
    %53 = vector.load %arg4[%c0_32, %c144] : memref<4x512xf32, #tpu.memory_space<vmem>>, vector<4x256xf32>
    %c28 = arith.constant 28 : index
    %c0_33 = arith.constant 0 : index
    %54 = vector.load %arg5[%c28, %c0_33] : memref<36x256xf32, #tpu.memory_space<vmem>>, vector<4x256xf32>
    tpu.vector_store %arg5[%c28, %c0_33], %53 {strides = array<i32>} : memref<36x256xf32, #tpu.memory_space<vmem>>, vector<4x256xf32>,
    %c0_34 = arith.constant 0 : index
    %c145 = arith.constant 145 : index
    %55 = vector.load %arg4[%c0_34, %c145] : memref<4x512xf32, #tpu.memory_space<vmem>>, vector<4x256xf32>
    %cst_35 = arith.constant 0.000000e+00 : f32
    %56 = vector.shape_cast %27 : vector<1x256xi1> to vector<1x256xi1>
    %57 = vector.broadcast %56 : vector<1x256xi1> to vector<4x256xi1>
    %58 = vector.broadcast %cst_35 : f32 to vector<4x256xf32>
    %59 = arith.select %57, %55, %58 : vector<4x256xi1>, vector<4x256xf32>
    %c32 = arith.constant 32 : index
    %c0_36 = arith.constant 0 : index
    %60 = vector.load %arg5[%c32, %c0_36] : memref<36x256xf32, #tpu.memory_space<vmem>>, vector<4x256xf32>
    tpu.vector_store %arg5[%c32, %c0_36], %59 {strides = array<i32>} : memref<36x256xf32, #tpu.memory_space<vmem>>, vector<4x256xf32>,
    %c0_37 = arith.constant 0 : index
    %c0_38 = arith.constant 0 : index
    %c0_39 = arith.constant 0 : index
    %61 = vector.load %arg2[%c0_37, %c0_38, %c0_39] : memref<13x4x36xf32, #tpu.memory_space<vmem>>, vector<1x4x36xf32>
    %62 = vector.shape_cast %61 : vector<1x4x36xf32> to vector<4x36xf32>
    %c0_40 = arith.constant 0 : index
    %c0_41 = arith.constant 0 : index
    %63 = vector.load %arg5[%c0_40, %c0_41] : memref<36x256xf32, #tpu.memory_space<vmem>>, vector<36x256xf32>
    %cst_42 = arith.constant dense<0.000000e+00> : vector<4x256xf32>
    %64 = tpu.matmul %62, %63, %cst_42 {dimension_numbers = #tpu.dot_dimension_numbers<[1], [0], [0], [1], [0, 0, 1, 1], [], []>} : vector<4x36xf32>, vector<36x256xf32>, vector<4x256xf32> -> vector<4x256xf32>
    %c0_43 = arith.constant 0 : index
    %c128_44 = arith.constant 128 : index
    %65 = vector.load %arg4[%c0_43, %c128_44] : memref<4x512xf32, #tpu.memory_space<vmem>>, vector<4x256xf32>
    tpu.vector_store %arg4[%c0_43, %c128_44], %13 {strides = array<i32>} : memref<4x512xf32, #tpu.memory_space<vmem>>, vector<4x256xf32>,
    %c0_45 = arith.constant 0 : index
    %c127_46 = arith.constant 127 : index
    %66 = vector.load %arg4[%c0_45, %c127_46] : memref<4x512xf32, #tpu.memory_space<vmem>>, vector<4x256xf32>
    %cst_47 = arith.constant 0.000000e+00 : f32
    %67 = vector.shape_cast %17 : vector<1x256xi1> to vector<1x256xi1>
    %68 = vector.broadcast %67 : vector<1x256xi1> to vector<4x256xi1>
    %69 = vector.broadcast %cst_47 : f32 to vector<4x256xf32>
    %70 = arith.select %68, %66, %69 : vector<4x256xi1>, vector<4x256xf32>
    %c0_48 = arith.constant 0 : index
    %c0_49 = arith.constant 0 : index
    %71 = vector.load %arg5[%c0_48, %c0_49] : memref<36x256xf32, #tpu.memory_space<vmem>>, vector<4x256xf32>
    tpu.vector_store %arg5[%c0_48, %c0_49], %70 {strides = array<i32>} : memref<36x256xf32, #tpu.memory_space<vmem>>, vector<4x256xf32>,
    %c0_50 = arith.constant 0 : index
    %c128_51 = arith.constant 128 : index
    %72 = vector.load %arg4[%c0_50, %c128_51] : memref<4x512xf32, #tpu.memory_space<vmem>>, vector<4x256xf32>
    %c4_52 = arith.constant 4 : index
    %c0_53 = arith.constant 0 : index
    %73 = vector.load %arg5[%c4_52, %c0_53] : memref<36x256xf32, #tpu.memory_space<vmem>>, vector<4x256xf32>
    tpu.vector_store %arg5[%c4_52, %c0_53], %72 {strides = array<i32>} : memref<36x256xf32, #tpu.memory_space<vmem>>, vector<4x256xf32>,
    %c0_54 = arith.constant 0 : index
    %c129_55 = arith.constant 129 : index
    %74 = vector.load %arg4[%c0_54, %c129_55] : memref<4x512xf32, #tpu.memory_space<vmem>>, vector<4x256xf32>
    %cst_56 = arith.constant 0.000000e+00 : f32
    %75 = vector.shape_cast %27 : vector<1x256xi1> to vector<1x256xi1>
    %76 = vector.broadcast %75 : vector<1x256xi1> to vector<4x256xi1>
    %77 = vector.broadcast %cst_56 : f32 to vector<4x256xf32>
    %78 = arith.select %76, %74, %77 : vector<4x256xi1>, vector<4x256xf32>
    %c8_57 = arith.constant 8 : index
    %c0_58 = arith.constant 0 : index
    %79 = vector.load %arg5[%c8_57, %c0_58] : memref<36x256xf32, #tpu.memory_space<vmem>>, vector<4x256xf32>
    tpu.vector_store %arg5[%c8_57, %c0_58], %78 {strides = array<i32>} : memref<36x256xf32, #tpu.memory_space<vmem>>, vector<4x256xf32>,
    %c1 = arith.constant 1 : index
    %c0_59 = arith.constant 0 : index
    %c0_60 = arith.constant 0 : index
    %80 = vector.load %arg2[%c1, %c0_59, %c0_60] : memref<13x4x36xf32, #tpu.memory_space<vmem>>, vector<1x4x36xf32>
    %81 = vector.shape_cast %80 : vector<1x4x36xf32> to vector<4x36xf32>
    %c0_61 = arith.constant 0 : index
    %c0_62 = arith.constant 0 : index
    %82 = vector.load %arg5[%c0_61, %c0_62] : memref<36x256xf32, #tpu.memory_space<vmem>>, vector<36x256xf32>
    %cst_63 = arith.constant dense<0.000000e+00> : vector<4x256xf32>
    %83 = tpu.matmul %81, %82, %cst_63 {dimension_numbers = #tpu.dot_dimension_numbers<[1], [0], [0], [1], [0, 0, 1, 1], [], []>} : vector<4x36xf32>, vector<36x256xf32>, vector<4x256xf32> -> vector<4x256xf32>
    %c0_64 = arith.constant 0 : index
    %c128_65 = arith.constant 128 : index
    %84 = vector.load %arg4[%c0_64, %c128_65] : memref<4x512xf32, #tpu.memory_space<vmem>>, vector<4x256xf32>
    tpu.vector_store %arg4[%c0_64, %c128_65], %83 {strides = array<i32>} : memref<4x512xf32, #tpu.memory_space<vmem>>, vector<4x256xf32>,
    %c0_66 = arith.constant 0 : index
    %c112_67 = arith.constant 112 : index
    %85 = vector.load %arg4[%c0_66, %c112_67] : memref<4x512xf32, #tpu.memory_space<vmem>>, vector<4x256xf32>
    %c0_68 = arith.constant 0 : index
    %c0_69 = arith.constant 0 : index
    %86 = vector.load %arg5[%c0_68, %c0_69] : memref<36x256xf32, #tpu.memory_space<vmem>>, vector<4x256xf32>
    tpu.vector_store %arg5[%c0_68, %c0_69], %85 {strides = array<i32>} : memref<36x256xf32, #tpu.memory_space<vmem>>, vector<4x256xf32>,
    %c0_70 = arith.constant 0 : index
    %c128_71 = arith.constant 128 : index
    %87 = vector.load %arg4[%c0_70, %c128_71] : memref<4x512xf32, #tpu.memory_space<vmem>>, vector<4x256xf32>
    %c4_72 = arith.constant 4 : index
    %c0_73 = arith.constant 0 : index
    %88 = vector.load %arg5[%c4_72, %c0_73] : memref<36x256xf32, #tpu.memory_space<vmem>>, vector<4x256xf32>
    tpu.vector_store %arg5[%c4_72, %c0_73], %87 {strides = array<i32>} : memref<36x256xf32, #tpu.memory_space<vmem>>, vector<4x256xf32>,
    %c0_74 = arith.constant 0 : index
    %c144_75 = arith.constant 144 : index
    %89 = vector.load %arg4[%c0_74, %c144_75] : memref<4x512xf32, #tpu.memory_space<vmem>>, vector<4x256xf32>
    %c8_76 = arith.constant 8 : index
    %c0_77 = arith.constant 0 : index
    %90 = vector.load %arg5[%c8_76, %c0_77] : memref<36x256xf32, #tpu.memory_space<vmem>>, vector<4x256xf32>
    tpu.vector_store %arg5[%c8_76, %c0_77], %89 {strides = array<i32>} : memref<36x256xf32, #tpu.memory_space<vmem>>, vector<4x256xf32>,
    %c2 = arith.constant 2 : index
    %c0_78 = arith.constant 0 : index
    %c0_79 = arith.constant 0 : index
    %91 = vector.load %arg2[%c2, %c0_78, %c0_79] : memref<13x4x36xf32, #tpu.memory_space<vmem>>, vector<1x4x36xf32>
    %92 = vector.shape_cast %91 : vector<1x4x36xf32> to vector<4x36xf32>
    %c0_80 = arith.constant 0 : index
    %c0_81 = arith.constant 0 : index
    %93 = vector.load %arg5[%c0_80, %c0_81] : memref<36x256xf32, #tpu.memory_space<vmem>>, vector<36x256xf32>
    %cst_82 = arith.constant dense<0.000000e+00> : vector<4x256xf32>
    %94 = tpu.matmul %92, %93, %cst_82 {dimension_numbers = #tpu.dot_dimension_numbers<[1], [0], [0], [1], [0, 0, 1, 1], [], []>} : vector<4x36xf32>, vector<36x256xf32>, vector<4x256xf32> -> vector<4x256xf32>
    %c0_83 = arith.constant 0 : index
    %c128_84 = arith.constant 128 : index
    %95 = vector.load %arg4[%c0_83, %c128_84] : memref<4x512xf32, #tpu.memory_space<vmem>>, vector<4x256xf32>
    tpu.vector_store %arg4[%c0_83, %c128_84], %94 {strides = array<i32>} : memref<4x512xf32, #tpu.memory_space<vmem>>, vector<4x256xf32>,
    %c0_85 = arith.constant 0 : index
    %c77 = arith.constant 77 : index
    %96 = vector.load %arg4[%c0_85, %c77] : memref<4x512xf32, #tpu.memory_space<vmem>>, vector<4x256xf32>
    %cst_86 = arith.constant 3.000000e+00 : f32
    %97 = vector.broadcast %cst_86 : f32 to vector<1x256xf32>
    %98 = arith.cmpf oge, %11, %97 : vector<1x256xf32>
    %cst_87 = arith.constant 0.000000e+00 : f32
    %99 = vector.shape_cast %98 : vector<1x256xi1> to vector<1x256xi1>
    %100 = vector.broadcast %99 : vector<1x256xi1> to vector<4x256xi1>
    %101 = vector.broadcast %cst_87 : f32 to vector<4x256xf32>
    %102 = arith.select %100, %96, %101 : vector<4x256xi1>, vector<4x256xf32>
    %c0_88 = arith.constant 0 : index
    %c0_89 = arith.constant 0 : index
    %103 = vector.load %arg5[%c0_88, %c0_89] : memref<36x256xf32, #tpu.memory_space<vmem>>, vector<4x256xf32>
    tpu.vector_store %arg5[%c0_88, %c0_89], %102 {strides = array<i32>} : memref<36x256xf32, #tpu.memory_space<vmem>>, vector<4x256xf32>,
    %c0_90 = arith.constant 0 : index
    %c80 = arith.constant 80 : index
    %104 = vector.load %arg4[%c0_90, %c80] : memref<4x512xf32, #tpu.memory_space<vmem>>, vector<4x256xf32>
    %c4_91 = arith.constant 4 : index
    %c0_92 = arith.constant 0 : index
    %105 = vector.load %arg5[%c4_91, %c0_92] : memref<36x256xf32, #tpu.memory_space<vmem>>, vector<4x256xf32>
    tpu.vector_store %arg5[%c4_91, %c0_92], %104 {strides = array<i32>} : memref<36x256xf32, #tpu.memory_space<vmem>>, vector<4x256xf32>,
    %c0_93 = arith.constant 0 : index
    %c83 = arith.constant 83 : index
    %106 = vector.load %arg4[%c0_93, %c83] : memref<4x512xf32, #tpu.memory_space<vmem>>, vector<4x256xf32>
    %cst_94 = arith.constant 1.300000e+01 : f32
    %107 = vector.broadcast %cst_94 : f32 to vector<1x256xf32>
    %108 = arith.cmpf olt, %11, %107 : vector<1x256xf32>
    %cst_95 = arith.constant 0.000000e+00 : f32
    %109 = vector.shape_cast %108 : vector<1x256xi1> to vector<1x256xi1>
    %110 = vector.broadcast %109 : vector<1x256xi1> to vector<4x256xi1>
    %111 = vector.broadcast %cst_95 : f32 to vector<4x256xf32>
    %112 = arith.select %110, %106, %111 : vector<4x256xi1>, vector<4x256xf32>
    %c8_96 = arith.constant 8 : index
    %c0_97 = arith.constant 0 : index
    %113 = vector.load %arg5[%c8_96, %c0_97] : memref<36x256xf32, #tpu.memory_space<vmem>>, vector<4x256xf32>
    tpu.vector_store %arg5[%c8_96, %c0_97], %112 {strides = array<i32>} : memref<36x256xf32, #tpu.memory_space<vmem>>, vector<4x256xf32>,
    %c0_98 = arith.constant 0 : index
    %c125 = arith.constant 125 : index
    %114 = vector.load %arg4[%c0_98, %c125] : memref<4x512xf32, #tpu.memory_space<vmem>>, vector<4x256xf32>
    %cst_99 = arith.constant 0.000000e+00 : f32
    %115 = vector.shape_cast %98 : vector<1x256xi1> to vector<1x256xi1>
    %116 = vector.broadcast %115 : vector<1x256xi1> to vector<4x256xi1>
    %117 = vector.broadcast %cst_99 : f32 to vector<4x256xf32>
    %118 = arith.select %116, %114, %117 : vector<4x256xi1>, vector<4x256xf32>
    %c12_100 = arith.constant 12 : index
    %c0_101 = arith.constant 0 : index
    %119 = vector.load %arg5[%c12_100, %c0_101] : memref<36x256xf32, #tpu.memory_space<vmem>>, vector<4x256xf32>
    tpu.vector_store %arg5[%c12_100, %c0_101], %118 {strides = array<i32>} : memref<36x256xf32, #tpu.memory_space<vmem>>, vector<4x256xf32>,
    %c0_102 = arith.constant 0 : index
    %c128_103 = arith.constant 128 : index
    %120 = vector.load %arg4[%c0_102, %c128_103] : memref<4x512xf32, #tpu.memory_space<vmem>>, vector<4x256xf32>
    %c16_104 = arith.constant 16 : index
    %c0_105 = arith.constant 0 : index
    %121 = vector.load %arg5[%c16_104, %c0_105] : memref<36x256xf32, #tpu.memory_space<vmem>>, vector<4x256xf32>
    tpu.vector_store %arg5[%c16_104, %c0_105], %120 {strides = array<i32>} : memref<36x256xf32, #tpu.memory_space<vmem>>, vector<4x256xf32>,
    %c0_106 = arith.constant 0 : index
    %c131 = arith.constant 131 : index
    %122 = vector.load %arg4[%c0_106, %c131] : memref<4x512xf32, #tpu.memory_space<vmem>>, vector<4x256xf32>
    %cst_107 = arith.constant 0.000000e+00 : f32
    %123 = vector.shape_cast %108 : vector<1x256xi1> to vector<1x256xi1>
    %124 = vector.broadcast %123 : vector<1x256xi1> to vector<4x256xi1>
    %125 = vector.broadcast %cst_107 : f32 to vector<4x256xf32>
    %126 = arith.select %124, %122, %125 : vector<4x256xi1>, vector<4x256xf32>
    %c20_108 = arith.constant 20 : index
    %c0_109 = arith.constant 0 : index
    %127 = vector.load %arg5[%c20_108, %c0_109] : memref<36x256xf32, #tpu.memory_space<vmem>>, vector<4x256xf32>
    tpu.vector_store %arg5[%c20_108, %c0_109], %126 {strides = array<i32>} : memref<36x256xf32, #tpu.memory_space<vmem>>, vector<4x256xf32>,
    %c0_110 = arith.constant 0 : index
    %c173 = arith.constant 173 : index
    %128 = vector.load %arg4[%c0_110, %c173] : memref<4x512xf32, #tpu.memory_space<vmem>>, vector<4x256xf32>
    %cst_111 = arith.constant 0.000000e+00 : f32
    %129 = vector.shape_cast %98 : vector<1x256xi1> to vector<1x256xi1>
    %130 = vector.broadcast %129 : vector<1x256xi1> to vector<4x256xi1>
    %131 = vector.broadcast %cst_111 : f32 to vector<4x256xf32>
    %132 = arith.select %130, %128, %131 : vector<4x256xi1>, vector<4x256xf32>
    %c24_112 = arith.constant 24 : index
    %c0_113 = arith.constant 0 : index
    %133 = vector.load %arg5[%c24_112, %c0_113] : memref<36x256xf32, #tpu.memory_space<vmem>>, vector<4x256xf32>
    tpu.vector_store %arg5[%c24_112, %c0_113], %132 {strides = array<i32>} : memref<36x256xf32, #tpu.memory_space<vmem>>, vector<4x256xf32>,
    %c0_114 = arith.constant 0 : index
    %c176 = arith.constant 176 : index
    %134 = vector.load %arg4[%c0_114, %c176] : memref<4x512xf32, #tpu.memory_space<vmem>>, vector<4x256xf32>
    %c28_115 = arith.constant 28 : index
    %c0_116 = arith.constant 0 : index
    %135 = vector.load %arg5[%c28_115, %c0_116] : memref<36x256xf32, #tpu.memory_space<vmem>>, vector<4x256xf32>
    tpu.vector_store %arg5[%c28_115, %c0_116], %134 {strides = array<i32>} : memref<36x256xf32, #tpu.memory_space<vmem>>, vector<4x256xf32>,
    %c0_117 = arith.constant 0 : index
    %c179 = arith.constant 179 : index
    %136 = vector.load %arg4[%c0_117, %c179] : memref<4x512xf32, #tpu.memory_space<vmem>>, vector<4x256xf32>
    %cst_118 = arith.constant 0.000000e+00 : f32
    %137 = vector.shape_cast %108 : vector<1x256xi1> to vector<1x256xi1>
    %138 = vector.broadcast %137 : vector<1x256xi1> to vector<4x256xi1>
    %139 = vector.broadcast %cst_118 : f32 to vector<4x256xf32>
    %140 = arith.select %138, %136, %139 : vector<4x256xi1>, vector<4x256xf32>
    %c32_119 = arith.constant 32 : index
    %c0_120 = arith.constant 0 : index
    %141 = vector.load %arg5[%c32_119, %c0_120] : memref<36x256xf32, #tpu.memory_space<vmem>>, vector<4x256xf32>
    tpu.vector_store %arg5[%c32_119, %c0_120], %140 {strides = array<i32>} : memref<36x256xf32, #tpu.memory_space<vmem>>, vector<4x256xf32>,
    %c3 = arith.constant 3 : index
    %c0_121 = arith.constant 0 : index
    %c0_122 = arith.constant 0 : index
    %142 = vector.load %arg2[%c3, %c0_121, %c0_122] : memref<13x4x36xf32, #tpu.memory_space<vmem>>, vector<1x4x36xf32>
    %143 = vector.shape_cast %142 : vector<1x4x36xf32> to vector<4x36xf32>
    %c0_123 = arith.constant 0 : index
    %c0_124 = arith.constant 0 : index
    %144 = vector.load %arg5[%c0_123, %c0_124] : memref<36x256xf32, #tpu.memory_space<vmem>>, vector<36x256xf32>
    %cst_125 = arith.constant dense<0.000000e+00> : vector<4x256xf32>
    %145 = tpu.matmul %143, %144, %cst_125 {dimension_numbers = #tpu.dot_dimension_numbers<[1], [0], [0], [1], [0, 0, 1, 1], [], []>} : vector<4x36xf32>, vector<36x256xf32>, vector<4x256xf32> -> vector<4x256xf32>
    %c0_126 = arith.constant 0 : index
    %c128_127 = arith.constant 128 : index
    %146 = vector.load %arg4[%c0_126, %c128_127] : memref<4x512xf32, #tpu.memory_space<vmem>>, vector<4x256xf32>
    tpu.vector_store %arg4[%c0_126, %c128_127], %145 {strides = array<i32>} : memref<4x512xf32, #tpu.memory_space<vmem>>, vector<4x256xf32>,
    %c0_128 = arith.constant 0 : index
    %c111_129 = arith.constant 111 : index
    %147 = vector.load %arg4[%c0_128, %c111_129] : memref<4x512xf32, #tpu.memory_space<vmem>>, vector<4x256xf32>
    %cst_130 = arith.constant 0.000000e+00 : f32
    %148 = vector.shape_cast %17 : vector<1x256xi1> to vector<1x256xi1>
    %149 = vector.broadcast %148 : vector<1x256xi1> to vector<4x256xi1>
    %150 = vector.broadcast %cst_130 : f32 to vector<4x256xf32>
    %151 = arith.select %149, %147, %150 : vector<4x256xi1>, vector<4x256xf32>
    %c0_131 = arith.constant 0 : index
    %c0_132 = arith.constant 0 : index
    %152 = vector.load %arg5[%c0_131, %c0_132] : memref<36x256xf32, #tpu.memory_space<vmem>>, vector<4x256xf32>
    tpu.vector_store %arg5[%c0_131, %c0_132], %151 {strides = array<i32>} : memref<36x256xf32, #tpu.memory_space<vmem>>, vector<4x256xf32>,
    %c0_133 = arith.constant 0 : index
    %c112_134 = arith.constant 112 : index
    %153 = vector.load %arg4[%c0_133, %c112_134] : memref<4x512xf32, #tpu.memory_space<vmem>>, vector<4x256xf32>
    %c4_135 = arith.constant 4 : index
    %c0_136 = arith.constant 0 : index
    %154 = vector.load %arg5[%c4_135, %c0_136] : memref<36x256xf32, #tpu.memory_space<vmem>>, vector<4x256xf32>
    tpu.vector_store %arg5[%c4_135, %c0_136], %153 {strides = array<i32>} : memref<36x256xf32, #tpu.memory_space<vmem>>, vector<4x256xf32>,
    %c0_137 = arith.constant 0 : index
    %c113_138 = arith.constant 113 : index
    %155 = vector.load %arg4[%c0_137, %c113_138] : memref<4x512xf32, #tpu.memory_space<vmem>>, vector<4x256xf32>
    %cst_139 = arith.constant 0.000000e+00 : f32
    %156 = vector.shape_cast %27 : vector<1x256xi1> to vector<1x256xi1>
    %157 = vector.broadcast %156 : vector<1x256xi1> to vector<4x256xi1>
    %158 = vector.broadcast %cst_139 : f32 to vector<4x256xf32>
    %159 = arith.select %157, %155, %158 : vector<4x256xi1>, vector<4x256xf32>
    %c8_140 = arith.constant 8 : index
    %c0_141 = arith.constant 0 : index
    %160 = vector.load %arg5[%c8_140, %c0_141] : memref<36x256xf32, #tpu.memory_space<vmem>>, vector<4x256xf32>
    tpu.vector_store %arg5[%c8_140, %c0_141], %159 {strides = array<i32>} : memref<36x256xf32, #tpu.memory_space<vmem>>, vector<4x256xf32>,
    %c0_142 = arith.constant 0 : index
    %c127_143 = arith.constant 127 : index
    %161 = vector.load %arg4[%c0_142, %c127_143] : memref<4x512xf32, #tpu.memory_space<vmem>>, vector<4x256xf32>
    %cst_144 = arith.constant 0.000000e+00 : f32
    %162 = vector.shape_cast %17 : vector<1x256xi1> to vector<1x256xi1>
    %163 = vector.broadcast %162 : vector<1x256xi1> to vector<4x256xi1>
    %164 = vector.broadcast %cst_144 : f32 to vector<4x256xf32>
    %165 = arith.select %163, %161, %164 : vector<4x256xi1>, vector<4x256xf32>
    %c12_145 = arith.constant 12 : index
    %c0_146 = arith.constant 0 : index
    %166 = vector.load %arg5[%c12_145, %c0_146] : memref<36x256xf32, #tpu.memory_space<vmem>>, vector<4x256xf32>
    tpu.vector_store %arg5[%c12_145, %c0_146], %165 {strides = array<i32>} : memref<36x256xf32, #tpu.memory_space<vmem>>, vector<4x256xf32>,
    %c0_147 = arith.constant 0 : index
    %c128_148 = arith.constant 128 : index
    %167 = vector.load %arg4[%c0_147, %c128_148] : memref<4x512xf32, #tpu.memory_space<vmem>>, vector<4x256xf32>
    %c16_149 = arith.constant 16 : index
    %c0_150 = arith.constant 0 : index
    %168 = vector.load %arg5[%c16_149, %c0_150] : memref<36x256xf32, #tpu.memory_space<vmem>>, vector<4x256xf32>
    tpu.vector_store %arg5[%c16_149, %c0_150], %167 {strides = array<i32>} : memref<36x256xf32, #tpu.memory_space<vmem>>, vector<4x256xf32>,
    %c0_151 = arith.constant 0 : index
    %c129_152 = arith.constant 129 : index
    %169 = vector.load %arg4[%c0_151, %c129_152] : memref<4x512xf32, #tpu.memory_space<vmem>>, vector<4x256xf32>
    %cst_153 = arith.constant 0.000000e+00 : f32
    %170 = vector.shape_cast %27 : vector<1x256xi1> to vector<1x256xi1>
    %171 = vector.broadcast %170 : vector<1x256xi1> to vector<4x256xi1>
    %172 = vector.broadcast %cst_153 : f32 to vector<4x256xf32>
    %173 = arith.select %171, %169, %172 : vector<4x256xi1>, vector<4x256xf32>
    %c20_154 = arith.constant 20 : index
    %c0_155 = arith.constant 0 : index
    %174 = vector.load %arg5[%c20_154, %c0_155] : memref<36x256xf32, #tpu.memory_space<vmem>>, vector<4x256xf32>
    tpu.vector_store %arg5[%c20_154, %c0_155], %173 {strides = array<i32>} : memref<36x256xf32, #tpu.memory_space<vmem>>, vector<4x256xf32>,
    %c0_156 = arith.constant 0 : index
    %c143_157 = arith.constant 143 : index
    %175 = vector.load %arg4[%c0_156, %c143_157] : memref<4x512xf32, #tpu.memory_space<vmem>>, vector<4x256xf32>
    %cst_158 = arith.constant 0.000000e+00 : f32
    %176 = vector.shape_cast %17 : vector<1x256xi1> to vector<1x256xi1>
    %177 = vector.broadcast %176 : vector<1x256xi1> to vector<4x256xi1>
    %178 = vector.broadcast %cst_158 : f32 to vector<4x256xf32>
    %179 = arith.select %177, %175, %178 : vector<4x256xi1>, vector<4x256xf32>
    %c24_159 = arith.constant 24 : index
    %c0_160 = arith.constant 0 : index
    %180 = vector.load %arg5[%c24_159, %c0_160] : memref<36x256xf32, #tpu.memory_space<vmem>>, vector<4x256xf32>
    tpu.vector_store %arg5[%c24_159, %c0_160], %179 {strides = array<i32>} : memref<36x256xf32, #tpu.memory_space<vmem>>, vector<4x256xf32>,
    %c0_161 = arith.constant 0 : index
    %c144_162 = arith.constant 144 : index
    %181 = vector.load %arg4[%c0_161, %c144_162] : memref<4x512xf32, #tpu.memory_space<vmem>>, vector<4x256xf32>
    %c28_163 = arith.constant 28 : index
    %c0_164 = arith.constant 0 : index
    %182 = vector.load %arg5[%c28_163, %c0_164] : memref<36x256xf32, #tpu.memory_space<vmem>>, vector<4x256xf32>
    tpu.vector_store %arg5[%c28_163, %c0_164], %181 {strides = array<i32>} : memref<36x256xf32, #tpu.memory_space<vmem>>, vector<4x256xf32>,
    %c0_165 = arith.constant 0 : index
    %c145_166 = arith.constant 145 : index
    %183 = vector.load %arg4[%c0_165, %c145_166] : memref<4x512xf32, #tpu.memory_space<vmem>>, vector<4x256xf32>
    %cst_167 = arith.constant 0.000000e+00 : f32
    %184 = vector.shape_cast %27 : vector<1x256xi1> to vector<1x256xi1>
    %185 = vector.broadcast %184 : vector<1x256xi1> to vector<4x256xi1>
    %186 = vector.broadcast %cst_167 : f32 to vector<4x256xf32>
    %187 = arith.select %185, %183, %186 : vector<4x256xi1>, vector<4x256xf32>
    %c32_168 = arith.constant 32 : index
    %c0_169 = arith.constant 0 : index
    %188 = vector.load %arg5[%c32_168, %c0_169] : memref<36x256xf32, #tpu.memory_space<vmem>>, vector<4x256xf32>
    tpu.vector_store %arg5[%c32_168, %c0_169], %187 {strides = array<i32>} : memref<36x256xf32, #tpu.memory_space<vmem>>, vector<4x256xf32>,
    %c4_170 = arith.constant 4 : index
    %c0_171 = arith.constant 0 : index
    %c0_172 = arith.constant 0 : index
    %189 = vector.load %arg2[%c4_170, %c0_171, %c0_172] : memref<13x4x36xf32, #tpu.memory_space<vmem>>, vector<1x4x36xf32>
    %190 = vector.shape_cast %189 : vector<1x4x36xf32> to vector<4x36xf32>
    %c0_173 = arith.constant 0 : index
    %c0_174 = arith.constant 0 : index
    %191 = vector.load %arg5[%c0_173, %c0_174] : memref<36x256xf32, #tpu.memory_space<vmem>>, vector<36x256xf32>
    %cst_175 = arith.constant dense<0.000000e+00> : vector<4x256xf32>
    %192 = tpu.matmul %190, %191, %cst_175 {dimension_numbers = #tpu.dot_dimension_numbers<[1], [0], [0], [1], [0, 0, 1, 1], [], []>} : vector<4x36xf32>, vector<36x256xf32>, vector<4x256xf32> -> vector<4x256xf32>
    %193 = arith.addf %64, %192 : vector<4x256xf32>
    %c0_176 = arith.constant 0 : index
    %c128_177 = arith.constant 128 : index
    %194 = vector.load %arg4[%c0_176, %c128_177] : memref<4x512xf32, #tpu.memory_space<vmem>>, vector<4x256xf32>
    tpu.vector_store %arg4[%c0_176, %c128_177], %13 {strides = array<i32>} : memref<4x512xf32, #tpu.memory_space<vmem>>, vector<4x256xf32>,
    %c0_178 = arith.constant 0 : index
    %c126 = arith.constant 126 : index
    %195 = vector.load %arg4[%c0_178, %c126] : memref<4x512xf32, #tpu.memory_space<vmem>>, vector<4x256xf32>
    %cst_179 = arith.constant 2.000000e+00 : f32
    %196 = vector.broadcast %cst_179 : f32 to vector<1x256xf32>
    %197 = arith.cmpf oge, %11, %196 : vector<1x256xf32>
    %cst_180 = arith.constant 0.000000e+00 : f32
    %198 = vector.shape_cast %197 : vector<1x256xi1> to vector<1x256xi1>
    %199 = vector.broadcast %198 : vector<1x256xi1> to vector<4x256xi1>
    %200 = vector.broadcast %cst_180 : f32 to vector<4x256xf32>
    %201 = arith.select %199, %195, %200 : vector<4x256xi1>, vector<4x256xf32>
    %c0_181 = arith.constant 0 : index
    %c0_182 = arith.constant 0 : index
    %202 = vector.load %arg5[%c0_181, %c0_182] : memref<36x256xf32, #tpu.memory_space<vmem>>, vector<4x256xf32>
    tpu.vector_store %arg5[%c0_181, %c0_182], %201 {strides = array<i32>} : memref<36x256xf32, #tpu.memory_space<vmem>>, vector<4x256xf32>,
    %c0_183 = arith.constant 0 : index
    %c127_184 = arith.constant 127 : index
    %203 = vector.load %arg4[%c0_183, %c127_184] : memref<4x512xf32, #tpu.memory_space<vmem>>, vector<4x256xf32>
    %cst_185 = arith.constant 0.000000e+00 : f32
    %204 = vector.shape_cast %17 : vector<1x256xi1> to vector<1x256xi1>
    %205 = vector.broadcast %204 : vector<1x256xi1> to vector<4x256xi1>
    %206 = vector.broadcast %cst_185 : f32 to vector<4x256xf32>
    %207 = arith.select %205, %203, %206 : vector<4x256xi1>, vector<4x256xf32>
    %c4_186 = arith.constant 4 : index
    %c0_187 = arith.constant 0 : index
    %208 = vector.load %arg5[%c4_186, %c0_187] : memref<36x256xf32, #tpu.memory_space<vmem>>, vector<4x256xf32>
    tpu.vector_store %arg5[%c4_186, %c0_187], %207 {strides = array<i32>} : memref<36x256xf32, #tpu.memory_space<vmem>>, vector<4x256xf32>,
    %c0_188 = arith.constant 0 : index
    %c128_189 = arith.constant 128 : index
    %209 = vector.load %arg4[%c0_188, %c128_189] : memref<4x512xf32, #tpu.memory_space<vmem>>, vector<4x256xf32>
    %c8_190 = arith.constant 8 : index
    %c0_191 = arith.constant 0 : index
    %210 = vector.load %arg5[%c8_190, %c0_191] : memref<36x256xf32, #tpu.memory_space<vmem>>, vector<4x256xf32>
    tpu.vector_store %arg5[%c8_190, %c0_191], %209 {strides = array<i32>} : memref<36x256xf32, #tpu.memory_space<vmem>>, vector<4x256xf32>,
    %c0_192 = arith.constant 0 : index
    %c129_193 = arith.constant 129 : index
    %211 = vector.load %arg4[%c0_192, %c129_193] : memref<4x512xf32, #tpu.memory_space<vmem>>, vector<4x256xf32>
    %cst_194 = arith.constant 0.000000e+00 : f32
    %212 = vector.shape_cast %27 : vector<1x256xi1> to vector<1x256xi1>
    %213 = vector.broadcast %212 : vector<1x256xi1> to vector<4x256xi1>
    %214 = vector.broadcast %cst_194 : f32 to vector<4x256xf32>
    %215 = arith.select %213, %211, %214 : vector<4x256xi1>, vector<4x256xf32>
    %c12_195 = arith.constant 12 : index
    %c0_196 = arith.constant 0 : index
    %216 = vector.load %arg5[%c12_195, %c0_196] : memref<36x256xf32, #tpu.memory_space<vmem>>, vector<4x256xf32>
    tpu.vector_store %arg5[%c12_195, %c0_196], %215 {strides = array<i32>} : memref<36x256xf32, #tpu.memory_space<vmem>>, vector<4x256xf32>,
    %c0_197 = arith.constant 0 : index
    %c130 = arith.constant 130 : index
    %217 = vector.load %arg4[%c0_197, %c130] : memref<4x512xf32, #tpu.memory_space<vmem>>, vector<4x256xf32>
    %cst_198 = arith.constant 1.400000e+01 : f32
    %218 = vector.broadcast %cst_198 : f32 to vector<1x256xf32>
    %219 = arith.cmpf olt, %11, %218 : vector<1x256xf32>
    %cst_199 = arith.constant 0.000000e+00 : f32
    %220 = vector.shape_cast %219 : vector<1x256xi1> to vector<1x256xi1>
    %221 = vector.broadcast %220 : vector<1x256xi1> to vector<4x256xi1>
    %222 = vector.broadcast %cst_199 : f32 to vector<4x256xf32>
    %223 = arith.select %221, %217, %222 : vector<4x256xi1>, vector<4x256xf32>
    %c16_200 = arith.constant 16 : index
    %c0_201 = arith.constant 0 : index
    %224 = vector.load %arg5[%c16_200, %c0_201] : memref<36x256xf32, #tpu.memory_space<vmem>>, vector<4x256xf32>
    tpu.vector_store %arg5[%c16_200, %c0_201], %223 {strides = array<i32>} : memref<36x256xf32, #tpu.memory_space<vmem>>, vector<4x256xf32>,
    %c5 = arith.constant 5 : index
    %c0_202 = arith.constant 0 : index
    %c0_203 = arith.constant 0 : index
    %225 = vector.load %arg2[%c5, %c0_202, %c0_203] : memref<13x4x36xf32, #tpu.memory_space<vmem>>, vector<1x4x36xf32>
    %226 = vector.shape_cast %225 : vector<1x4x36xf32> to vector<4x36xf32>
    %c0_204 = arith.constant 0 : index
    %c0_205 = arith.constant 0 : index
    %227 = vector.load %arg5[%c0_204, %c0_205] : memref<36x256xf32, #tpu.memory_space<vmem>>, vector<36x256xf32>
    %cst_206 = arith.constant dense<0.000000e+00> : vector<4x256xf32>
    %228 = tpu.matmul %226, %227, %cst_206 {dimension_numbers = #tpu.dot_dimension_numbers<[1], [0], [0], [1], [0, 0, 1, 1], [], []>} : vector<4x36xf32>, vector<36x256xf32>, vector<4x256xf32> -> vector<4x256xf32>
    %c0_207 = arith.constant 0 : index
    %c128_208 = arith.constant 128 : index
    %229 = vector.load %arg4[%c0_207, %c128_208] : memref<4x512xf32, #tpu.memory_space<vmem>>, vector<4x256xf32>
    tpu.vector_store %arg4[%c0_207, %c128_208], %228 {strides = array<i32>} : memref<4x512xf32, #tpu.memory_space<vmem>>, vector<4x256xf32>,
    %c0_209 = arith.constant 0 : index
    %c96 = arith.constant 96 : index
    %230 = vector.load %arg4[%c0_209, %c96] : memref<4x512xf32, #tpu.memory_space<vmem>>, vector<4x256xf32>
    %c0_210 = arith.constant 0 : index
    %c0_211 = arith.constant 0 : index
    %231 = vector.load %arg5[%c0_210, %c0_211] : memref<36x256xf32, #tpu.memory_space<vmem>>, vector<4x256xf32>
    tpu.vector_store %arg5[%c0_210, %c0_211], %230 {strides = array<i32>} : memref<36x256xf32, #tpu.memory_space<vmem>>, vector<4x256xf32>,
    %c0_212 = arith.constant 0 : index
    %c112_213 = arith.constant 112 : index
    %232 = vector.load %arg4[%c0_212, %c112_213] : memref<4x512xf32, #tpu.memory_space<vmem>>, vector<4x256xf32>
    %c4_214 = arith.constant 4 : index
    %c0_215 = arith.constant 0 : index
    %233 = vector.load %arg5[%c4_214, %c0_215] : memref<36x256xf32, #tpu.memory_space<vmem>>, vector<4x256xf32>
    tpu.vector_store %arg5[%c4_214, %c0_215], %232 {strides = array<i32>} : memref<36x256xf32, #tpu.memory_space<vmem>>, vector<4x256xf32>,
    %c0_216 = arith.constant 0 : index
    %c128_217 = arith.constant 128 : index
    %234 = vector.load %arg4[%c0_216, %c128_217] : memref<4x512xf32, #tpu.memory_space<vmem>>, vector<4x256xf32>
    %c8_218 = arith.constant 8 : index
    %c0_219 = arith.constant 0 : index
    %235 = vector.load %arg5[%c8_218, %c0_219] : memref<36x256xf32, #tpu.memory_space<vmem>>, vector<4x256xf32>
    tpu.vector_store %arg5[%c8_218, %c0_219], %234 {strides = array<i32>} : memref<36x256xf32, #tpu.memory_space<vmem>>, vector<4x256xf32>,
    %c0_220 = arith.constant 0 : index
    %c144_221 = arith.constant 144 : index
    %236 = vector.load %arg4[%c0_220, %c144_221] : memref<4x512xf32, #tpu.memory_space<vmem>>, vector<4x256xf32>
    %c12_222 = arith.constant 12 : index
    %c0_223 = arith.constant 0 : index
    %237 = vector.load %arg5[%c12_222, %c0_223] : memref<36x256xf32, #tpu.memory_space<vmem>>, vector<4x256xf32>
    tpu.vector_store %arg5[%c12_222, %c0_223], %236 {strides = array<i32>} : memref<36x256xf32, #tpu.memory_space<vmem>>, vector<4x256xf32>,
    %c0_224 = arith.constant 0 : index
    %c160 = arith.constant 160 : index
    %238 = vector.load %arg4[%c0_224, %c160] : memref<4x512xf32, #tpu.memory_space<vmem>>, vector<4x256xf32>
    %c16_225 = arith.constant 16 : index
    %c0_226 = arith.constant 0 : index
    %239 = vector.load %arg5[%c16_225, %c0_226] : memref<36x256xf32, #tpu.memory_space<vmem>>, vector<4x256xf32>
    tpu.vector_store %arg5[%c16_225, %c0_226], %238 {strides = array<i32>} : memref<36x256xf32, #tpu.memory_space<vmem>>, vector<4x256xf32>,
    %c6 = arith.constant 6 : index
    %c0_227 = arith.constant 0 : index
    %c0_228 = arith.constant 0 : index
    %240 = vector.load %arg2[%c6, %c0_227, %c0_228] : memref<13x4x36xf32, #tpu.memory_space<vmem>>, vector<1x4x36xf32>
    %241 = vector.shape_cast %240 : vector<1x4x36xf32> to vector<4x36xf32>
    %c0_229 = arith.constant 0 : index
    %c0_230 = arith.constant 0 : index
    %242 = vector.load %arg5[%c0_229, %c0_230] : memref<36x256xf32, #tpu.memory_space<vmem>>, vector<36x256xf32>
    %cst_231 = arith.constant dense<0.000000e+00> : vector<4x256xf32>
    %243 = tpu.matmul %241, %242, %cst_231 {dimension_numbers = #tpu.dot_dimension_numbers<[1], [0], [0], [1], [0, 0, 1, 1], [], []>} : vector<4x36xf32>, vector<36x256xf32>, vector<4x256xf32> -> vector<4x256xf32>
    %c0_232 = arith.constant 0 : index
    %c128_233 = arith.constant 128 : index
    %244 = vector.load %arg4[%c0_232, %c128_233] : memref<4x512xf32, #tpu.memory_space<vmem>>, vector<4x256xf32>
    tpu.vector_store %arg4[%c0_232, %c128_233], %243 {strides = array<i32>} : memref<4x512xf32, #tpu.memory_space<vmem>>, vector<4x256xf32>,
    %c0_234 = arith.constant 0 : index
    %c43 = arith.constant 43 : index
    %245 = vector.load %arg4[%c0_234, %c43] : memref<4x512xf32, #tpu.memory_space<vmem>>, vector<4x256xf32>
    %cst_235 = arith.constant 5.000000e+00 : f32
    %246 = vector.broadcast %cst_235 : f32 to vector<1x256xf32>
    %247 = arith.cmpf oge, %11, %246 : vector<1x256xf32>
    %cst_236 = arith.constant 0.000000e+00 : f32
    %248 = vector.shape_cast %247 : vector<1x256xi1> to vector<1x256xi1>
    %249 = vector.broadcast %248 : vector<1x256xi1> to vector<4x256xi1>
    %250 = vector.broadcast %cst_236 : f32 to vector<4x256xf32>
    %251 = arith.select %249, %245, %250 : vector<4x256xi1>, vector<4x256xf32>
    %c0_237 = arith.constant 0 : index
    %c0_238 = arith.constant 0 : index
    %252 = vector.load %arg5[%c0_237, %c0_238] : memref<36x256xf32, #tpu.memory_space<vmem>>, vector<4x256xf32>
    tpu.vector_store %arg5[%c0_237, %c0_238], %251 {strides = array<i32>} : memref<36x256xf32, #tpu.memory_space<vmem>>, vector<4x256xf32>,
    %c0_239 = arith.constant 0 : index
    %c48 = arith.constant 48 : index
    %253 = vector.load %arg4[%c0_239, %c48] : memref<4x512xf32, #tpu.memory_space<vmem>>, vector<4x256xf32>
    %c4_240 = arith.constant 4 : index
    %c0_241 = arith.constant 0 : index
    %254 = vector.load %arg5[%c4_240, %c0_241] : memref<36x256xf32, #tpu.memory_space<vmem>>, vector<4x256xf32>
    tpu.vector_store %arg5[%c4_240, %c0_241], %253 {strides = array<i32>} : memref<36x256xf32, #tpu.memory_space<vmem>>, vector<4x256xf32>,
    %c0_242 = arith.constant 0 : index
    %c53 = arith.constant 53 : index
    %255 = vector.load %arg4[%c0_242, %c53] : memref<4x512xf32, #tpu.memory_space<vmem>>, vector<4x256xf32>
    %cst_243 = arith.constant 1.100000e+01 : f32
    %256 = vector.broadcast %cst_243 : f32 to vector<1x256xf32>
    %257 = arith.cmpf olt, %11, %256 : vector<1x256xf32>
    %cst_244 = arith.constant 0.000000e+00 : f32
    %258 = vector.shape_cast %257 : vector<1x256xi1> to vector<1x256xi1>
    %259 = vector.broadcast %258 : vector<1x256xi1> to vector<4x256xi1>
    %260 = vector.broadcast %cst_244 : f32 to vector<4x256xf32>
    %261 = arith.select %259, %255, %260 : vector<4x256xi1>, vector<4x256xf32>
    %c8_245 = arith.constant 8 : index
    %c0_246 = arith.constant 0 : index
    %262 = vector.load %arg5[%c8_245, %c0_246] : memref<36x256xf32, #tpu.memory_space<vmem>>, vector<4x256xf32>
    tpu.vector_store %arg5[%c8_245, %c0_246], %261 {strides = array<i32>} : memref<36x256xf32, #tpu.memory_space<vmem>>, vector<4x256xf32>,
    %c0_247 = arith.constant 0 : index
    %c123 = arith.constant 123 : index
    %263 = vector.load %arg4[%c0_247, %c123] : memref<4x512xf32, #tpu.memory_space<vmem>>, vector<4x256xf32>
    %cst_248 = arith.constant 0.000000e+00 : f32
    %264 = vector.shape_cast %247 : vector<1x256xi1> to vector<1x256xi1>
    %265 = vector.broadcast %264 : vector<1x256xi1> to vector<4x256xi1>
    %266 = vector.broadcast %cst_248 : f32 to vector<4x256xf32>
    %267 = arith.select %265, %263, %266 : vector<4x256xi1>, vector<4x256xf32>
    %c12_249 = arith.constant 12 : index
    %c0_250 = arith.constant 0 : index
    %268 = vector.load %arg5[%c12_249, %c0_250] : memref<36x256xf32, #tpu.memory_space<vmem>>, vector<4x256xf32>
    tpu.vector_store %arg5[%c12_249, %c0_250], %267 {strides = array<i32>} : memref<36x256xf32, #tpu.memory_space<vmem>>, vector<4x256xf32>,
    %c0_251 = arith.constant 0 : index
    %c128_252 = arith.constant 128 : index
    %269 = vector.load %arg4[%c0_251, %c128_252] : memref<4x512xf32, #tpu.memory_space<vmem>>, vector<4x256xf32>
    %c16_253 = arith.constant 16 : index
    %c0_254 = arith.constant 0 : index
    %270 = vector.load %arg5[%c16_253, %c0_254] : memref<36x256xf32, #tpu.memory_space<vmem>>, vector<4x256xf32>
    tpu.vector_store %arg5[%c16_253, %c0_254], %269 {strides = array<i32>} : memref<36x256xf32, #tpu.memory_space<vmem>>, vector<4x256xf32>,
    %c0_255 = arith.constant 0 : index
    %c133 = arith.constant 133 : index
    %271 = vector.load %arg4[%c0_255, %c133] : memref<4x512xf32, #tpu.memory_space<vmem>>, vector<4x256xf32>
    %cst_256 = arith.constant 0.000000e+00 : f32
    %272 = vector.shape_cast %257 : vector<1x256xi1> to vector<1x256xi1>
    %273 = vector.broadcast %272 : vector<1x256xi1> to vector<4x256xi1>
    %274 = vector.broadcast %cst_256 : f32 to vector<4x256xf32>
    %275 = arith.select %273, %271, %274 : vector<4x256xi1>, vector<4x256xf32>
    %c20_257 = arith.constant 20 : index
    %c0_258 = arith.constant 0 : index
    %276 = vector.load %arg5[%c20_257, %c0_258] : memref<36x256xf32, #tpu.memory_space<vmem>>, vector<4x256xf32>
    tpu.vector_store %arg5[%c20_257, %c0_258], %275 {strides = array<i32>} : memref<36x256xf32, #tpu.memory_space<vmem>>, vector<4x256xf32>,
    %c0_259 = arith.constant 0 : index
    %c203 = arith.constant 203 : index
    %277 = vector.load %arg4[%c0_259, %c203] : memref<4x512xf32, #tpu.memory_space<vmem>>, vector<4x256xf32>
    %cst_260 = arith.constant 0.000000e+00 : f32
    %278 = vector.shape_cast %247 : vector<1x256xi1> to vector<1x256xi1>
    %279 = vector.broadcast %278 : vector<1x256xi1> to vector<4x256xi1>
    %280 = vector.broadcast %cst_260 : f32 to vector<4x256xf32>
    %281 = arith.select %279, %277, %280 : vector<4x256xi1>, vector<4x256xf32>
    %c24_261 = arith.constant 24 : index
    %c0_262 = arith.constant 0 : index
    %282 = vector.load %arg5[%c24_261, %c0_262] : memref<36x256xf32, #tpu.memory_space<vmem>>, vector<4x256xf32>
    tpu.vector_store %arg5[%c24_261, %c0_262], %281 {strides = array<i32>} : memref<36x256xf32, #tpu.memory_space<vmem>>, vector<4x256xf32>,
    %c0_263 = arith.constant 0 : index
    %c208 = arith.constant 208 : index
    %283 = vector.load %arg4[%c0_263, %c208] : memref<4x512xf32, #tpu.memory_space<vmem>>, vector<4x256xf32>
    %c28_264 = arith.constant 28 : index
    %c0_265 = arith.constant 0 : index
    %284 = vector.load %arg5[%c28_264, %c0_265] : memref<36x256xf32, #tpu.memory_space<vmem>>, vector<4x256xf32>
    tpu.vector_store %arg5[%c28_264, %c0_265], %283 {strides = array<i32>} : memref<36x256xf32, #tpu.memory_space<vmem>>, vector<4x256xf32>,
    %c0_266 = arith.constant 0 : index
    %c213 = arith.constant 213 : index
    %285 = vector.load %arg4[%c0_266, %c213] : memref<4x512xf32, #tpu.memory_space<vmem>>, vector<4x256xf32>
    %cst_267 = arith.constant 0.000000e+00 : f32
    %286 = vector.shape_cast %257 : vector<1x256xi1> to vector<1x256xi1>
    %287 = vector.broadcast %286 : vector<1x256xi1> to vector<4x256xi1>
    %288 = vector.broadcast %cst_267 : f32 to vector<4x256xf32>
    %289 = arith.select %287, %285, %288 : vector<4x256xi1>, vector<4x256xf32>
    %c32_268 = arith.constant 32 : index
    %c0_269 = arith.constant 0 : index
    %290 = vector.load %arg5[%c32_268, %c0_269] : memref<36x256xf32, #tpu.memory_space<vmem>>, vector<4x256xf32>
    tpu.vector_store %arg5[%c32_268, %c0_269], %289 {strides = array<i32>} : memref<36x256xf32, #tpu.memory_space<vmem>>, vector<4x256xf32>,
    %c7 = arith.constant 7 : index
    %c0_270 = arith.constant 0 : index
    %c0_271 = arith.constant 0 : index
    %291 = vector.load %arg2[%c7, %c0_270, %c0_271] : memref<13x4x36xf32, #tpu.memory_space<vmem>>, vector<1x4x36xf32>
    %292 = vector.shape_cast %291 : vector<1x4x36xf32> to vector<4x36xf32>
    %c0_272 = arith.constant 0 : index
    %c0_273 = arith.constant 0 : index
    %293 = vector.load %arg5[%c0_272, %c0_273] : memref<36x256xf32, #tpu.memory_space<vmem>>, vector<36x256xf32>
    %cst_274 = arith.constant dense<0.000000e+00> : vector<4x256xf32>
    %294 = tpu.matmul %292, %293, %cst_274 {dimension_numbers = #tpu.dot_dimension_numbers<[1], [0], [0], [1], [0, 0, 1, 1], [], []>} : vector<4x36xf32>, vector<36x256xf32>, vector<4x256xf32> -> vector<4x256xf32>
    %c0_275 = arith.constant 0 : index
    %c128_276 = arith.constant 128 : index
    %295 = vector.load %arg4[%c0_275, %c128_276] : memref<4x512xf32, #tpu.memory_space<vmem>>, vector<4x256xf32>
    tpu.vector_store %arg4[%c0_275, %c128_276], %294 {strides = array<i32>} : memref<4x512xf32, #tpu.memory_space<vmem>>, vector<4x256xf32>,
    %c0_277 = arith.constant 0 : index
    %c111_278 = arith.constant 111 : index
    %296 = vector.load %arg4[%c0_277, %c111_278] : memref<4x512xf32, #tpu.memory_space<vmem>>, vector<4x256xf32>
    %cst_279 = arith.constant 0.000000e+00 : f32
    %297 = vector.shape_cast %17 : vector<1x256xi1> to vector<1x256xi1>
    %298 = vector.broadcast %297 : vector<1x256xi1> to vector<4x256xi1>
    %299 = vector.broadcast %cst_279 : f32 to vector<4x256xf32>
    %300 = arith.select %298, %296, %299 : vector<4x256xi1>, vector<4x256xf32>
    %c0_280 = arith.constant 0 : index
    %c0_281 = arith.constant 0 : index
    %301 = vector.load %arg5[%c0_280, %c0_281] : memref<36x256xf32, #tpu.memory_space<vmem>>, vector<4x256xf32>
    tpu.vector_store %arg5[%c0_280, %c0_281], %300 {strides = array<i32>} : memref<36x256xf32, #tpu.memory_space<vmem>>, vector<4x256xf32>,
    %c0_282 = arith.constant 0 : index
    %c112_283 = arith.constant 112 : index
    %302 = vector.load %arg4[%c0_282, %c112_283] : memref<4x512xf32, #tpu.memory_space<vmem>>, vector<4x256xf32>
    %c4_284 = arith.constant 4 : index
    %c0_285 = arith.constant 0 : index
    %303 = vector.load %arg5[%c4_284, %c0_285] : memref<36x256xf32, #tpu.memory_space<vmem>>, vector<4x256xf32>
    tpu.vector_store %arg5[%c4_284, %c0_285], %302 {strides = array<i32>} : memref<36x256xf32, #tpu.memory_space<vmem>>, vector<4x256xf32>,
    %c0_286 = arith.constant 0 : index
    %c113_287 = arith.constant 113 : index
    %304 = vector.load %arg4[%c0_286, %c113_287] : memref<4x512xf32, #tpu.memory_space<vmem>>, vector<4x256xf32>
    %cst_288 = arith.constant 0.000000e+00 : f32
    %305 = vector.shape_cast %27 : vector<1x256xi1> to vector<1x256xi1>
    %306 = vector.broadcast %305 : vector<1x256xi1> to vector<4x256xi1>
    %307 = vector.broadcast %cst_288 : f32 to vector<4x256xf32>
    %308 = arith.select %306, %304, %307 : vector<4x256xi1>, vector<4x256xf32>
    %c8_289 = arith.constant 8 : index
    %c0_290 = arith.constant 0 : index
    %309 = vector.load %arg5[%c8_289, %c0_290] : memref<36x256xf32, #tpu.memory_space<vmem>>, vector<4x256xf32>
    tpu.vector_store %arg5[%c8_289, %c0_290], %308 {strides = array<i32>} : memref<36x256xf32, #tpu.memory_space<vmem>>, vector<4x256xf32>,
    %c0_291 = arith.constant 0 : index
    %c127_292 = arith.constant 127 : index
    %310 = vector.load %arg4[%c0_291, %c127_292] : memref<4x512xf32, #tpu.memory_space<vmem>>, vector<4x256xf32>
    %cst_293 = arith.constant 0.000000e+00 : f32
    %311 = vector.shape_cast %17 : vector<1x256xi1> to vector<1x256xi1>
    %312 = vector.broadcast %311 : vector<1x256xi1> to vector<4x256xi1>
    %313 = vector.broadcast %cst_293 : f32 to vector<4x256xf32>
    %314 = arith.select %312, %310, %313 : vector<4x256xi1>, vector<4x256xf32>
    %c12_294 = arith.constant 12 : index
    %c0_295 = arith.constant 0 : index
    %315 = vector.load %arg5[%c12_294, %c0_295] : memref<36x256xf32, #tpu.memory_space<vmem>>, vector<4x256xf32>
    tpu.vector_store %arg5[%c12_294, %c0_295], %314 {strides = array<i32>} : memref<36x256xf32, #tpu.memory_space<vmem>>, vector<4x256xf32>,
    %c0_296 = arith.constant 0 : index
    %c128_297 = arith.constant 128 : index
    %316 = vector.load %arg4[%c0_296, %c128_297] : memref<4x512xf32, #tpu.memory_space<vmem>>, vector<4x256xf32>
    %c16_298 = arith.constant 16 : index
    %c0_299 = arith.constant 0 : index
    %317 = vector.load %arg5[%c16_298, %c0_299] : memref<36x256xf32, #tpu.memory_space<vmem>>, vector<4x256xf32>
    tpu.vector_store %arg5[%c16_298, %c0_299], %316 {strides = array<i32>} : memref<36x256xf32, #tpu.memory_space<vmem>>, vector<4x256xf32>,
    %c0_300 = arith.constant 0 : index
    %c129_301 = arith.constant 129 : index
    %318 = vector.load %arg4[%c0_300, %c129_301] : memref<4x512xf32, #tpu.memory_space<vmem>>, vector<4x256xf32>
    %cst_302 = arith.constant 0.000000e+00 : f32
    %319 = vector.shape_cast %27 : vector<1x256xi1> to vector<1x256xi1>
    %320 = vector.broadcast %319 : vector<1x256xi1> to vector<4x256xi1>
    %321 = vector.broadcast %cst_302 : f32 to vector<4x256xf32>
    %322 = arith.select %320, %318, %321 : vector<4x256xi1>, vector<4x256xf32>
    %c20_303 = arith.constant 20 : index
    %c0_304 = arith.constant 0 : index
    %323 = vector.load %arg5[%c20_303, %c0_304] : memref<36x256xf32, #tpu.memory_space<vmem>>, vector<4x256xf32>
    tpu.vector_store %arg5[%c20_303, %c0_304], %322 {strides = array<i32>} : memref<36x256xf32, #tpu.memory_space<vmem>>, vector<4x256xf32>,
    %c0_305 = arith.constant 0 : index
    %c143_306 = arith.constant 143 : index
    %324 = vector.load %arg4[%c0_305, %c143_306] : memref<4x512xf32, #tpu.memory_space<vmem>>, vector<4x256xf32>
    %cst_307 = arith.constant 0.000000e+00 : f32
    %325 = vector.shape_cast %17 : vector<1x256xi1> to vector<1x256xi1>
    %326 = vector.broadcast %325 : vector<1x256xi1> to vector<4x256xi1>
    %327 = vector.broadcast %cst_307 : f32 to vector<4x256xf32>
    %328 = arith.select %326, %324, %327 : vector<4x256xi1>, vector<4x256xf32>
    %c24_308 = arith.constant 24 : index
    %c0_309 = arith.constant 0 : index
    %329 = vector.load %arg5[%c24_308, %c0_309] : memref<36x256xf32, #tpu.memory_space<vmem>>, vector<4x256xf32>
    tpu.vector_store %arg5[%c24_308, %c0_309], %328 {strides = array<i32>} : memref<36x256xf32, #tpu.memory_space<vmem>>, vector<4x256xf32>,
    %c0_310 = arith.constant 0 : index
    %c144_311 = arith.constant 144 : index
    %330 = vector.load %arg4[%c0_310, %c144_311] : memref<4x512xf32, #tpu.memory_space<vmem>>, vector<4x256xf32>
    %c28_312 = arith.constant 28 : index
    %c0_313 = arith.constant 0 : index
    %331 = vector.load %arg5[%c28_312, %c0_313] : memref<36x256xf32, #tpu.memory_space<vmem>>, vector<4x256xf32>
    tpu.vector_store %arg5[%c28_312, %c0_313], %330 {strides = array<i32>} : memref<36x256xf32, #tpu.memory_space<vmem>>, vector<4x256xf32>,
    %c0_314 = arith.constant 0 : index
    %c145_315 = arith.constant 145 : index
    %332 = vector.load %arg4[%c0_314, %c145_315] : memref<4x512xf32, #tpu.memory_space<vmem>>, vector<4x256xf32>
    %cst_316 = arith.constant 0.000000e+00 : f32
    %333 = vector.shape_cast %27 : vector<1x256xi1> to vector<1x256xi1>
    %334 = vector.broadcast %333 : vector<1x256xi1> to vector<4x256xi1>
    %335 = vector.broadcast %cst_316 : f32 to vector<4x256xf32>
    %336 = arith.select %334, %332, %335 : vector<4x256xi1>, vector<4x256xf32>
    %c32_317 = arith.constant 32 : index
    %c0_318 = arith.constant 0 : index
    %337 = vector.load %arg5[%c32_317, %c0_318] : memref<36x256xf32, #tpu.memory_space<vmem>>, vector<4x256xf32>
    tpu.vector_store %arg5[%c32_317, %c0_318], %336 {strides = array<i32>} : memref<36x256xf32, #tpu.memory_space<vmem>>, vector<4x256xf32>,
    %c8_319 = arith.constant 8 : index
    %c0_320 = arith.constant 0 : index
    %c0_321 = arith.constant 0 : index
    %338 = vector.load %arg2[%c8_319, %c0_320, %c0_321] : memref<13x4x36xf32, #tpu.memory_space<vmem>>, vector<1x4x36xf32>
    %339 = vector.shape_cast %338 : vector<1x4x36xf32> to vector<4x36xf32>
    %c0_322 = arith.constant 0 : index
    %c0_323 = arith.constant 0 : index
    %340 = vector.load %arg5[%c0_322, %c0_323] : memref<36x256xf32, #tpu.memory_space<vmem>>, vector<36x256xf32>
    %cst_324 = arith.constant dense<0.000000e+00> : vector<4x256xf32>
    %341 = tpu.matmul %339, %340, %cst_324 {dimension_numbers = #tpu.dot_dimension_numbers<[1], [0], [0], [1], [0, 0, 1, 1], [], []>} : vector<4x36xf32>, vector<36x256xf32>, vector<4x256xf32> -> vector<4x256xf32>
    %342 = arith.addf %193, %341 : vector<4x256xf32>
    %c0_325 = arith.constant 0 : index
    %c128_326 = arith.constant 128 : index
    %343 = vector.load %arg4[%c0_325, %c128_326] : memref<4x512xf32, #tpu.memory_space<vmem>>, vector<4x256xf32>
    tpu.vector_store %arg4[%c0_325, %c128_326], %13 {strides = array<i32>} : memref<4x512xf32, #tpu.memory_space<vmem>>, vector<4x256xf32>,
    %c0_327 = arith.constant 0 : index
    %c125_328 = arith.constant 125 : index
    %344 = vector.load %arg4[%c0_327, %c125_328] : memref<4x512xf32, #tpu.memory_space<vmem>>, vector<4x256xf32>
    %cst_329 = arith.constant 0.000000e+00 : f32
    %345 = vector.shape_cast %98 : vector<1x256xi1> to vector<1x256xi1>
    %346 = vector.broadcast %345 : vector<1x256xi1> to vector<4x256xi1>
    %347 = vector.broadcast %cst_329 : f32 to vector<4x256xf32>
    %348 = arith.select %346, %344, %347 : vector<4x256xi1>, vector<4x256xf32>
    %c0_330 = arith.constant 0 : index
    %c0_331 = arith.constant 0 : index
    %349 = vector.load %arg5[%c0_330, %c0_331] : memref<36x256xf32, #tpu.memory_space<vmem>>, vector<4x256xf32>
    tpu.vector_store %arg5[%c0_330, %c0_331], %348 {strides = array<i32>} : memref<36x256xf32, #tpu.memory_space<vmem>>, vector<4x256xf32>,
    %c0_332 = arith.constant 0 : index
    %c126_333 = arith.constant 126 : index
    %350 = vector.load %arg4[%c0_332, %c126_333] : memref<4x512xf32, #tpu.memory_space<vmem>>, vector<4x256xf32>
    %cst_334 = arith.constant 0.000000e+00 : f32
    %351 = vector.shape_cast %197 : vector<1x256xi1> to vector<1x256xi1>
    %352 = vector.broadcast %351 : vector<1x256xi1> to vector<4x256xi1>
    %353 = vector.broadcast %cst_334 : f32 to vector<4x256xf32>
    %354 = arith.select %352, %350, %353 : vector<4x256xi1>, vector<4x256xf32>
    %c4_335 = arith.constant 4 : index
    %c0_336 = arith.constant 0 : index
    %355 = vector.load %arg5[%c4_335, %c0_336] : memref<36x256xf32, #tpu.memory_space<vmem>>, vector<4x256xf32>
    tpu.vector_store %arg5[%c4_335, %c0_336], %354 {strides = array<i32>} : memref<36x256xf32, #tpu.memory_space<vmem>>, vector<4x256xf32>,
    %c0_337 = arith.constant 0 : index
    %c127_338 = arith.constant 127 : index
    %356 = vector.load %arg4[%c0_337, %c127_338] : memref<4x512xf32, #tpu.memory_space<vmem>>, vector<4x256xf32>
    %cst_339 = arith.constant 0.000000e+00 : f32
    %357 = vector.shape_cast %17 : vector<1x256xi1> to vector<1x256xi1>
    %358 = vector.broadcast %357 : vector<1x256xi1> to vector<4x256xi1>
    %359 = vector.broadcast %cst_339 : f32 to vector<4x256xf32>
    %360 = arith.select %358, %356, %359 : vector<4x256xi1>, vector<4x256xf32>
    %c8_340 = arith.constant 8 : index
    %c0_341 = arith.constant 0 : index
    %361 = vector.load %arg5[%c8_340, %c0_341] : memref<36x256xf32, #tpu.memory_space<vmem>>, vector<4x256xf32>
    tpu.vector_store %arg5[%c8_340, %c0_341], %360 {strides = array<i32>} : memref<36x256xf32, #tpu.memory_space<vmem>>, vector<4x256xf32>,
    %c0_342 = arith.constant 0 : index
    %c128_343 = arith.constant 128 : index
    %362 = vector.load %arg4[%c0_342, %c128_343] : memref<4x512xf32, #tpu.memory_space<vmem>>, vector<4x256xf32>
    %c12_344 = arith.constant 12 : index
    %c0_345 = arith.constant 0 : index
    %363 = vector.load %arg5[%c12_344, %c0_345] : memref<36x256xf32, #tpu.memory_space<vmem>>, vector<4x256xf32>
    tpu.vector_store %arg5[%c12_344, %c0_345], %362 {strides = array<i32>} : memref<36x256xf32, #tpu.memory_space<vmem>>, vector<4x256xf32>,
    %c0_346 = arith.constant 0 : index
    %c129_347 = arith.constant 129 : index
    %364 = vector.load %arg4[%c0_346, %c129_347] : memref<4x512xf32, #tpu.memory_space<vmem>>, vector<4x256xf32>
    %cst_348 = arith.constant 0.000000e+00 : f32
    %365 = vector.shape_cast %27 : vector<1x256xi1> to vector<1x256xi1>
    %366 = vector.broadcast %365 : vector<1x256xi1> to vector<4x256xi1>
    %367 = vector.broadcast %cst_348 : f32 to vector<4x256xf32>
    %368 = arith.select %366, %364, %367 : vector<4x256xi1>, vector<4x256xf32>
    %c16_349 = arith.constant 16 : index
    %c0_350 = arith.constant 0 : index
    %369 = vector.load %arg5[%c16_349, %c0_350] : memref<36x256xf32, #tpu.memory_space<vmem>>, vector<4x256xf32>
    tpu.vector_store %arg5[%c16_349, %c0_350], %368 {strides = array<i32>} : memref<36x256xf32, #tpu.memory_space<vmem>>, vector<4x256xf32>,
    %c0_351 = arith.constant 0 : index
    %c130_352 = arith.constant 130 : index
    %370 = vector.load %arg4[%c0_351, %c130_352] : memref<4x512xf32, #tpu.memory_space<vmem>>, vector<4x256xf32>
    %cst_353 = arith.constant 0.000000e+00 : f32
    %371 = vector.shape_cast %219 : vector<1x256xi1> to vector<1x256xi1>
    %372 = vector.broadcast %371 : vector<1x256xi1> to vector<4x256xi1>
    %373 = vector.broadcast %cst_353 : f32 to vector<4x256xf32>
    %374 = arith.select %372, %370, %373 : vector<4x256xi1>, vector<4x256xf32>
    %c20_354 = arith.constant 20 : index
    %c0_355 = arith.constant 0 : index
    %375 = vector.load %arg5[%c20_354, %c0_355] : memref<36x256xf32, #tpu.memory_space<vmem>>, vector<4x256xf32>
    tpu.vector_store %arg5[%c20_354, %c0_355], %374 {strides = array<i32>} : memref<36x256xf32, #tpu.memory_space<vmem>>, vector<4x256xf32>,
    %c0_356 = arith.constant 0 : index
    %c131_357 = arith.constant 131 : index
    %376 = vector.load %arg4[%c0_356, %c131_357] : memref<4x512xf32, #tpu.memory_space<vmem>>, vector<4x256xf32>
    %cst_358 = arith.constant 0.000000e+00 : f32
    %377 = vector.shape_cast %108 : vector<1x256xi1> to vector<1x256xi1>
    %378 = vector.broadcast %377 : vector<1x256xi1> to vector<4x256xi1>
    %379 = vector.broadcast %cst_358 : f32 to vector<4x256xf32>
    %380 = arith.select %378, %376, %379 : vector<4x256xi1>, vector<4x256xf32>
    %c24_359 = arith.constant 24 : index
    %c0_360 = arith.constant 0 : index
    %381 = vector.load %arg5[%c24_359, %c0_360] : memref<36x256xf32, #tpu.memory_space<vmem>>, vector<4x256xf32>
    tpu.vector_store %arg5[%c24_359, %c0_360], %380 {strides = array<i32>} : memref<36x256xf32, #tpu.memory_space<vmem>>, vector<4x256xf32>,
    %c9 = arith.constant 9 : index
    %c0_361 = arith.constant 0 : index
    %c0_362 = arith.constant 0 : index
    %382 = vector.load %arg2[%c9, %c0_361, %c0_362] : memref<13x4x36xf32, #tpu.memory_space<vmem>>, vector<1x4x36xf32>
    %383 = vector.shape_cast %382 : vector<1x4x36xf32> to vector<4x36xf32>
    %c0_363 = arith.constant 0 : index
    %c0_364 = arith.constant 0 : index
    %384 = vector.load %arg5[%c0_363, %c0_364] : memref<36x256xf32, #tpu.memory_space<vmem>>, vector<36x256xf32>
    %cst_365 = arith.constant dense<0.000000e+00> : vector<4x256xf32>
    %385 = tpu.matmul %383, %384, %cst_365 {dimension_numbers = #tpu.dot_dimension_numbers<[1], [0], [0], [1], [0, 0, 1, 1], [], []>} : vector<4x36xf32>, vector<36x256xf32>, vector<4x256xf32> -> vector<4x256xf32>
    %c0_366 = arith.constant 0 : index
    %c128_367 = arith.constant 128 : index
    %386 = vector.load %arg4[%c0_366, %c128_367] : memref<4x512xf32, #tpu.memory_space<vmem>>, vector<4x256xf32>
    tpu.vector_store %arg4[%c0_366, %c128_367], %385 {strides = array<i32>} : memref<4x512xf32, #tpu.memory_space<vmem>>, vector<4x256xf32>,
    %c0_368 = arith.constant 0 : index
    %c80_369 = arith.constant 80 : index
    %387 = vector.load %arg4[%c0_368, %c80_369] : memref<4x512xf32, #tpu.memory_space<vmem>>, vector<4x256xf32>
    %c0_370 = arith.constant 0 : index
    %c0_371 = arith.constant 0 : index
    %388 = vector.load %arg5[%c0_370, %c0_371] : memref<36x256xf32, #tpu.memory_space<vmem>>, vector<4x256xf32>
    tpu.vector_store %arg5[%c0_370, %c0_371], %387 {strides = array<i32>} : memref<36x256xf32, #tpu.memory_space<vmem>>, vector<4x256xf32>,
    %c0_372 = arith.constant 0 : index
    %c96_373 = arith.constant 96 : index
    %389 = vector.load %arg4[%c0_372, %c96_373] : memref<4x512xf32, #tpu.memory_space<vmem>>, vector<4x256xf32>
    %c4_374 = arith.constant 4 : index
    %c0_375 = arith.constant 0 : index
    %390 = vector.load %arg5[%c4_374, %c0_375] : memref<36x256xf32, #tpu.memory_space<vmem>>, vector<4x256xf32>
    tpu.vector_store %arg5[%c4_374, %c0_375], %389 {strides = array<i32>} : memref<36x256xf32, #tpu.memory_space<vmem>>, vector<4x256xf32>,
    %c0_376 = arith.constant 0 : index
    %c112_377 = arith.constant 112 : index
    %391 = vector.load %arg4[%c0_376, %c112_377] : memref<4x512xf32, #tpu.memory_space<vmem>>, vector<4x256xf32>
    %c8_378 = arith.constant 8 : index
    %c0_379 = arith.constant 0 : index
    %392 = vector.load %arg5[%c8_378, %c0_379] : memref<36x256xf32, #tpu.memory_space<vmem>>, vector<4x256xf32>
    tpu.vector_store %arg5[%c8_378, %c0_379], %391 {strides = array<i32>} : memref<36x256xf32, #tpu.memory_space<vmem>>, vector<4x256xf32>,
    %c0_380 = arith.constant 0 : index
    %c128_381 = arith.constant 128 : index
    %393 = vector.load %arg4[%c0_380, %c128_381] : memref<4x512xf32, #tpu.memory_space<vmem>>, vector<4x256xf32>
    %c12_382 = arith.constant 12 : index
    %c0_383 = arith.constant 0 : index
    %394 = vector.load %arg5[%c12_382, %c0_383] : memref<36x256xf32, #tpu.memory_space<vmem>>, vector<4x256xf32>
    tpu.vector_store %arg5[%c12_382, %c0_383], %393 {strides = array<i32>} : memref<36x256xf32, #tpu.memory_space<vmem>>, vector<4x256xf32>,
    %c0_384 = arith.constant 0 : index
    %c144_385 = arith.constant 144 : index
    %395 = vector.load %arg4[%c0_384, %c144_385] : memref<4x512xf32, #tpu.memory_space<vmem>>, vector<4x256xf32>
    %c16_386 = arith.constant 16 : index
    %c0_387 = arith.constant 0 : index
    %396 = vector.load %arg5[%c16_386, %c0_387] : memref<36x256xf32, #tpu.memory_space<vmem>>, vector<4x256xf32>
    tpu.vector_store %arg5[%c16_386, %c0_387], %395 {strides = array<i32>} : memref<36x256xf32, #tpu.memory_space<vmem>>, vector<4x256xf32>,
    %c0_388 = arith.constant 0 : index
    %c160_389 = arith.constant 160 : index
    %397 = vector.load %arg4[%c0_388, %c160_389] : memref<4x512xf32, #tpu.memory_space<vmem>>, vector<4x256xf32>
    %c20_390 = arith.constant 20 : index
    %c0_391 = arith.constant 0 : index
    %398 = vector.load %arg5[%c20_390, %c0_391] : memref<36x256xf32, #tpu.memory_space<vmem>>, vector<4x256xf32>
    tpu.vector_store %arg5[%c20_390, %c0_391], %397 {strides = array<i32>} : memref<36x256xf32, #tpu.memory_space<vmem>>, vector<4x256xf32>,
    %c0_392 = arith.constant 0 : index
    %c176_393 = arith.constant 176 : index
    %399 = vector.load %arg4[%c0_392, %c176_393] : memref<4x512xf32, #tpu.memory_space<vmem>>, vector<4x256xf32>
    %c24_394 = arith.constant 24 : index
    %c0_395 = arith.constant 0 : index
    %400 = vector.load %arg5[%c24_394, %c0_395] : memref<36x256xf32, #tpu.memory_space<vmem>>, vector<4x256xf32>
    tpu.vector_store %arg5[%c24_394, %c0_395], %399 {strides = array<i32>} : memref<36x256xf32, #tpu.memory_space<vmem>>, vector<4x256xf32>,
    %c10 = arith.constant 10 : index
    %c0_396 = arith.constant 0 : index
    %c0_397 = arith.constant 0 : index
    %401 = vector.load %arg2[%c10, %c0_396, %c0_397] : memref<13x4x36xf32, #tpu.memory_space<vmem>>, vector<1x4x36xf32>
    %402 = vector.shape_cast %401 : vector<1x4x36xf32> to vector<4x36xf32>
    %c0_398 = arith.constant 0 : index
    %c0_399 = arith.constant 0 : index
    %403 = vector.load %arg5[%c0_398, %c0_399] : memref<36x256xf32, #tpu.memory_space<vmem>>, vector<36x256xf32>
    %cst_400 = arith.constant dense<0.000000e+00> : vector<4x256xf32>
    %404 = tpu.matmul %402, %403, %cst_400 {dimension_numbers = #tpu.dot_dimension_numbers<[1], [0], [0], [1], [0, 0, 1, 1], [], []>} : vector<4x36xf32>, vector<36x256xf32>, vector<4x256xf32> -> vector<4x256xf32>
    %c0_401 = arith.constant 0 : index
    %c128_402 = arith.constant 128 : index
    %405 = vector.load %arg4[%c0_401, %c128_402] : memref<4x512xf32, #tpu.memory_space<vmem>>, vector<4x256xf32>
    tpu.vector_store %arg4[%c0_401, %c128_402], %404 {strides = array<i32>} : memref<4x512xf32, #tpu.memory_space<vmem>>, vector<4x256xf32>,
    %c0_403 = arith.constant 0 : index
    %c9_404 = arith.constant 9 : index
    %406 = vector.load %arg4[%c0_403, %c9_404] : memref<4x512xf32, #tpu.memory_space<vmem>>, vector<4x256xf32>
    %cst_405 = arith.constant 7.000000e+00 : f32
    %407 = vector.broadcast %cst_405 : f32 to vector<1x256xf32>
    %408 = arith.cmpf oge, %11, %407 : vector<1x256xf32>
    %cst_406 = arith.constant 0.000000e+00 : f32
    %409 = vector.shape_cast %408 : vector<1x256xi1> to vector<1x256xi1>
    %410 = vector.broadcast %409 : vector<1x256xi1> to vector<4x256xi1>
    %411 = vector.broadcast %cst_406 : f32 to vector<4x256xf32>
    %412 = arith.select %410, %406, %411 : vector<4x256xi1>, vector<4x256xf32>
    %c0_407 = arith.constant 0 : index
    %c0_408 = arith.constant 0 : index
    %413 = vector.load %arg5[%c0_407, %c0_408] : memref<36x256xf32, #tpu.memory_space<vmem>>, vector<4x256xf32>
    tpu.vector_store %arg5[%c0_407, %c0_408], %412 {strides = array<i32>} : memref<36x256xf32, #tpu.memory_space<vmem>>, vector<4x256xf32>,
    %c0_409 = arith.constant 0 : index
    %c16_410 = arith.constant 16 : index
    %414 = vector.load %arg4[%c0_409, %c16_410] : memref<4x512xf32, #tpu.memory_space<vmem>>, vector<4x256xf32>
    %c4_411 = arith.constant 4 : index
    %c0_412 = arith.constant 0 : index
    %415 = vector.load %arg5[%c4_411, %c0_412] : memref<36x256xf32, #tpu.memory_space<vmem>>, vector<4x256xf32>
    tpu.vector_store %arg5[%c4_411, %c0_412], %414 {strides = array<i32>} : memref<36x256xf32, #tpu.memory_space<vmem>>, vector<4x256xf32>,
    %c0_413 = arith.constant 0 : index
    %c23 = arith.constant 23 : index
    %416 = vector.load %arg4[%c0_413, %c23] : memref<4x512xf32, #tpu.memory_space<vmem>>, vector<4x256xf32>
    %cst_414 = arith.constant 9.000000e+00 : f32
    %417 = vector.broadcast %cst_414 : f32 to vector<1x256xf32>
    %418 = arith.cmpf olt, %11, %417 : vector<1x256xf32>
    %cst_415 = arith.constant 0.000000e+00 : f32
    %419 = vector.shape_cast %418 : vector<1x256xi1> to vector<1x256xi1>
    %420 = vector.broadcast %419 : vector<1x256xi1> to vector<4x256xi1>
    %421 = vector.broadcast %cst_415 : f32 to vector<4x256xf32>
    %422 = arith.select %420, %416, %421 : vector<4x256xi1>, vector<4x256xf32>
    %c8_416 = arith.constant 8 : index
    %c0_417 = arith.constant 0 : index
    %423 = vector.load %arg5[%c8_416, %c0_417] : memref<36x256xf32, #tpu.memory_space<vmem>>, vector<4x256xf32>
    tpu.vector_store %arg5[%c8_416, %c0_417], %422 {strides = array<i32>} : memref<36x256xf32, #tpu.memory_space<vmem>>, vector<4x256xf32>,
    %c0_418 = arith.constant 0 : index
    %c121 = arith.constant 121 : index
    %424 = vector.load %arg4[%c0_418, %c121] : memref<4x512xf32, #tpu.memory_space<vmem>>, vector<4x256xf32>
    %cst_419 = arith.constant 0.000000e+00 : f32
    %425 = vector.shape_cast %408 : vector<1x256xi1> to vector<1x256xi1>
    %426 = vector.broadcast %425 : vector<1x256xi1> to vector<4x256xi1>
    %427 = vector.broadcast %cst_419 : f32 to vector<4x256xf32>
    %428 = arith.select %426, %424, %427 : vector<4x256xi1>, vector<4x256xf32>
    %c12_420 = arith.constant 12 : index
    %c0_421 = arith.constant 0 : index
    %429 = vector.load %arg5[%c12_420, %c0_421] : memref<36x256xf32, #tpu.memory_space<vmem>>, vector<4x256xf32>
    tpu.vector_store %arg5[%c12_420, %c0_421], %428 {strides = array<i32>} : memref<36x256xf32, #tpu.memory_space<vmem>>, vector<4x256xf32>,
    %c0_422 = arith.constant 0 : index
    %c128_423 = arith.constant 128 : index
    %430 = vector.load %arg4[%c0_422, %c128_423] : memref<4x512xf32, #tpu.memory_space<vmem>>, vector<4x256xf32>
    %c16_424 = arith.constant 16 : index
    %c0_425 = arith.constant 0 : index
    %431 = vector.load %arg5[%c16_424, %c0_425] : memref<36x256xf32, #tpu.memory_space<vmem>>, vector<4x256xf32>
    tpu.vector_store %arg5[%c16_424, %c0_425], %430 {strides = array<i32>} : memref<36x256xf32, #tpu.memory_space<vmem>>, vector<4x256xf32>,
    %c0_426 = arith.constant 0 : index
    %c135 = arith.constant 135 : index
    %432 = vector.load %arg4[%c0_426, %c135] : memref<4x512xf32, #tpu.memory_space<vmem>>, vector<4x256xf32>
    %cst_427 = arith.constant 0.000000e+00 : f32
    %433 = vector.shape_cast %418 : vector<1x256xi1> to vector<1x256xi1>
    %434 = vector.broadcast %433 : vector<1x256xi1> to vector<4x256xi1>
    %435 = vector.broadcast %cst_427 : f32 to vector<4x256xf32>
    %436 = arith.select %434, %432, %435 : vector<4x256xi1>, vector<4x256xf32>
    %c20_428 = arith.constant 20 : index
    %c0_429 = arith.constant 0 : index
    %437 = vector.load %arg5[%c20_428, %c0_429] : memref<36x256xf32, #tpu.memory_space<vmem>>, vector<4x256xf32>
    tpu.vector_store %arg5[%c20_428, %c0_429], %436 {strides = array<i32>} : memref<36x256xf32, #tpu.memory_space<vmem>>, vector<4x256xf32>,
    %c0_430 = arith.constant 0 : index
    %c233 = arith.constant 233 : index
    %438 = vector.load %arg4[%c0_430, %c233] : memref<4x512xf32, #tpu.memory_space<vmem>>, vector<4x256xf32>
    %cst_431 = arith.constant 0.000000e+00 : f32
    %439 = vector.shape_cast %408 : vector<1x256xi1> to vector<1x256xi1>
    %440 = vector.broadcast %439 : vector<1x256xi1> to vector<4x256xi1>
    %441 = vector.broadcast %cst_431 : f32 to vector<4x256xf32>
    %442 = arith.select %440, %438, %441 : vector<4x256xi1>, vector<4x256xf32>
    %c24_432 = arith.constant 24 : index
    %c0_433 = arith.constant 0 : index
    %443 = vector.load %arg5[%c24_432, %c0_433] : memref<36x256xf32, #tpu.memory_space<vmem>>, vector<4x256xf32>
    tpu.vector_store %arg5[%c24_432, %c0_433], %442 {strides = array<i32>} : memref<36x256xf32, #tpu.memory_space<vmem>>, vector<4x256xf32>,
    %c0_434 = arith.constant 0 : index
    %c240 = arith.constant 240 : index
    %444 = vector.load %arg4[%c0_434, %c240] : memref<4x512xf32, #tpu.memory_space<vmem>>, vector<4x256xf32>
    %c28_435 = arith.constant 28 : index
    %c0_436 = arith.constant 0 : index
    %445 = vector.load %arg5[%c28_435, %c0_436] : memref<36x256xf32, #tpu.memory_space<vmem>>, vector<4x256xf32>
    tpu.vector_store %arg5[%c28_435, %c0_436], %444 {strides = array<i32>} : memref<36x256xf32, #tpu.memory_space<vmem>>, vector<4x256xf32>,
    %c0_437 = arith.constant 0 : index
    %c247 = arith.constant 247 : index
    %446 = vector.load %arg4[%c0_437, %c247] : memref<4x512xf32, #tpu.memory_space<vmem>>, vector<4x256xf32>
    %cst_438 = arith.constant 0.000000e+00 : f32
    %447 = vector.shape_cast %418 : vector<1x256xi1> to vector<1x256xi1>
    %448 = vector.broadcast %447 : vector<1x256xi1> to vector<4x256xi1>
    %449 = vector.broadcast %cst_438 : f32 to vector<4x256xf32>
    %450 = arith.select %448, %446, %449 : vector<4x256xi1>, vector<4x256xf32>
    %c32_439 = arith.constant 32 : index
    %c0_440 = arith.constant 0 : index
    %451 = vector.load %arg5[%c32_439, %c0_440] : memref<36x256xf32, #tpu.memory_space<vmem>>, vector<4x256xf32>
    tpu.vector_store %arg5[%c32_439, %c0_440], %450 {strides = array<i32>} : memref<36x256xf32, #tpu.memory_space<vmem>>, vector<4x256xf32>,
    %c11 = arith.constant 11 : index
    %c0_441 = arith.constant 0 : index
    %c0_442 = arith.constant 0 : index
    %452 = vector.load %arg2[%c11, %c0_441, %c0_442] : memref<13x4x36xf32, #tpu.memory_space<vmem>>, vector<1x4x36xf32>
    %453 = vector.shape_cast %452 : vector<1x4x36xf32> to vector<4x36xf32>
    %c0_443 = arith.constant 0 : index
    %c0_444 = arith.constant 0 : index
    %454 = vector.load %arg5[%c0_443, %c0_444] : memref<36x256xf32, #tpu.memory_space<vmem>>, vector<36x256xf32>
    %cst_445 = arith.constant dense<0.000000e+00> : vector<4x256xf32>
    %455 = tpu.matmul %453, %454, %cst_445 {dimension_numbers = #tpu.dot_dimension_numbers<[1], [0], [0], [1], [0, 0, 1, 1], [], []>} : vector<4x36xf32>, vector<36x256xf32>, vector<4x256xf32> -> vector<4x256xf32>
    %c0_446 = arith.constant 0 : index
    %c128_447 = arith.constant 128 : index
    %456 = vector.load %arg4[%c0_446, %c128_447] : memref<4x512xf32, #tpu.memory_space<vmem>>, vector<4x256xf32>
    tpu.vector_store %arg4[%c0_446, %c128_447], %455 {strides = array<i32>} : memref<4x512xf32, #tpu.memory_space<vmem>>, vector<4x256xf32>,
    %c0_448 = arith.constant 0 : index
    %c111_449 = arith.constant 111 : index
    %457 = vector.load %arg4[%c0_448, %c111_449] : memref<4x512xf32, #tpu.memory_space<vmem>>, vector<4x256xf32>
    %cst_450 = arith.constant 0.000000e+00 : f32
    %458 = vector.shape_cast %17 : vector<1x256xi1> to vector<1x256xi1>
    %459 = vector.broadcast %458 : vector<1x256xi1> to vector<4x256xi1>
    %460 = vector.broadcast %cst_450 : f32 to vector<4x256xf32>
    %461 = arith.select %459, %457, %460 : vector<4x256xi1>, vector<4x256xf32>
    %c0_451 = arith.constant 0 : index
    %c0_452 = arith.constant 0 : index
    %462 = vector.load %arg5[%c0_451, %c0_452] : memref<36x256xf32, #tpu.memory_space<vmem>>, vector<4x256xf32>
    tpu.vector_store %arg5[%c0_451, %c0_452], %461 {strides = array<i32>} : memref<36x256xf32, #tpu.memory_space<vmem>>, vector<4x256xf32>,
    %c0_453 = arith.constant 0 : index
    %c112_454 = arith.constant 112 : index
    %463 = vector.load %arg4[%c0_453, %c112_454] : memref<4x512xf32, #tpu.memory_space<vmem>>, vector<4x256xf32>
    %c4_455 = arith.constant 4 : index
    %c0_456 = arith.constant 0 : index
    %464 = vector.load %arg5[%c4_455, %c0_456] : memref<36x256xf32, #tpu.memory_space<vmem>>, vector<4x256xf32>
    tpu.vector_store %arg5[%c4_455, %c0_456], %463 {strides = array<i32>} : memref<36x256xf32, #tpu.memory_space<vmem>>, vector<4x256xf32>,
    %c0_457 = arith.constant 0 : index
    %c113_458 = arith.constant 113 : index
    %465 = vector.load %arg4[%c0_457, %c113_458] : memref<4x512xf32, #tpu.memory_space<vmem>>, vector<4x256xf32>
    %cst_459 = arith.constant 0.000000e+00 : f32
    %466 = vector.shape_cast %27 : vector<1x256xi1> to vector<1x256xi1>
    %467 = vector.broadcast %466 : vector<1x256xi1> to vector<4x256xi1>
    %468 = vector.broadcast %cst_459 : f32 to vector<4x256xf32>
    %469 = arith.select %467, %465, %468 : vector<4x256xi1>, vector<4x256xf32>
    %c8_460 = arith.constant 8 : index
    %c0_461 = arith.constant 0 : index
    %470 = vector.load %arg5[%c8_460, %c0_461] : memref<36x256xf32, #tpu.memory_space<vmem>>, vector<4x256xf32>
    tpu.vector_store %arg5[%c8_460, %c0_461], %469 {strides = array<i32>} : memref<36x256xf32, #tpu.memory_space<vmem>>, vector<4x256xf32>,
    %c0_462 = arith.constant 0 : index
    %c127_463 = arith.constant 127 : index
    %471 = vector.load %arg4[%c0_462, %c127_463] : memref<4x512xf32, #tpu.memory_space<vmem>>, vector<4x256xf32>
    %cst_464 = arith.constant 0.000000e+00 : f32
    %472 = vector.shape_cast %17 : vector<1x256xi1> to vector<1x256xi1>
    %473 = vector.broadcast %472 : vector<1x256xi1> to vector<4x256xi1>
    %474 = vector.broadcast %cst_464 : f32 to vector<4x256xf32>
    %475 = arith.select %473, %471, %474 : vector<4x256xi1>, vector<4x256xf32>
    %c12_465 = arith.constant 12 : index
    %c0_466 = arith.constant 0 : index
    %476 = vector.load %arg5[%c12_465, %c0_466] : memref<36x256xf32, #tpu.memory_space<vmem>>, vector<4x256xf32>
    tpu.vector_store %arg5[%c12_465, %c0_466], %475 {strides = array<i32>} : memref<36x256xf32, #tpu.memory_space<vmem>>, vector<4x256xf32>,
    %c0_467 = arith.constant 0 : index
    %c128_468 = arith.constant 128 : index
    %477 = vector.load %arg4[%c0_467, %c128_468] : memref<4x512xf32, #tpu.memory_space<vmem>>, vector<4x256xf32>
    %c16_469 = arith.constant 16 : index
    %c0_470 = arith.constant 0 : index
    %478 = vector.load %arg5[%c16_469, %c0_470] : memref<36x256xf32, #tpu.memory_space<vmem>>, vector<4x256xf32>
    tpu.vector_store %arg5[%c16_469, %c0_470], %477 {strides = array<i32>} : memref<36x256xf32, #tpu.memory_space<vmem>>, vector<4x256xf32>,
    %c0_471 = arith.constant 0 : index
    %c129_472 = arith.constant 129 : index
    %479 = vector.load %arg4[%c0_471, %c129_472] : memref<4x512xf32, #tpu.memory_space<vmem>>, vector<4x256xf32>
    %cst_473 = arith.constant 0.000000e+00 : f32
    %480 = vector.shape_cast %27 : vector<1x256xi1> to vector<1x256xi1>
    %481 = vector.broadcast %480 : vector<1x256xi1> to vector<4x256xi1>
    %482 = vector.broadcast %cst_473 : f32 to vector<4x256xf32>
    %483 = arith.select %481, %479, %482 : vector<4x256xi1>, vector<4x256xf32>
    %c20_474 = arith.constant 20 : index
    %c0_475 = arith.constant 0 : index
    %484 = vector.load %arg5[%c20_474, %c0_475] : memref<36x256xf32, #tpu.memory_space<vmem>>, vector<4x256xf32>
    tpu.vector_store %arg5[%c20_474, %c0_475], %483 {strides = array<i32>} : memref<36x256xf32, #tpu.memory_space<vmem>>, vector<4x256xf32>,
    %c0_476 = arith.constant 0 : index
    %c143_477 = arith.constant 143 : index
    %485 = vector.load %arg4[%c0_476, %c143_477] : memref<4x512xf32, #tpu.memory_space<vmem>>, vector<4x256xf32>
    %cst_478 = arith.constant 0.000000e+00 : f32
    %486 = vector.shape_cast %17 : vector<1x256xi1> to vector<1x256xi1>
    %487 = vector.broadcast %486 : vector<1x256xi1> to vector<4x256xi1>
    %488 = vector.broadcast %cst_478 : f32 to vector<4x256xf32>
    %489 = arith.select %487, %485, %488 : vector<4x256xi1>, vector<4x256xf32>
    %c24_479 = arith.constant 24 : index
    %c0_480 = arith.constant 0 : index
    %490 = vector.load %arg5[%c24_479, %c0_480] : memref<36x256xf32, #tpu.memory_space<vmem>>, vector<4x256xf32>
    tpu.vector_store %arg5[%c24_479, %c0_480], %489 {strides = array<i32>} : memref<36x256xf32, #tpu.memory_space<vmem>>, vector<4x256xf32>,
    %c0_481 = arith.constant 0 : index
    %c144_482 = arith.constant 144 : index
    %491 = vector.load %arg4[%c0_481, %c144_482] : memref<4x512xf32, #tpu.memory_space<vmem>>, vector<4x256xf32>
    %c28_483 = arith.constant 28 : index
    %c0_484 = arith.constant 0 : index
    %492 = vector.load %arg5[%c28_483, %c0_484] : memref<36x256xf32, #tpu.memory_space<vmem>>, vector<4x256xf32>
    tpu.vector_store %arg5[%c28_483, %c0_484], %491 {strides = array<i32>} : memref<36x256xf32, #tpu.memory_space<vmem>>, vector<4x256xf32>,
    %c0_485 = arith.constant 0 : index
    %c145_486 = arith.constant 145 : index
    %493 = vector.load %arg4[%c0_485, %c145_486] : memref<4x512xf32, #tpu.memory_space<vmem>>, vector<4x256xf32>
    %cst_487 = arith.constant 0.000000e+00 : f32
    %494 = vector.shape_cast %27 : vector<1x256xi1> to vector<1x256xi1>
    %495 = vector.broadcast %494 : vector<1x256xi1> to vector<4x256xi1>
    %496 = vector.broadcast %cst_487 : f32 to vector<4x256xf32>
    %497 = arith.select %495, %493, %496 : vector<4x256xi1>, vector<4x256xf32>
    %c32_488 = arith.constant 32 : index
    %c0_489 = arith.constant 0 : index
    %498 = vector.load %arg5[%c32_488, %c0_489] : memref<36x256xf32, #tpu.memory_space<vmem>>, vector<4x256xf32>
    tpu.vector_store %arg5[%c32_488, %c0_489], %497 {strides = array<i32>} : memref<36x256xf32, #tpu.memory_space<vmem>>, vector<4x256xf32>,
    %c12_490 = arith.constant 12 : index
    %c0_491 = arith.constant 0 : index
    %c0_492 = arith.constant 0 : index
    %499 = vector.load %arg2[%c12_490, %c0_491, %c0_492] : memref<13x4x36xf32, #tpu.memory_space<vmem>>, vector<1x4x36xf32>
    %500 = vector.shape_cast %499 : vector<1x4x36xf32> to vector<4x36xf32>
    %c0_493 = arith.constant 0 : index
    %c0_494 = arith.constant 0 : index
    %501 = vector.load %arg5[%c0_493, %c0_494] : memref<36x256xf32, #tpu.memory_space<vmem>>, vector<36x256xf32>
    %cst_495 = arith.constant dense<0.000000e+00> : vector<4x256xf32>
    %502 = tpu.matmul %500, %501, %cst_495 {dimension_numbers = #tpu.dot_dimension_numbers<[1], [0], [0], [1], [0, 0, 1, 1], [], []>} : vector<4x36xf32>, vector<36x256xf32>, vector<4x256xf32> -> vector<4x256xf32>
    %503 = arith.addf %342, %502 : vector<4x256xf32>
    %cst_496 = arith.constant 0.000000e+00 : f32
    %504 = vector.broadcast %cst_496 : f32 to vector<4x256xf32>
    %505 = arith.maximumf %503, %504 : vector<4x256xf32>
    %c0_497 = arith.constant 0 : index
    %c0_498 = arith.constant 0 : index
    %c0_499 = arith.constant 0 : index
    %506 = vector.load %arg3[%c0_497, %c0_498, %c0_499] : memref<1x4x256xf32, #tpu.memory_space<vmem>>, vector<1x4x256xf32>
    %507 = vector.shape_cast %506 : vector<1x4x256xf32> to vector<4x256xf32>
    %508 = vector.shape_cast %505 : vector<4x256xf32> to vector<1x4x256xf32>
    tpu.vector_store %arg3[%c0_497, %c0_498, %c0_499], %508 {strides = array<i32>} : memref<1x4x256xf32, #tpu.memory_space<vmem>>, vector<1x4x256xf32>,
    return
  }
  func.func @transform_0(%arg0: i32) -> (i32, i32, i32) {
    %c0_i32 = arith.constant 0 : i32
    %c0_i32_0 = arith.constant 0 : i32
    %c0_i32_1 = arith.constant 0 : i32
    return %arg0, %c0_i32, %c0_i32_0 : i32, i32, i32
  }
  func.func @transform_1(%arg0: i32) -> (i32, i32, i32) {
    %c0_i32 = arith.constant 0 : i32
    %c0_i32_0 = arith.constant 0 : i32
    %c0_i32_1 = arith.constant 0 : i32
    %c0_i32_2 = arith.constant 0 : i32
    return %c0_i32, %c0_i32_0, %c0_i32_1 : i32, i32, i32
  }
  func.func @transform_2(%arg0: i32) -> (i32, i32, i32) {
    %c0_i32 = arith.constant 0 : i32
    %c0_i32_0 = arith.constant 0 : i32
    %c0_i32_1 = arith.constant 0 : i32
    return %arg0, %c0_i32, %c0_i32_0 : i32, i32, i32
  }
}

</mosaic_0001>

<llo_original>
// kernel: spff_forward.1
$region0: #{spff_forward.1}
  #allocation0 [shape = 'u32[]', space=smem, size = 0x4, offset = 0x4, fixed_abs, tag = 'smem constant byte address 0x4 - core index']
  #allocation1 [shape = 'u32[144,128]{1,0:T(1,128)}', space=vmem, size = 0x12000, scoped, tag = 'internal scratch']
  #allocation2 [shape = 'f32[4,512]{1,0:T(4,128)}', space=vmem, size = 0x2000, scoped, tag = 'scratch operand']
  #allocation3 [shape = 'f32[36,256]{1,0:T(8,128)}', space=vmem, size = 0xa000, scoped, tag = 'scratch operand']
  %s0 = inlined_call_operand.vmem [shape: f32[2,4,256], index: 0, kind: input, shape index: {}]
  %s1 = inlined_call_operand.vmem [shape: f32[13,4,36], index: 1, kind: input, shape index: {}]
  %s2 = inlined_call_operand.vmem [shape: f32[2,4,256], index: 2, kind: output, shape index: {}]
  %s3 = sld [smem:[#allocation0]]
  $region41: #{spff_forward.1} parent=0
    _
  %s5 = ssub.s32 1, %s3
  %s6 = scalar_select 0, %s5, %s3
  loop: start=0, step=1, limit=4
  $region2: #{spff_forward.1} parent=0 // loop_pre_header
    _
  $region3: #{spff_forward.1} parent=0 // loop_header
    %s8 = sphi 0, %s12
    %p9 = scmp.ge.s32.totalorder %s8, 4
    %s18 = sphi 0, %s20
    %s21 = sphi 0, %s18
    %s22 = sphi 0, %s21
    %s38 = sphi 0, %s22
    %s42 = sphi 0, %s42
    %s44 = sphi 0, %s42
    %s45 = sphi 0, %s44
    %s59 = sphi 0, %s45
    %s65 = sphi 0, %s67
    %s68 = sphi 0, %s65
    %s69 = sphi 0, %s68
    %s85 = sphi 0, %s69
  $region4: #{spff_forward.1} parent=0 // loop_header_branch
    %11 = sbr.rel (%p9) target = $region8
  $region5: #{spff_forward.1} parent=0 // loop_body
    %s13 = ssub.s32 %s8, 1
    %s14 = ssub.s32 %s8, 2
    %s15 = sadd.s32 %s8, 1
    %s16 = ssub.s32 %s8, %s15
    %p17 = scmp.eq.s32.totalorder %s16, 0
    %s19 = sadd.s32 %s18, 1
    %s20 = scalar_select %p17, %s18, %s19
    %p23 = pneg %p17
    %p24 = scmp.eq.s32.totalorder %s8, 1
    %p25 = por %p23, %p24
    %p26 = scmp.ne.s32.totalorder %s18, %s21
    %p27 = scmp.eq.s32.totalorder %s8, 0
    %p28 = por %p26, %p27
    %p29 = scmp.ne.s32.totalorder %s18, %s21
    %p30 = scmp.eq.s32.totalorder %s13, 1
    %p31 = por %p29, %p30
    %p32 = scmp.ne.s32.totalorder %s21, %s22
    %p33 = scmp.eq.s32.totalorder %s13, 0
    %p34 = por %p32, %p33
    %p35 = scmp.ne.s32.totalorder %s21, %s22
    %p36 = scmp.eq.s32.totalorder %s14, 1
    %p37 = por %p35, %p36
    %p39 = scmp.ne.s32.totalorder %s22, %s38
    %p40 = scmp.eq.s32.totalorder %s14, 0
    %p41 = por %p39, %p40
    %s43 = sadd.s32 %s42, 1
    %p46 = scmp.eq.s32.totalorder %s8, 1
    %p47 = scmp.ne.s32.totalorder %s42, %s44
    %p48 = scmp.eq.s32.totalorder %s8, 0
    %p49 = por %p47, %p48
    %p50 = scmp.ne.s32.totalorder %s42, %s44
    %p51 = scmp.eq.s32.totalorder %s13, 1
    %p52 = por %p50, %p51
    %p53 = scmp.ne.s32.totalorder %s44, %s45
    %p54 = scmp.eq.s32.totalorder %s13, 0
    %p55 = por %p53, %p54
    %p56 = scmp.ne.s32.totalorder %s44, %s45
    %p57 = scmp.eq.s32.totalorder %s14, 1
    %p58 = por %p56, %p57
    %p60 = scmp.ne.s32.totalorder %s45, %s59
    %p61 = scmp.eq.s32.totalorder %s14, 0
    %p62 = por %p60, %p61
    %s63 = ssub.s32 %s8, %s15
    %p64 = scmp.eq.s32.totalorder %s63, 0
    %s66 = sadd.s32 %s65, 1
    %s67 = scalar_select %p64, %s65, %s66
    %p70 = pneg %p64
    %p71 = scmp.eq.s32.totalorder %s8, 1
    %p72 = por %p70, %p71
    %p73 = scmp.ne.s32.totalorder %s65, %s68
    %p74 = scmp.eq.s32.totalorder %s8, 0
    %p75 = por %p73, %p74
    %p76 = scmp.ne.s32.totalorder %s65, %s68
    %p77 = scmp.eq.s32.totalorder %s13, 1
    %p78 = por %p76, %p77
    %p79 = scmp.ne.s32.totalorder %s68, %s69
    %p80 = scmp.eq.s32.totalorder %s13, 0
    %p81 = por %p79, %p80
    %p82 = scmp.ne.s32.totalorder %s68, %s69
    %p83 = scmp.eq.s32.totalorder %s14, 1
    %p84 = por %p82, %p83
    %p86 = scmp.ne.s32.totalorder %s69, %s85
    %p87 = scmp.eq.s32.totalorder %s14, 0
    %p88 = por %p86, %p87
    %p89 = scmp.le.s32.totalorder 1, %s8
    %p90 = scmp.lt.s32.totalorder %s8, 3
    %p91 = pnand %p89, %p90
    %p92 = pneg %p91
    // Predicated region
    $region9: #{spff_forward.1} parent=5 // pred_check
      _
    $region10: #{spff_forward.1} parent=5 // pred_check_branch
      %94 = sbr.rel (%p91) target = $region12
    $region11: #{spff_forward.1} parent=5 // pred_region
      %s95 = ssub.s32 %s8, 1
      // Predicated region
      $region13: #{spff_forward.1} parent=11 // pred_check
        %p96 = pneg %p55
      $region14: #{spff_forward.1} parent=11 // pred_check_branch
        %98 = sbr.rel (%p96) target = $region16
      $region15: #{spff_forward.1} parent=11 // pred_region
        _
      $region16: #{spff_forward.1} parent=11 // pred_fallthru
        _
    $region12: #{spff_forward.1} parent=5 // pred_fallthru
      _
    %p99 = scmp.lt.s32.totalorder %s8, 2
    // Predicated region
    $region17: #{spff_forward.1} parent=5 // pred_check
      %p100 = pneg %p99
    $region18: #{spff_forward.1} parent=5 // pred_check_branch
      %102 = sbr.rel (%p100) target = $region20
    $region19: #{spff_forward.1} parent=5 // pred_region
      // Predicated region
      $region21: #{spff_forward.1} parent=19 // pred_check
        %p103 = pneg %p28
      $region22: #{spff_forward.1} parent=19 // pred_check_branch
        %105 = sbr.rel (%p103) target = $region24
      $region23: #{spff_forward.1} parent=19 // pred_region
        %p106 = scmp.lt.s32.totalorder %s8, 1
        %s107 = scalar_select %p106, %s8, 1
        %s108 = smul.addr %s107, 2
        %s109 = smul.addr %s108, 4
        %s110 = scalar_lea.vmem %s0, %s109
      $region24: #{spff_forward.1} parent=19 // pred_fallthru
        _
    $region20: #{spff_forward.1} parent=5 // pred_fallthru
      _
    %p111 = scmp.le.s32.totalorder 1, %s8
    %p112 = scmp.lt.s32.totalorder %s8, 3
    %p113 = pnand %p111, %p112
    %p114 = pneg %p113
    // Predicated region
    $region25: #{spff_forward.1} parent=5 // pred_check
      _
    $region26: #{spff_forward.1} parent=5 // pred_check_branch
      %116 = sbr.rel (%p113) target = $region28
    $region27: #{spff_forward.1} parent=5 // pred_region
      %s117 = ssub.s32 %s8, 1
      %p118 = scmp.lt.s32.totalorder %s13, 1
      %s119 = scalar_select %p118, %s13, 1
      %s120 = smul.addr %s119, 2
      %s121 = smul.addr %s120, 4
      %s122 = scalar_lea.vmem %s0, %s121
      %p123 = pneg %p34
      %p124 = pneg %p31
      %p125 = pneg %p55
      %p126 = pneg %p52
      %p127 = pneg %p81
      %p128 = pneg %p78
      %p129 = scmp.lt.s32.totalorder %s13, 1
      %s130 = scalar_select %p129, %s13, 1
      %s131 = smul.addr %s130, 2
      %s132 = smul.addr %s131, 4
      %s133 = scalar_lea.vmem %s2, %s132
      %p134 = scmp.lt.s32.totalorder %s13, 1
      %s135 = scalar_select %p134, %s13, 1
      %s136 = smul.addr %s135, 2
      %s137 = smul.addr %s136, 4
      %s138 = scalar_lea.vmem %s0, %s137
      %p139 = scmp.lt.s32.totalorder %s13, 1
      %s140 = scalar_select %p139, %s13, 1
      %s141 = smul.addr %s140, 2
      %s142 = smul.addr %s141, 4
      %s143 = scalar_lea.vmem %s2, %s142
      %144 = vst [vmem:[#allocation2] sm:$0xf] 0.0
      %145 = vst [vmem:[#allocation2 + $0xc] sm:$0xf] 0.0
      %v146 = vlaneseq
      %v147 = vand.u32 %v146, 127
      %v148 = vadd.s32 %v147, 128
      %v149 = vcvt.s32.f32 %v147
      %v150 = vcvt.s32.f32 %v148
      %v151 = vrcp.pop 16.0
      %v152 = vmul.f32 %v149, %v151
      %v153 = vmul.f32 %v150, %v151
      %v154 = vfloor.f32 %v152
      %v155 = vfloor.f32 %v153
      %v156 = vmul.f32 %v154, 16.0
      %v157 = vmul.f32 %v155, 16.0
      %v158 = vsub.f32 %v149, %v156
      %v159 = vsub.f32 %v150, %v157
      %v160 = vld [vmem:[%s138] sm:$0xff]
      %161 = vst [vmem:[#allocation2 + $0x4] sm:$0xff] %v160
      %v162 = vld [vmem:[#allocation2] sm:$0xff]
      %v163 = vld [vmem:[#allocation2 + $0x8] sm:$0xf]
      %vm164 = vcmp.ge.f32.partialorder %v158, 1.0
      %vm165 = vcmp.ge.f32.partialorder %v159, 1.0
      %v166 = vsel %vm164, 1, 0
      %v167 = vsel %vm165, 1, 0
      %vm168 = vcmp.eq.s32.totalorder %v166, 1
      %vm169 = vcmp.eq.s32.totalorder %v167, 1
      %v172 = vcombine.high %v162, %v162
      %173 = vrot.lane.b32.xlu0 %v162, 17
      %v174 = vpop.permute.xlu0 %173
      %175 = vrot.lane.b32.xlu0 %v172, 17
      %v176 = vpop.permute.xlu0 %175
      %177 = vrot.lane.b32.xlu0 %v163, 17
      %v178 = vpop.permute.xlu0 %177
      %vm179 = vcmask 138240
      %v180 = vsel %vm179, %v174, %v176
      %v181 = vsel %vm179, %v176, %v178
      %v184 = vsel %vm168, %v180, 0.0
      %v185 = vsel %vm169, %v181, 0.0
      %186 = vst [vmem:[#allocation3] sm:$0xf] %v184
      %187 = vst [vmem:[#allocation3 + $0x8] sm:$0xf] %v185
      %v188 = vld [vmem:[#allocation2] sm:$0xff]
      %v189 = vld [vmem:[#allocation2 + $0x8] sm:$0xf]
      %v192 = vcombine.low %v188, %v188
      %v193 = vcombine.low %v189, %v189
      %194 = vrot.lane.b32.xlu0 %v192, 16
      %v195 = vpop.permute.xlu0 %194
      %196 = vrot.lane.b32.xlu0 %v188, 16
      %v197 = vpop.permute.xlu0 %196
      %198 = vrot.lane.b32.xlu0 %v193, 16
      %v199 = vpop.permute.xlu0 %198
      %vm200 = vcmask 130048
      %v201 = vsel %vm200, %v195, %v197
      %v202 = vsel %vm200, %v197, %v199
      %205 = vst [vmem:[#allocation3] sm:$0xf0] %v201
      %206 = vst [vmem:[#allocation3 + $0x8] sm:$0xf0] %v202
      %v207 = vld [vmem:[#allocation2] sm:$0xff]
      %v208 = vld [vmem:[#allocation2 + $0x8] sm:$0xf]
      %vm209 = vcmp.lt.f32.partialorder %v158, 15.0
      %vm210 = vcmp.lt.f32.partialorder %v159, 15.0
      %v211 = vsel %vm209, 1, 0
      %v212 = vsel %vm210, 1, 0
      %vm213 = vcmp.eq.s32.totalorder %v211, 1
      %vm214 = vcmp.eq.s32.totalorder %v212, 1
      %v217 = vcombine.high %v207, %v207
      %218 = vrot.lane.b32.xlu0 %v207, 15
      %v219 = vpop.permute.xlu0 %218
      %220 = vrot.lane.b32.xlu0 %v217, 15
      %v221 = vpop.permute.xlu0 %220
      %222 = vrot.lane.b32.xlu0 %v208, 15
      %v223 = vpop.permute.xlu0 %222
      %vm224 = vcmask 121856
      %v225 = vsel %vm224, %v219, %v221
      %v226 = vsel %vm224, %v221, %v223
      %v229 = vsel %vm213, %v225, 0.0
      %v230 = vsel %vm214, %v226, 0.0
      %231 = vst [vmem:[#allocation3 + $0x10] sm:$0xf] %v229
      %232 = vst [vmem:[#allocation3 + $0x18] sm:$0xf] %v230
      %v233 = vld [vmem:[#allocation2] sm:$0xff]
      %v234 = vld [vmem:[#allocation2 + $0x8] sm:$0xf]
      %v237 = vcombine.high %v233, %v233
      %238 = vrot.lane.b32.xlu0 %v233, 1
      %v239 = vpop.permute.xlu0 %238
      %240 = vrot.lane.b32.xlu0 %v237, 1
      %v241 = vpop.permute.xlu0 %240
      %242 = vrot.lane.b32.xlu0 %v234, 1
      %v243 = vpop.permute.xlu0 %242
      %vm244 = vcmask 7168
      %v245 = vsel %vm244, %v239, %v241
      %v246 = vsel %vm244, %v241, %v243
      %v249 = vsel %vm168, %v245, 0.0
      %v250 = vsel %vm169, %v246, 0.0
      %v253 = vrot.slane %v249, 4
      %v254 = vrot.slane %v250, 4
      %257 = vst [vmem:[#allocation3 + $0x10] sm:$0xf0] %v253
      %258 = vst [vmem:[#allocation3 + $0x18] sm:$0xf0] %v254
      %v259 = vld [vmem:[#allocation2 + $0x4] sm:$0xff]
      %v261 = vcombine.high %v259, %v259
      %263 = vst [vmem:[#allocation3 + $0x20] sm:$0xf] %v259
      %264 = vst [vmem:[#allocation3 + $0x28] sm:$0xf] %v261
      %v265 = vld [vmem:[#allocation2 + $0x4] sm:$0xff]
      %v266 = vld [vmem:[#allocation2 + $0xc] sm:$0xf]
      %v269 = vcombine.high %v265, %v265
      %270 = vrot.lane.b32.xlu0 %v265, 127
      %v271 = vpop.permute.xlu0 %270
      %272 = vrot.lane.b32.xlu0 %v269, 127
      %v273 = vpop.permute.xlu0 %272
      %274 = vrot.lane.b32.xlu0 %v266, 127
      %v275 = vpop.permute.xlu0 %274
      %vm276 = vcmask 1039360
      %v277 = vsel %vm276, %v271, %v273
      %v278 = vsel %vm276, %v273, %v275
      %v281 = vsel %vm213, %v277, 0.0
      %v282 = vsel %vm214, %v278, 0.0
      %v285 = vrot.slane %v281, 4
      %v286 = vrot.slane %v282, 4
      %289 = vst [vmem:[#allocation3 + $0x20] sm:$0xf0] %v285
      %290 = vst [vmem:[#allocation3 + $0x28] sm:$0xf0] %v286
      %v291 = vld [vmem:[#allocation2 + $0x4] sm:$0xff]
      %v292 = vld [vmem:[#allocation2 + $0xc] sm:$0xf]
      %v295 = vcombine.high %v291, %v291
      %296 = vrot.lane.b32.xlu0 %v291, 113
      %v297 = vpop.permute.xlu0 %296
      %298 = vrot.lane.b32.xlu0 %v295, 113
      %v299 = vpop.permute.xlu0 %298
      %300 = vrot.lane.b32.xlu0 %v292, 113
      %v301 = vpop.permute.xlu0 %300
      %vm302 = vcmask 924672
      %v303 = vsel %vm302, %v297, %v299
      %v304 = vsel %vm302, %v299, %v301
      %v307 = vsel %vm168, %v303, 0.0
      %v308 = vsel %vm169, %v304, 0.0
      %309 = vst [vmem:[#allocation3 + $0x30] sm:$0xf] %v307
      %310 = vst [vmem:[#allocation3 + $0x38] sm:$0xf] %v308
      %v311 = vld [vmem:[#allocation2 + $0x4] sm:$0xff]
      %v312 = vld [vmem:[#allocation2 + $0xc] sm:$0xf]
      %v315 = vcombine.low %v311, %v311
      %v316 = vcombine.low %v312, %v312
      %317 = vrot.lane.b32.xlu0 %v315, 112
      %v318 = vpop.permute.xlu0 %317
      %319 = vrot.lane.b32.xlu0 %v311, 112
      %v320 = vpop.permute.xlu0 %319
      %321 = vrot.lane.b32.xlu0 %v316, 112
      %v322 = vpop.permute.xlu0 %321
      %vm323 = vcmask 916480
      %v324 = vsel %vm323, %v318, %v320
      %v325 = vsel %vm323, %v320, %v322
      %328 = vst [vmem:[#allocation3 + $0x30] sm:$0xf0] %v324
      %329 = vst [vmem:[#allocation3 + $0x38] sm:$0xf0] %v325
      %v330 = vld [vmem:[#allocation2 + $0x4] sm:$0xff]
      %v331 = vld [vmem:[#allocation2 + $0xc] sm:$0xf]
      %v334 = vcombine.high %v330, %v330
      %335 = vrot.lane.b32.xlu0 %v330, 111
      %v336 = vpop.permute.xlu0 %335
      %337 = vrot.lane.b32.xlu0 %v334, 111
      %v338 = vpop.permute.xlu0 %337
      %339 = vrot.lane.b32.xlu0 %v331, 111
      %v340 = vpop.permute.xlu0 %339
      %vm341 = vcmask 908288
      %v342 = vsel %vm341, %v336, %v338
      %v343 = vsel %vm341, %v338, %v340
      %v346 = vsel %vm213, %v342, 0.0
      %v347 = vsel %vm214, %v343, 0.0
      %348 = vst [vmem:[#allocation3 + $0x40] sm:$0xf] %v346
      %349 = vst [vmem:[#allocation3 + $0x48] sm:$0xf] %v347
      %v350 = vld [vmem:[%s1] sm:$0xf]
      %v351 = vld [vmem:[#allocation3] sm:$0xff]
      %v352 = vld [vmem:[#allocation3 + $0x8] sm:$0xff]
      %v353 = vld [vmem:[#allocation3 + $0x10] sm:$0xff]
      %v354 = vld [vmem:[#allocation3 + $0x18] sm:$0xff]
      %v355 = vld [vmem:[#allocation3 + $0x20] sm:$0xff]
      %v356 = vld [vmem:[#allocation3 + $0x28] sm:$0xff]
      %v357 = vld [vmem:[#allocation3 + $0x30] sm:$0xff]
      %v358 = vld [vmem:[#allocation3 + $0x38] sm:$0xff]
      %v359 = vld [vmem:[#allocation3 + $0x40] sm:$0xf]
      %v360 = vld [vmem:[#allocation3 + $0x48] sm:$0xf]
      %361 = vst [vmem:[#allocation2 + $0x4] sm:$0xff] %v160
      %v362 = vld [vmem:[#allocation2] sm:$0xff]
      %v363 = vld [vmem:[#allocation2 + $0x8] sm:$0xf]
      %v366 = vcombine.high %v362, %v362
      %367 = vrot.lane.b32.xlu0 %v362, 1
      %v368 = vpop.permute.xlu0 %367
      %369 = vrot.lane.b32.xlu0 %v366, 1
      %v370 = vpop.permute.xlu0 %369
      %371 = vrot.lane.b32.xlu0 %v363, 1
      %v372 = vpop.permute.xlu0 %371
      %v373 = vsel %vm244, %v368, %v370
      %v374 = vsel %vm244, %v370, %v372
      %v377 = vsel %vm168, %v373, 0.0
      %v378 = vsel %vm169, %v374, 0.0
      %379 = vst [vmem:[#allocation3] sm:$0xf] %v377
      %380 = vst [vmem:[#allocation3 + $0x8] sm:$0xf] %v378
      %v381 = vld [vmem:[#allocation2 + $0x4] sm:$0xff]
      %v383 = vcombine.low %v381, %v381
      %385 = vst [vmem:[#allocation3] sm:$0xf0] %v383
      %386 = vst [vmem:[#allocation3 + $0x8] sm:$0xf0] %v381
      %v387 = vld [vmem:[#allocation2 + $0x4] sm:$0xff]
      %v388 = vld [vmem:[#allocation2 + $0xc] sm:$0xf]
      %v391 = vcombine.high %v387, %v387
      %392 = vrot.lane.b32.xlu0 %v387, 127
      %v393 = vpop.permute.xlu0 %392
      %394 = vrot.lane.b32.xlu0 %v391, 127
      %v395 = vpop.permute.xlu0 %394
      %396 = vrot.lane.b32.xlu0 %v388, 127
      %v397 = vpop.permute.xlu0 %396
      %v398 = vsel %vm276, %v393, %v395
      %v399 = vsel %vm276, %v395, %v397
      %v402 = vsel %vm213, %v398, 0.0
      %v403 = vsel %vm214, %v399, 0.0
      %404 = vst [vmem:[#allocation3 + $0x10] sm:$0xf] %v402
      %405 = vst [vmem:[#allocation3 + $0x18] sm:$0xf] %v403
      %s406 = scalar_lea.vmem %s1, 4
      %v407 = vld [vmem:[%s406] sm:$0xf]
      %v408 = vld [vmem:[#allocation3] sm:$0xff]
      %v409 = vld [vmem:[#allocation3 + $0x8] sm:$0xff]
      %v410 = vld [vmem:[#allocation3 + $0x10] sm:$0xff]
      %v411 = vld [vmem:[#allocation3 + $0x18] sm:$0xff]
      %v412 = vld [vmem:[#allocation3 + $0x20] sm:$0xff]
      %v413 = vld [vmem:[#allocation3 + $0x28] sm:$0xff]
      %v414 = vld [vmem:[#allocation3 + $0x30] sm:$0xff]
      %v415 = vld [vmem:[#allocation3 + $0x38] sm:$0xff]
      %v416 = vld [vmem:[#allocation3 + $0x40] sm:$0xf]
      %v417 = vld [vmem:[#allocation3 + $0x48] sm:$0xf]
      %vm418 = vcmask 293888
      %v420 = vsel %vm418, %v407, 0
      %vm422 = vcmask 1043456
      %v424 = vsel %vm422, %v416, 0
      %v427 = vsel %vm422, %v417, 0
      %429 = vmatprep.subr.mxu0 %v409
      %430 = vmatpush1.msra.mxu0 %v408
      %431 = vmatprep.subr.mxu0 %v411
      %432 = vmatpush1.msra.mxu0 %v410
      %433 = vmatprep.subr.mxu0 %v413
      %434 = vmatpush1.msra.mxu0 %v412
      %435 = vmatprep.subr.mxu0 %v415
      %436 = vmatpush1.msra.mxu0 %v414
      %437 = vmatprep.subr.mxu0 %v427
      %438 = vmatpush1.msra.mxu0 %v424
      %439 = vmatprep.subr.mxu0 0.0
      %440 = vmatpush1.msra.mxu0 0.0
      %441 = vmatprep.subr.mxu0 0.0
      %442 = vmatpush1.msra.mxu0 0.0
      %443 = vmatprep.subr.mxu0 0.0
      %444 = vmatpush1.msra.mxu0 0.0
      %445 = vmatprep.subr.mxu0 0.0
      %446 = vmatpush1.msra.mxu0 0.0
      %447 = vmatprep.subr.mxu0 0.0
      %448 = vmatpush1.msra.mxu0 0.0
      %449 = vmatprep.subr.mxu0 0.0
      %450 = vmatpush1.msra.mxu0 0.0
      %451 = vmatprep.subr.mxu0 0.0
      %452 = vmatpush1.msra.mxu0 0.0
      %453 = vmatprep.subr.mxu0 0.0
      %454 = vmatpush1.msra.mxu0 0.0
      %455 = vmatprep.subr.mxu0 0.0
      %456 = vmatpush1.msra.mxu0 0.0
      %457 = vmatprep.subr.mxu0 0.0
      %458 = vmatpush1.msra.mxu0 0.0
      %459 = vmatprep.subr.mxu0 0.0
      %460 = vmatpush1.msra.mxu0 0.0
      %461 = vmatprep.subr.mxu0 0.0
      %462 = vmatpush1.msra.mxu0 0.0
      %463 = vmatprep.subr.mxu0 0.0
      %464 = vmatpush1.msra.mxu0 0.0
      %465 = vmatprep.subr.mxu0 0.0
      %466 = vmatpush1.msra.mxu0 0.0
      %467 = vmatprep.subr.mxu0 0.0
      %468 = vmatpush1.msra.mxu0 0.0
      %469 = vmatprep.subr.mxu0 0.0
      %470 = vmatpush1.msra.mxu0 0.0
      %471 = vmatprep.subr.mxu0 0.0
      %472 = vmatpush1.msra.mxu0 0.0
      %473 = vmatprep.subr.mxu0 0.0
      %474 = vmatpush1.msra.mxu0 0.0
      %475 = vmatprep.subr.mxu0 0.0
      %476 = vmatpush1.msra.mxu0 0.0
      %477 = vmatprep.subr.mxu0 0.0
      %478 = vmatpush1.msra.mxu0 0.0
      %479 = vmatprep.subr.mxu0 0.0
      %480 = vmatpush1.msra.mxu0 0.0
      %481 = vmatprep.subr.mxu0 0.0
      %482 = vmatpush1.msra.mxu0 0.0
      %483 = vmatprep.subr.mxu0 0.0
      %484 = vmatpush1.msra.mxu0 0.0
      %485 = vmatprep.subr.mxu0 0.0
      %486 = vmatpush1.msra.mxu0 0.0
      %487 = vmatprep.subr.mxu0 0.0
      %488 = vmatpush1.msra.mxu0 0.0
      %489 = vmatprep.subr.mxu0 0.0
      %490 = vmatpush1.msra.mxu0 0.0
      %491 = vmatprep.subr.mxu0 0.0
      %492 = vmatpush1.msra.mxu0 0.0
      %493 = vmatprep.mubr.f32.mxu0 0.0
      %494 = vmatmul.mubr.f32.gmra.mrb[0].mxu0 %v420
      %v495 = vpop.f32.mrb[0].mxu0
      %v496 = vadd.f32 0.0, %v495
      %v497 = vpop.f32.mrb[0].mxu0
      %v498 = vadd.f32 0.0, %v497
      %499 = vdwg.mxu0
      %v502 = vcombine.low %v496, %v498
      %504 = vst [vmem:[#allocation2 + $0x4] sm:$0xff] %v502
      %v505 = vld [vmem:[#allocation2] sm:$0xff]
      %v506 = vld [vmem:[#allocation2 + $0x8] sm:$0xf]
      %v509 = vcombine.high %v505, %v505
      %510 = vrot.lane.b32.xlu0 %v505, 16
      %v511 = vpop.permute.xlu0 %510
      %512 = vrot.lane.b32.xlu0 %v509, 16
      %v513 = vpop.permute.xlu0 %512
      %514 = vrot.lane.b32.xlu0 %v506, 16
      %v515 = vpop.permute.xlu0 %514
      %v516 = vsel %vm200, %v511, %v513
      %v517 = vsel %vm200, %v513, %v515
      %520 = vst [vmem:[#allocation3] sm:$0xf] %v516
      %521 = vst [vmem:[#allocation3 + $0x8] sm:$0xf] %v517
      %v522 = vld [vmem:[#allocation2 + $0x4] sm:$0xff]
      %v524 = vcombine.low %v522, %v522
      %526 = vst [vmem:[#allocation3] sm:$0xf0] %v524
      %527 = vst [vmem:[#allocation3 + $0x8] sm:$0xf0] %v522
      %v528 = vld [vmem:[#allocation2 + $0x4] sm:$0xff]
      %v529 = vld [vmem:[#allocation2 + $0xc] sm:$0xf]
      %v532 = vcombine.high %v528, %v528
      %533 = vrot.lane.b32.xlu0 %v528, 112
      %v534 = vpop.permute.xlu0 %533
      %535 = vrot.lane.b32.xlu0 %v532, 112
      %v536 = vpop.permute.xlu0 %535
      %537 = vrot.lane.b32.xlu0 %v529, 112
      %v538 = vpop.permute.xlu0 %537
      %v539 = vsel %vm323, %v534, %v536
      %v540 = vsel %vm323, %v536, %v538
      %543 = vst [vmem:[#allocation3 + $0x10] sm:$0xf] %v539
      %544 = vst [vmem:[#allocation3 + $0x18] sm:$0xf] %v540
      %s545 = scalar_lea.vmem %s1, 8
      %v546 = vld [vmem:[%s545] sm:$0xf]
      %v547 = vld [vmem:[#allocation3] sm:$0xff]
      %v548 = vld [vmem:[#allocation3 + $0x8] sm:$0xff]
      %v549 = vld [vmem:[#allocation3 + $0x10] sm:$0xff]
      %v550 = vld [vmem:[#allocation3 + $0x18] sm:$0xff]
      %v551 = vld [vmem:[#allocation3 + $0x20] sm:$0xff]
      %v552 = vld [vmem:[#allocation3 + $0x28] sm:$0xff]
      %v553 = vld [vmem:[#allocation3 + $0x30] sm:$0xff]
      %v554 = vld [vmem:[#allocation3 + $0x38] sm:$0xff]
      %v555 = vld [vmem:[#allocation3 + $0x40] sm:$0xf]
      %v556 = vld [vmem:[#allocation3 + $0x48] sm:$0xf]
      %v558 = vsel %vm418, %v546, 0
      %v561 = vsel %vm422, %v555, 0
      %v564 = vsel %vm422, %v556, 0
      %566 = vmatprep.subr.mxu0 %v548
      %567 = vmatpush1.msra.mxu0 %v547
      %568 = vmatprep.subr.mxu0 %v550
      %569 = vmatpush1.msra.mxu0 %v549
      %570 = vmatprep.subr.mxu0 %v552
      %571 = vmatpush1.msra.mxu0 %v551
      %572 = vmatprep.subr.mxu0 %v554
      %573 = vmatpush1.msra.mxu0 %v553
      %574 = vmatprep.subr.mxu0 %v564
      %575 = vmatpush1.msra.mxu0 %v561
      %576 = vmatprep.subr.mxu0 0.0
      %577 = vmatpush1.msra.mxu0 0.0
      %578 = vmatprep.subr.mxu0 0.0
      %579 = vmatpush1.msra.mxu0 0.0
      %580 = vmatprep.subr.mxu0 0.0
      %581 = vmatpush1.msra.mxu0 0.0
      %582 = vmatprep.subr.mxu0 0.0
      %583 = vmatpush1.msra.mxu0 0.0
      %584 = vmatprep.subr.mxu0 0.0
      %585 = vmatpush1.msra.mxu0 0.0
      %586 = vmatprep.subr.mxu0 0.0
      %587 = vmatpush1.msra.mxu0 0.0
      %588 = vmatprep.subr.mxu0 0.0
      %589 = vmatpush1.msra.mxu0 0.0
      %590 = vmatprep.subr.mxu0 0.0
      %591 = vmatpush1.msra.mxu0 0.0
      %592 = vmatprep.subr.mxu0 0.0
      %593 = vmatpush1.msra.mxu0 0.0
      %594 = vmatprep.subr.mxu0 0.0
      %595 = vmatpush1.msra.mxu0 0.0
      %596 = vmatprep.subr.mxu0 0.0
      %597 = vmatpush1.msra.mxu0 0.0
      %598 = vmatprep.subr.mxu0 0.0
      %599 = vmatpush1.msra.mxu0 0.0
      %600 = vmatprep.subr.mxu0 0.0
      %601 = vmatpush1.msra.mxu0 0.0
      %602 = vmatprep.subr.mxu0 0.0
      %603 = vmatpush1.msra.mxu0 0.0
      %604 = vmatprep.subr.mxu0 0.0
      %605 = vmatpush1.msra.mxu0 0.0
      %606 = vmatprep.subr.mxu0 0.0
      %607 = vmatpush1.msra.mxu0 0.0
      %608 = vmatprep.subr.mxu0 0.0
      %609 = vmatpush1.msra.mxu0 0.0
      %610 = vmatprep.subr.mxu0 0.0
      %611 = vmatpush1.msra.mxu0 0.0
      %612 = vmatprep.subr.mxu0 0.0
      %613 = vmatpush1.msra.mxu0 0.0
      %614 = vmatprep.subr.mxu0 0.0
      %615 = vmatpush1.msra.mxu0 0.0
      %616 = vmatprep.subr.mxu0 0.0
      %617 = vmatpush1.msra.mxu0 0.0
      %618 = vmatprep.subr.mxu0 0.0
      %619 = vmatpush1.msra.mxu0 0.0
      %620 = vmatprep.subr.mxu0 0.0
      %621 = vmatpush1.msra.mxu0 0.0
      %622 = vmatprep.subr.mxu0 0.0
      %623 = vmatpush1.msra.mxu0 0.0
      %624 = vmatprep.subr.mxu0 0.0
      %625 = vmatpush1.msra.mxu0 0.0
      %626 = vmatprep.subr.mxu0 0.0
      %627 = vmatpush1.msra.mxu0 0.0
      %628 = vmatprep.subr.mxu0 0.0
      %629 = vmatpush1.msra.mxu0 0.0
      %630 = vmatprep.mubr.f32.mxu0 0.0
      %631 = vmatmul.mubr.f32.gmra.mrb[0].mxu0 %v558
      %v632 = vpop.f32.mrb[0].mxu0
      %v633 = vadd.f32 0.0, %v632
      %v634 = vpop.f32.mrb[0].mxu0
      %v635 = vadd.f32 0.0, %v634
      %636 = vdwg.mxu0
      %v639 = vcombine.low %v633, %v635
      %641 = vst [vmem:[#allocation2 + $0x4] sm:$0xff] %v639
      %v642 = vld [vmem:[#allocation2] sm:$0xff]
      %v643 = vld [vmem:[#allocation2 + $0x8] sm:$0xf]
      %vm644 = vcmp.ge.f32.partialorder %v158, 3.0
      %vm645 = vcmp.ge.f32.partialorder %v159, 3.0
      %v646 = vsel %vm644, 1, 0
      %v647 = vsel %vm645, 1, 0
      %vm648 = vcmp.eq.s32.totalorder %v646, 1
      %vm649 = vcmp.eq.s32.totalorder %v647, 1
      %v652 = vcombine.high %v642, %v642
      %653 = vrot.lane.b32.xlu0 %v642, 51
      %v654 = vpop.permute.xlu0 %653
      %655 = vrot.lane.b32.xlu0 %v652, 51
      %v656 = vpop.permute.xlu0 %655
      %657 = vrot.lane.b32.xlu0 %v643, 51
      %v658 = vpop.permute.xlu0 %657
      %vm659 = vcmask 416768
      %v660 = vsel %vm659, %v654, %v656
      %v661 = vsel %vm659, %v656, %v658
      %v664 = vsel %vm648, %v660, 0.0
      %v665 = vsel %vm649, %v661, 0.0
      %666 = vst [vmem:[#allocation3] sm:$0xf] %v664
      %667 = vst [vmem:[#allocation3 + $0x8] sm:$0xf] %v665
      %v668 = vld [vmem:[#allocation2] sm:$0xff]
      %v669 = vld [vmem:[#allocation2 + $0x8] sm:$0xf]
      %v672 = vcombine.low %v668, %v668
      %v673 = vcombine.low %v669, %v669
      %674 = vrot.lane.b32.xlu0 %v672, 48
      %v675 = vpop.permute.xlu0 %674
      %676 = vrot.lane.b32.xlu0 %v668, 48
      %v677 = vpop.permute.xlu0 %676
      %678 = vrot.lane.b32.xlu0 %v673, 48
      %v679 = vpop.permute.xlu0 %678
      %vm680 = vcmask 392192
      %v681 = vsel %vm680, %v675, %v677
      %v682 = vsel %vm680, %v677, %v679
      %685 = vst [vmem:[#allocation3] sm:$0xf0] %v681
      %686 = vst [vmem:[#allocation3 + $0x8] sm:$0xf0] %v682
      %v687 = vld [vmem:[#allocation2] sm:$0xff]
      %v688 = vld [vmem:[#allocation2 + $0x8] sm:$0xf]
      %vm689 = vcmp.lt.f32.partialorder %v158, 13.0
      %vm690 = vcmp.lt.f32.partialorder %v159, 13.0
      %v691 = vsel %vm689, 1, 0
      %v692 = vsel %vm690, 1, 0
      %vm693 = vcmp.eq.s32.totalorder %v691, 1
      %vm694 = vcmp.eq.s32.totalorder %v692, 1
      %v697 = vcombine.high %v687, %v687
      %698 = vrot.lane.b32.xlu0 %v687, 45
      %v699 = vpop.permute.xlu0 %698
      %700 = vrot.lane.b32.xlu0 %v697, 45
      %v701 = vpop.permute.xlu0 %700
      %702 = vrot.lane.b32.xlu0 %v688, 45
      %v703 = vpop.permute.xlu0 %702
      %vm704 = vcmask 367616
      %v705 = vsel %vm704, %v699, %v701
      %v706 = vsel %vm704, %v701, %v703
      %v709 = vsel %vm693, %v705, 0.0
      %v710 = vsel %vm694, %v706, 0.0
      %711 = vst [vmem:[#allocation3 + $0x10] sm:$0xf] %v709
      %712 = vst [vmem:[#allocation3 + $0x18] sm:$0xf] %v710
      %v713 = vld [vmem:[#allocation2] sm:$0xff]
      %v714 = vld [vmem:[#allocation2 + $0x8] sm:$0xf]
      %v717 = vcombine.high %v713, %v713
      %718 = vrot.lane.b32.xlu0 %v713, 3
      %v719 = vpop.permute.xlu0 %718
      %720 = vrot.lane.b32.xlu0 %v717, 3
      %v721 = vpop.permute.xlu0 %720
      %722 = vrot.lane.b32.xlu0 %v714, 3
      %v723 = vpop.permute.xlu0 %722
      %vm724 = vcmask 23552
      %v725 = vsel %vm724, %v719, %v721
      %v726 = vsel %vm724, %v721, %v723
      %v729 = vsel %vm648, %v725, 0.0
      %v730 = vsel %vm649, %v726, 0.0
      %v733 = vrot.slane %v729, 4
      %v734 = vrot.slane %v730, 4
      %737 = vst [vmem:[#allocation3 + $0x10] sm:$0xf0] %v733
      %738 = vst [vmem:[#allocation3 + $0x18] sm:$0xf0] %v734
      %v739 = vld [vmem:[#allocation2 + $0x4] sm:$0xff]
      %v741 = vcombine.high %v739, %v739
      %743 = vst [vmem:[#allocation3 + $0x20] sm:$0xf] %v739
      %744 = vst [vmem:[#allocation3 + $0x28] sm:$0xf] %v741
      %v745 = vld [vmem:[#allocation2 + $0x4] sm:$0xff]
      %v746 = vld [vmem:[#allocation2 + $0xc] sm:$0xf]
      %v749 = vcombine.high %v745, %v745
      %750 = vrot.lane.b32.xlu0 %v745, 125
      %v751 = vpop.permute.xlu0 %750
      %752 = vrot.lane.b32.xlu0 %v749, 125
      %v753 = vpop.permute.xlu0 %752
      %754 = vrot.lane.b32.xlu0 %v746, 125
      %v755 = vpop.permute.xlu0 %754
      %vm756 = vcmask 1022976
      %v757 = vsel %vm756, %v751, %v753
      %v758 = vsel %vm756, %v753, %v755
      %v761 = vsel %vm693, %v757, 0.0
      %v762 = vsel %vm694, %v758, 0.0
      %v765 = vrot.slane %v761, 4
      %v766 = vrot.slane %v762, 4
      %769 = vst [vmem:[#allocation3 + $0x20] sm:$0xf0] %v765
      %770 = vst [vmem:[#allocation3 + $0x28] sm:$0xf0] %v766
      %v771 = vld [vmem:[#allocation2 + $0x4] sm:$0xff]
      %v772 = vld [vmem:[#allocation2 + $0xc] sm:$0xf]
      %v775 = vcombine.high %v771, %v771
      %776 = vrot.lane.b32.xlu0 %v771, 83
      %v777 = vpop.permute.xlu0 %776
      %778 = vrot.lane.b32.xlu0 %v775, 83
      %v779 = vpop.permute.xlu0 %778
      %780 = vrot.lane.b32.xlu0 %v772, 83
      %v781 = vpop.permute.xlu0 %780
      %vm782 = vcmask 678912
      %v783 = vsel %vm782, %v777, %v779
      %v784 = vsel %vm782, %v779, %v781
      %v787 = vsel %vm648, %v783, 0.0
      %v788 = vsel %vm649, %v784, 0.0
      %789 = vst [vmem:[#allocation3 + $0x30] sm:$0xf] %v787
      %790 = vst [vmem:[#allocation3 + $0x38] sm:$0xf] %v788
      %v791 = vld [vmem:[#allocation2 + $0x4] sm:$0xff]
      %v792 = vld [vmem:[#allocation2 + $0xc] sm:$0xf]
      %v795 = vcombine.low %v791, %v791
      %v796 = vcombine.low %v792, %v792
      %797 = vrot.lane.b32.xlu0 %v795, 80
      %v798 = vpop.permute.xlu0 %797
      %799 = vrot.lane.b32.xlu0 %v791, 80
      %v800 = vpop.permute.xlu0 %799
      %801 = vrot.lane.b32.xlu0 %v796, 80
      %v802 = vpop.permute.xlu0 %801
      %vm803 = vcmask 654336
      %v804 = vsel %vm803, %v798, %v800
      %v805 = vsel %vm803, %v800, %v802
      %808 = vst [vmem:[#allocation3 + $0x30] sm:$0xf0] %v804
      %809 = vst [vmem:[#allocation3 + $0x38] sm:$0xf0] %v805
      %v810 = vld [vmem:[#allocation2 + $0x4] sm:$0xff]
      %v811 = vld [vmem:[#allocation2 + $0xc] sm:$0xf]
      %v814 = vcombine.high %v810, %v810
      %815 = vrot.lane.b32.xlu0 %v810, 77
      %v816 = vpop.permute.xlu0 %815
      %817 = vrot.lane.b32.xlu0 %v814, 77
      %v818 = vpop.permute.xlu0 %817
      %819 = vrot.lane.b32.xlu0 %v811, 77
      %v820 = vpop.permute.xlu0 %819
      %vm821 = vcmask 629760
      %v822 = vsel %vm821, %v816, %v818
      %v823 = vsel %vm821, %v818, %v820
      %v826 = vsel %vm693, %v822, 0.0
      %v827 = vsel %vm694, %v823, 0.0
      %828 = vst [vmem:[#allocation3 + $0x40] sm:$0xf] %v826
      %829 = vst [vmem:[#allocation3 + $0x48] sm:$0xf] %v827
      %s830 = scalar_lea.vmem %s1, 12
      %v831 = vld [vmem:[%s830] sm:$0xf]
      %v832 = vld [vmem:[#allocation3] sm:$0xff]
      %v833 = vld [vmem:[#allocation3 + $0x8] sm:$0xff]
      %v834 = vld [vmem:[#allocation3 + $0x10] sm:$0xff]
      %v835 = vld [vmem:[#allocation3 + $0x18] sm:$0xff]
      %v836 = vld [vmem:[#allocation3 + $0x20] sm:$0xff]
      %v837 = vld [vmem:[#allocation3 + $0x28] sm:$0xff]
      %v838 = vld [vmem:[#allocation3 + $0x30] sm:$0xff]
      %v839 = vld [vmem:[#allocation3 + $0x38] sm:$0xff]
      %v840 = vld [vmem:[#allocation3 + $0x40] sm:$0xf]
      %v841 = vld [vmem:[#allocation3 + $0x48] sm:$0xf]
      %v843 = vsel %vm418, %v831, 0
      %v846 = vsel %vm422, %v840, 0
      %v849 = vsel %vm422, %v841, 0
      %851 = vmatprep.subr.mxu0 %v833
      %852 = vmatpush1.msra.mxu0 %v832
      %853 = vmatprep.subr.mxu0 %v835
      %854 = vmatpush1.msra.mxu0 %v834
      %855 = vmatprep.subr.mxu0 %v837
      %856 = vmatpush1.msra.mxu0 %v836
      %857 = vmatprep.subr.mxu0 %v839
      %858 = vmatpush1.msra.mxu0 %v838
      %859 = vmatprep.subr.mxu0 %v849
      %860 = vmatpush1.msra.mxu0 %v846
      %861 = vmatprep.subr.mxu0 0.0
      %862 = vmatpush1.msra.mxu0 0.0
      %863 = vmatprep.subr.mxu0 0.0
      %864 = vmatpush1.msra.mxu0 0.0
      %865 = vmatprep.subr.mxu0 0.0
      %866 = vmatpush1.msra.mxu0 0.0
      %867 = vmatprep.subr.mxu0 0.0
      %868 = vmatpush1.msra.mxu0 0.0
      %869 = vmatprep.subr.mxu0 0.0
      %870 = vmatpush1.msra.mxu0 0.0
      %871 = vmatprep.subr.mxu0 0.0
      %872 = vmatpush1.msra.mxu0 0.0
      %873 = vmatprep.subr.mxu0 0.0
      %874 = vmatpush1.msra.mxu0 0.0
      %875 = vmatprep.subr.mxu0 0.0
      %876 = vmatpush1.msra.mxu0 0.0
      %877 = vmatprep.subr.mxu0 0.0
      %878 = vmatpush1.msra.mxu0 0.0
      %879 = vmatprep.subr.mxu0 0.0
      %880 = vmatpush1.msra.mxu0 0.0
      %881 = vmatprep.subr.mxu0 0.0
      %882 = vmatpush1.msra.mxu0 0.0
      %883 = vmatprep.subr.mxu0 0.0
      %884 = vmatpush1.msra.mxu0 0.0
      %885 = vmatprep.subr.mxu0 0.0
      %886 = vmatpush1.msra.mxu0 0.0
      %887 = vmatprep.subr.mxu0 0.0
      %888 = vmatpush1.msra.mxu0 0.0
      %889 = vmatprep.subr.mxu0 0.0
      %890 = vmatpush1.msra.mxu0 0.0
      %891 = vmatprep.subr.mxu0 0.0
      %892 = vmatpush1.msra.mxu0 0.0
      %893 = vmatprep.subr.mxu0 0.0
      %894 = vmatpush1.msra.mxu0 0.0
      %895 = vmatprep.subr.mxu0 0.0
      %896 = vmatpush1.msra.mxu0 0.0
      %897 = vmatprep.subr.mxu0 0.0
      %898 = vmatpush1.msra.mxu0 0.0
      %899 = vmatprep.subr.mxu0 0.0
      %900 = vmatpush1.msra.mxu0 0.0
      %901 = vmatprep.subr.mxu0 0.0
      %902 = vmatpush1.msra.mxu0 0.0
      %903 = vmatprep.subr.mxu0 0.0
      %904 = vmatpush1.msra.mxu0 0.0
      %905 = vmatprep.subr.mxu0 0.0
      %906 = vmatpush1.msra.mxu0 0.0
      %907 = vmatprep.subr.mxu0 0.0
      %908 = vmatpush1.msra.mxu0 0.0
      %909 = vmatprep.subr.mxu0 0.0
      %910 = vmatpush1.msra.mxu0 0.0
      %911 = vmatprep.subr.mxu0 0.0
      %912 = vmatpush1.msra.mxu0 0.0
      %913 = vmatprep.subr.mxu0 0.0
      %914 = vmatpush1.msra.mxu0 0.0
      %915 = vmatprep.mubr.f32.mxu0 0.0
      %916 = vmatmul.mubr.f32.gmra.mrb[0].mxu0 %v843
      %v917 = vpop.f32.mrb[0].mxu0
      %v918 = vadd.f32 0.0, %v917
      %v919 = vpop.f32.mrb[0].mxu0
      %v920 = vadd.f32 0.0, %v919
      %921 = vdwg.mxu0
      %v924 = vcombine.low %v918, %v920
      %926 = vst [vmem:[#allocation2 + $0x4] sm:$0xff] %v924
      %v927 = vld [vmem:[#allocation2] sm:$0xff]
      %v928 = vld [vmem:[#allocation2 + $0x8] sm:$0xf]
      %v931 = vcombine.high %v927, %v927
      %932 = vrot.lane.b32.xlu0 %v927, 17
      %v933 = vpop.permute.xlu0 %932
      %934 = vrot.lane.b32.xlu0 %v931, 17
      %v935 = vpop.permute.xlu0 %934
      %936 = vrot.lane.b32.xlu0 %v928, 17
      %v937 = vpop.permute.xlu0 %936
      %v938 = vsel %vm179, %v933, %v935
      %v939 = vsel %vm179, %v935, %v937
      %v942 = vsel %vm168, %v938, 0.0
      %v943 = vsel %vm169, %v939, 0.0
      %944 = vst [vmem:[#allocation3] sm:$0xf] %v942
      %945 = vst [vmem:[#allocation3 + $0x8] sm:$0xf] %v943
      %v946 = vld [vmem:[#allocation2] sm:$0xff]
      %v947 = vld [vmem:[#allocation2 + $0x8] sm:$0xf]
      %v950 = vcombine.low %v946, %v946
      %v951 = vcombine.low %v947, %v947
      %952 = vrot.lane.b32.xlu0 %v950, 16
      %v953 = vpop.permute.xlu0 %952
      %954 = vrot.lane.b32.xlu0 %v946, 16
      %v955 = vpop.permute.xlu0 %954
      %956 = vrot.lane.b32.xlu0 %v951, 16
      %v957 = vpop.permute.xlu0 %956
      %v958 = vsel %vm200, %v953, %v955
      %v959 = vsel %vm200, %v955, %v957
      %962 = vst [vmem:[#allocation3] sm:$0xf0] %v958
      %963 = vst [vmem:[#allocation3 + $0x8] sm:$0xf0] %v959
      %v964 = vld [vmem:[#allocation2] sm:$0xff]
      %v965 = vld [vmem:[#allocation2 + $0x8] sm:$0xf]
      %v968 = vcombine.high %v964, %v964
      %969 = vrot.lane.b32.xlu0 %v964, 15
      %v970 = vpop.permute.xlu0 %969
      %971 = vrot.lane.b32.xlu0 %v968, 15
      %v972 = vpop.permute.xlu0 %971
      %973 = vrot.lane.b32.xlu0 %v965, 15
      %v974 = vpop.permute.xlu0 %973
      %v975 = vsel %vm224, %v970, %v972
      %v976 = vsel %vm224, %v972, %v974
      %v979 = vsel %vm213, %v975, 0.0
      %v980 = vsel %vm214, %v976, 0.0
      %981 = vst [vmem:[#allocation3 + $0x10] sm:$0xf] %v979
      %982 = vst [vmem:[#allocation3 + $0x18] sm:$0xf] %v980
      %v983 = vld [vmem:[#allocation2] sm:$0xff]
      %v984 = vld [vmem:[#allocation2 + $0x8] sm:$0xf]
      %v987 = vcombine.high %v983, %v983
      %988 = vrot.lane.b32.xlu0 %v983, 1
      %v989 = vpop.permute.xlu0 %988
      %990 = vrot.lane.b32.xlu0 %v987, 1
      %v991 = vpop.permute.xlu0 %990
      %992 = vrot.lane.b32.xlu0 %v984, 1
      %v993 = vpop.permute.xlu0 %992
      %v994 = vsel %vm244, %v989, %v991
      %v995 = vsel %vm244, %v991, %v993
      %v998 = vsel %vm168, %v994, 0.0
      %v999 = vsel %vm169, %v995, 0.0
      %v1002 = vrot.slane %v998, 4
      %v1003 = vrot.slane %v999, 4
      %1006 = vst [vmem:[#allocation3 + $0x10] sm:$0xf0] %v1002
      %1007 = vst [vmem:[#allocation3 + $0x18] sm:$0xf0] %v1003
      %v1008 = vld [vmem:[#allocation2 + $0x4] sm:$0xff]
      %v1010 = vcombine.high %v1008, %v1008
      %1012 = vst [vmem:[#allocation3 + $0x20] sm:$0xf] %v1008
      %1013 = vst [vmem:[#allocation3 + $0x28] sm:$0xf] %v1010
      %v1014 = vld [vmem:[#allocation2 + $0x4] sm:$0xff]
      %v1015 = vld [vmem:[#allocation2 + $0xc] sm:$0xf]
      %v1018 = vcombine.high %v1014, %v1014
      %1019 = vrot.lane.b32.xlu0 %v1014, 127
      %v1020 = vpop.permute.xlu0 %1019
      %1021 = vrot.lane.b32.xlu0 %v1018, 127
      %v1022 = vpop.permute.xlu0 %1021
      %1023 = vrot.lane.b32.xlu0 %v1015, 127
      %v1024 = vpop.permute.xlu0 %1023
      %v1025 = vsel %vm276, %v1020, %v1022
      %v1026 = vsel %vm276, %v1022, %v1024
      %v1029 = vsel %vm213, %v1025, 0.0
      %v1030 = vsel %vm214, %v1026, 0.0
      %v1033 = vrot.slane %v1029, 4
      %v1034 = vrot.slane %v1030, 4
      %1037 = vst [vmem:[#allocation3 + $0x20] sm:$0xf0] %v1033
      %1038 = vst [vmem:[#allocation3 + $0x28] sm:$0xf0] %v1034
      %v1039 = vld [vmem:[#allocation2 + $0x4] sm:$0xff]
      %v1040 = vld [vmem:[#allocation2 + $0xc] sm:$0xf]
      %v1043 = vcombine.high %v1039, %v1039
      %1044 = vrot.lane.b32.xlu0 %v1039, 113
      %v1045 = vpop.permute.xlu0 %1044
      %1046 = vrot.lane.b32.xlu0 %v1043, 113
      %v1047 = vpop.permute.xlu0 %1046
      %1048 = vrot.lane.b32.xlu0 %v1040, 113
      %v1049 = vpop.permute.xlu0 %1048
      %v1050 = vsel %vm302, %v1045, %v1047
      %v1051 = vsel %vm302, %v1047, %v1049
      %v1054 = vsel %vm168, %v1050, 0.0
      %v1055 = vsel %vm169, %v1051, 0.0
      %1056 = vst [vmem:[#allocation3 + $0x30] sm:$0xf] %v1054
      %1057 = vst [vmem:[#allocation3 + $0x38] sm:$0xf] %v1055
      %v1058 = vld [vmem:[#allocation2 + $0x4] sm:$0xff]
      %v1059 = vld [vmem:[#allocation2 + $0xc] sm:$0xf]
      %v1062 = vcombine.low %v1058, %v1058
      %v1063 = vcombine.low %v1059, %v1059
      %1064 = vrot.lane.b32.xlu0 %v1062, 112
      %v1065 = vpop.permute.xlu0 %1064
      %1066 = vrot.lane.b32.xlu0 %v1058, 112
      %v1067 = vpop.permute.xlu0 %1066
      %1068 = vrot.lane.b32.xlu0 %v1063, 112
      %v1069 = vpop.permute.xlu0 %1068
      %v1070 = vsel %vm323, %v1065, %v1067
      %v1071 = vsel %vm323, %v1067, %v1069
      %1074 = vst [vmem:[#allocation3 + $0x30] sm:$0xf0] %v1070
      %1075 = vst [vmem:[#allocation3 + $0x38] sm:$0xf0] %v1071
      %v1076 = vld [vmem:[#allocation2 + $0x4] sm:$0xff]
      %v1077 = vld [vmem:[#allocation2 + $0xc] sm:$0xf]
      %v1080 = vcombine.high %v1076, %v1076
      %1081 = vrot.lane.b32.xlu0 %v1076, 111
      %v1082 = vpop.permute.xlu0 %1081
      %1083 = vrot.lane.b32.xlu0 %v1080, 111
      %v1084 = vpop.permute.xlu0 %1083
      %1085 = vrot.lane.b32.xlu0 %v1077, 111
      %v1086 = vpop.permute.xlu0 %1085
      %v1087 = vsel %vm341, %v1082, %v1084
      %v1088 = vsel %vm341, %v1084, %v1086
      %v1091 = vsel %vm213, %v1087, 0.0
      %v1092 = vsel %vm214, %v1088, 0.0
      %1093 = vst [vmem:[#allocation3 + $0x40] sm:$0xf] %v1091
      %1094 = vst [vmem:[#allocation3 + $0x48] sm:$0xf] %v1092
      %s1095 = scalar_lea.vmem %s1, 16
      %v1096 = vld [vmem:[%s1095] sm:$0xf]
      %v1097 = vld [vmem:[#allocation3] sm:$0xff]
      %v1098 = vld [vmem:[#allocation3 + $0x8] sm:$0xff]
      %v1099 = vld [vmem:[#allocation3 + $0x10] sm:$0xff]
      %v1100 = vld [vmem:[#allocation3 + $0x18] sm:$0xff]
      %v1101 = vld [vmem:[#allocation3 + $0x20] sm:$0xff]
      %v1102 = vld [vmem:[#allocation3 + $0x28] sm:$0xff]
      %v1103 = vld [vmem:[#allocation3 + $0x30] sm:$0xff]
      %v1104 = vld [vmem:[#allocation3 + $0x38] sm:$0xff]
      %v1105 = vld [vmem:[#allocation3 + $0x40] sm:$0xf]
      %v1106 = vld [vmem:[#allocation3 + $0x48] sm:$0xf]
      %v1108 = vsel %vm418, %v1096, 0
      %v1111 = vsel %vm422, %v1105, 0
      %v1114 = vsel %vm422, %v1106, 0
      %1116 = vmatprep.subr.mxu0 %v1098
      %1117 = vmatpush1.msra.mxu0 %v1097
      %1118 = vmatprep.subr.mxu0 %v1100
      %1119 = vmatpush1.msra.mxu0 %v1099
      %1120 = vmatprep.subr.mxu0 %v1102
      %1121 = vmatpush1.msra.mxu0 %v1101
      %1122 = vmatprep.subr.mxu0 %v1104
      %1123 = vmatpush1.msra.mxu0 %v1103
      %1124 = vmatprep.subr.mxu0 %v1114
      %1125 = vmatpush1.msra.mxu0 %v1111
      %1126 = vmatprep.subr.mxu0 0.0
      %1127 = vmatpush1.msra.mxu0 0.0
      %1128 = vmatprep.subr.mxu0 0.0
      %1129 = vmatpush1.msra.mxu0 0.0
      %1130 = vmatprep.subr.mxu0 0.0
      %1131 = vmatpush1.msra.mxu0 0.0
      %1132 = vmatprep.subr.mxu0 0.0
      %1133 = vmatpush1.msra.mxu0 0.0
      %1134 = vmatprep.subr.mxu0 0.0
      %1135 = vmatpush1.msra.mxu0 0.0
      %1136 = vmatprep.subr.mxu0 0.0
      %1137 = vmatpush1.msra.mxu0 0.0
      %1138 = vmatprep.subr.mxu0 0.0
      %1139 = vmatpush1.msra.mxu0 0.0
      %1140 = vmatprep.subr.mxu0 0.0
      %1141 = vmatpush1.msra.mxu0 0.0
      %1142 = vmatprep.subr.mxu0 0.0
      %1143 = vmatpush1.msra.mxu0 0.0
      %1144 = vmatprep.subr.mxu0 0.0
      %1145 = vmatpush1.msra.mxu0 0.0
      %1146 = vmatprep.subr.mxu0 0.0
      %1147 = vmatpush1.msra.mxu0 0.0
      %1148 = vmatprep.subr.mxu0 0.0
      %1149 = vmatpush1.msra.mxu0 0.0
      %1150 = vmatprep.subr.mxu0 0.0
      %1151 = vmatpush1.msra.mxu0 0.0
      %1152 = vmatprep.subr.mxu0 0.0
      %1153 = vmatpush1.msra.mxu0 0.0
      %1154 = vmatprep.subr.mxu0 0.0
      %1155 = vmatpush1.msra.mxu0 0.0
      %1156 = vmatprep.subr.mxu0 0.0
      %1157 = vmatpush1.msra.mxu0 0.0
      %1158 = vmatprep.subr.mxu0 0.0
      %1159 = vmatpush1.msra.mxu0 0.0
      %1160 = vmatprep.subr.mxu0 0.0
      %1161 = vmatpush1.msra.mxu0 0.0
      %1162 = vmatprep.subr.mxu0 0.0
      %1163 = vmatpush1.msra.mxu0 0.0
      %1164 = vmatprep.subr.mxu0 0.0
      %1165 = vmatpush1.msra.mxu0 0.0
      %1166 = vmatprep.subr.mxu0 0.0
      %1167 = vmatpush1.msra.mxu0 0.0
      %1168 = vmatprep.subr.mxu0 0.0
      %1169 = vmatpush1.msra.mxu0 0.0
      %1170 = vmatprep.subr.mxu0 0.0
      %1171 = vmatpush1.msra.mxu0 0.0
      %1172 = vmatprep.subr.mxu0 0.0
      %1173 = vmatpush1.msra.mxu0 0.0
      %1174 = vmatprep.subr.mxu0 0.0
      %1175 = vmatpush1.msra.mxu0 0.0
      %1176 = vmatprep.subr.mxu0 0.0
      %1177 = vmatpush1.msra.mxu0 0.0
      %1178 = vmatprep.subr.mxu0 0.0
      %1179 = vmatpush1.msra.mxu0 0.0
      %1180 = vmatprep.mubr.f32.mxu0 0.0
      %1181 = vmatmul.mubr.f32.gmra.mrb[0].mxu0 %v1108
      %v1182 = vpop.f32.mrb[0].mxu0
      %v1183 = vadd.f32 0.0, %v1182
      %v1184 = vpop.f32.mrb[0].mxu0
      %v1185 = vadd.f32 0.0, %v1184
      %1186 = vdwg.mxu0
      %v1188 = vsel %vm418, %v350, 0
      %v1191 = vsel %vm422, %v359, 0
      %v1194 = vsel %vm422, %v360, 0
      %1196 = vmatprep.subr.mxu0 %v352
      %1197 = vmatpush1.msra.mxu0 %v351
      %1198 = vmatprep.subr.mxu0 %v354
      %1199 = vmatpush1.msra.mxu0 %v353
      %1200 = vmatprep.subr.mxu0 %v356
      %1201 = vmatpush1.msra.mxu0 %v355
      %1202 = vmatprep.subr.mxu0 %v358
      %1203 = vmatpush1.msra.mxu0 %v357
      %1204 = vmatprep.subr.mxu0 %v1194
      %1205 = vmatpush1.msra.mxu0 %v1191
      %1206 = vmatprep.subr.mxu0 0.0
      %1207 = vmatpush1.msra.mxu0 0.0
      %1208 = vmatprep.subr.mxu0 0.0
      %1209 = vmatpush1.msra.mxu0 0.0
      %1210 = vmatprep.subr.mxu0 0.0
      %1211 = vmatpush1.msra.mxu0 0.0
      %1212 = vmatprep.subr.mxu0 0.0
      %1213 = vmatpush1.msra.mxu0 0.0
      %1214 = vmatprep.subr.mxu0 0.0
      %1215 = vmatpush1.msra.mxu0 0.0
      %1216 = vmatprep.subr.mxu0 0.0
      %1217 = vmatpush1.msra.mxu0 0.0
      %1218 = vmatprep.subr.mxu0 0.0
      %1219 = vmatpush1.msra.mxu0 0.0
      %1220 = vmatprep.subr.mxu0 0.0
      %1221 = vmatpush1.msra.mxu0 0.0
      %1222 = vmatprep.subr.mxu0 0.0
      %1223 = vmatpush1.msra.mxu0 0.0
      %1224 = vmatprep.subr.mxu0 0.0
      %1225 = vmatpush1.msra.mxu0 0.0
      %1226 = vmatprep.subr.mxu0 0.0
      %1227 = vmatpush1.msra.mxu0 0.0
      %1228 = vmatprep.subr.mxu0 0.0
      %1229 = vmatpush1.msra.mxu0 0.0
      %1230 = vmatprep.subr.mxu0 0.0
      %1231 = vmatpush1.msra.mxu0 0.0
      %1232 = vmatprep.subr.mxu0 0.0
      %1233 = vmatpush1.msra.mxu0 0.0
      %1234 = vmatprep.subr.mxu0 0.0
      %1235 = vmatpush1.msra.mxu0 0.0
      %1236 = vmatprep.subr.mxu0 0.0
      %1237 = vmatpush1.msra.mxu0 0.0
      %1238 = vmatprep.subr.mxu0 0.0
      %1239 = vmatpush1.msra.mxu0 0.0
      %1240 = vmatprep.subr.mxu0 0.0
      %1241 = vmatpush1.msra.mxu0 0.0
      %1242 = vmatprep.subr.mxu0 0.0
      %1243 = vmatpush1.msra.mxu0 0.0
      %1244 = vmatprep.subr.mxu0 0.0
      %1245 = vmatpush1.msra.mxu0 0.0
      %1246 = vmatprep.subr.mxu0 0.0
      %1247 = vmatpush1.msra.mxu0 0.0
      %1248 = vmatprep.subr.mxu0 0.0
      %1249 = vmatpush1.msra.mxu0 0.0
      %1250 = vmatprep.subr.mxu0 0.0
      %1251 = vmatpush1.msra.mxu0 0.0
      %1252 = vmatprep.subr.mxu0 0.0
      %1253 = vmatpush1.msra.mxu0 0.0
      %1254 = vmatprep.subr.mxu0 0.0
      %1255 = vmatpush1.msra.mxu0 0.0
      %1256 = vmatprep.subr.mxu0 0.0
      %1257 = vmatpush1.msra.mxu0 0.0
      %1258 = vmatprep.subr.mxu0 0.0
      %1259 = vmatpush1.msra.mxu0 0.0
      %1260 = vmatprep.mubr.f32.mxu0 0.0
      %1261 = vmatmul.mubr.f32.gmra.mrb[0].mxu0 %v1188
      %v1262 = vpop.f32.mrb[0].mxu0
      %v1263 = vadd.f32 %v1183, %v1262
      %v1264 = vpop.f32.mrb[0].mxu0
      %v1265 = vadd.f32 %v1185, %v1264
      %1266 = vdwg.mxu0
      %1267 = vst [vmem:[#allocation2 + $0x4] sm:$0xff] %v160
      %v1268 = vld [vmem:[#allocation2] sm:$0xff]
      %v1269 = vld [vmem:[#allocation2 + $0x8] sm:$0xf]
      %vm1270 = vcmp.ge.f32.partialorder %v158, 2.0
      %vm1271 = vcmp.ge.f32.partialorder %v159, 2.0
      %v1272 = vsel %vm1270, 1, 0
      %v1273 = vsel %vm1271, 1, 0
      %vm1274 = vcmp.eq.s32.totalorder %v1272, 1
      %vm1275 = vcmp.eq.s32.totalorder %v1273, 1
      %v1278 = vcombine.high %v1268, %v1268
      %1279 = vrot.lane.b32.xlu0 %v1268, 2
      %v1280 = vpop.permute.xlu0 %1279
      %1281 = vrot.lane.b32.xlu0 %v1278, 2
      %v1282 = vpop.permute.xlu0 %1281
      %1283 = vrot.lane.b32.xlu0 %v1269, 2
      %v1284 = vpop.permute.xlu0 %1283
      %vm1285 = vcmask 15360
      %v1286 = vsel %vm1285, %v1280, %v1282
      %v1287 = vsel %vm1285, %v1282, %v1284
      %v1290 = vsel %vm1274, %v1286, 0.0
      %v1291 = vsel %vm1275, %v1287, 0.0
      %1292 = vst [vmem:[#allocation3] sm:$0xf] %v1290
      %1293 = vst [vmem:[#allocation3 + $0x8] sm:$0xf] %v1291
      %v1294 = vld [vmem:[#allocation2] sm:$0xff]
      %v1295 = vld [vmem:[#allocation2 + $0x8] sm:$0xf]
      %v1298 = vcombine.high %v1294, %v1294
      %1299 = vrot.lane.b32.xlu0 %v1294, 1
      %v1300 = vpop.permute.xlu0 %1299
      %1301 = vrot.lane.b32.xlu0 %v1298, 1
      %v1302 = vpop.permute.xlu0 %1301
      %1303 = vrot.lane.b32.xlu0 %v1295, 1
      %v1304 = vpop.permute.xlu0 %1303
      %v1305 = vsel %vm244, %v1300, %v1302
      %v1306 = vsel %vm244, %v1302, %v1304
      %v1309 = vsel %vm168, %v1305, 0.0
      %v1310 = vsel %vm169, %v1306, 0.0
      %v1313 = vrot.slane %v1309, 4
      %v1314 = vrot.slane %v1310, 4
      %1317 = vst [vmem:[#allocation3] sm:$0xf0] %v1313
      %1318 = vst [vmem:[#allocation3 + $0x8] sm:$0xf0] %v1314
      %v1319 = vld [vmem:[#allocation2 + $0x4] sm:$0xff]
      %v1321 = vcombine.high %v1319, %v1319
      %1323 = vst [vmem:[#allocation3 + $0x10] sm:$0xf] %v1319
      %1324 = vst [vmem:[#allocation3 + $0x18] sm:$0xf] %v1321
      %v1325 = vld [vmem:[#allocation2 + $0x4] sm:$0xff]
      %v1326 = vld [vmem:[#allocation2 + $0xc] sm:$0xf]
      %v1329 = vcombine.high %v1325, %v1325
      %1330 = vrot.lane.b32.xlu0 %v1325, 127
      %v1331 = vpop.permute.xlu0 %1330
      %1332 = vrot.lane.b32.xlu0 %v1329, 127
      %v1333 = vpop.permute.xlu0 %1332
      %1334 = vrot.lane.b32.xlu0 %v1326, 127
      %v1335 = vpop.permute.xlu0 %1334
      %v1336 = vsel %vm276, %v1331, %v1333
      %v1337 = vsel %vm276, %v1333, %v1335
      %v1340 = vsel %vm213, %v1336, 0.0
      %v1341 = vsel %vm214, %v1337, 0.0
      %v1344 = vrot.slane %v1340, 4
      %v1345 = vrot.slane %v1341, 4
      %1348 = vst [vmem:[#allocation3 + $0x10] sm:$0xf0] %v1344
      %1349 = vst [vmem:[#allocation3 + $0x18] sm:$0xf0] %v1345
      %v1350 = vld [vmem:[#allocation2 + $0x4] sm:$0xff]
      %v1351 = vld [vmem:[#allocation2 + $0xc] sm:$0xf]
      %vm1352 = vcmp.lt.f32.partialorder %v158, 14.0
      %vm1353 = vcmp.lt.f32.partialorder %v159, 14.0
      %v1354 = vsel %vm1352, 1, 0
      %v1355 = vsel %vm1353, 1, 0
      %vm1356 = vcmp.eq.s32.totalorder %v1354, 1
      %vm1357 = vcmp.eq.s32.totalorder %v1355, 1
      %v1360 = vcombine.high %v1350, %v1350
      %1361 = vrot.lane.b32.xlu0 %v1350, 126
      %v1362 = vpop.permute.xlu0 %1361
      %1363 = vrot.lane.b32.xlu0 %v1360, 126
      %v1364 = vpop.permute.xlu0 %1363
      %1365 = vrot.lane.b32.xlu0 %v1351, 126
      %v1366 = vpop.permute.xlu0 %1365
      %vm1367 = vcmask 1031168
      %v1368 = vsel %vm1367, %v1362, %v1364
      %v1369 = vsel %vm1367, %v1364, %v1366
      %v1372 = vsel %vm1356, %v1368, 0.0
      %v1373 = vsel %vm1357, %v1369, 0.0
      %1374 = vst [vmem:[#allocation3 + $0x20] sm:$0xf] %v1372
      %1375 = vst [vmem:[#allocation3 + $0x28] sm:$0xf] %v1373
      %s1376 = scalar_lea.vmem %s1, 20
      %v1377 = vld [vmem:[%s1376] sm:$0xf]
      %v1378 = vld [vmem:[#allocation3] sm:$0xff]
      %v1379 = vld [vmem:[#allocation3 + $0x8] sm:$0xff]
      %v1380 = vld [vmem:[#allocation3 + $0x10] sm:$0xff]
      %v1381 = vld [vmem:[#allocation3 + $0x18] sm:$0xff]
      %v1382 = vld [vmem:[#allocation3 + $0x20] sm:$0xff]
      %v1383 = vld [vmem:[#allocation3 + $0x28] sm:$0xff]
      %v1384 = vld [vmem:[#allocation3 + $0x30] sm:$0xff]
      %v1385 = vld [vmem:[#allocation3 + $0x38] sm:$0xff]
      %v1386 = vld [vmem:[#allocation3 + $0x40] sm:$0xf]
      %v1387 = vld [vmem:[#allocation3 + $0x48] sm:$0xf]
      %v1389 = vsel %vm418, %v1377, 0
      %v1392 = vsel %vm422, %v1386, 0
      %v1395 = vsel %vm422, %v1387, 0
      %1397 = vmatprep.subr.mxu0 %v1379
      %1398 = vmatpush1.msra.mxu0 %v1378
      %1399 = vmatprep.subr.mxu0 %v1381
      %1400 = vmatpush1.msra.mxu0 %v1380
      %1401 = vmatprep.subr.mxu0 %v1383
      %1402 = vmatpush1.msra.mxu0 %v1382
      %1403 = vmatprep.subr.mxu0 %v1385
      %1404 = vmatpush1.msra.mxu0 %v1384
      %1405 = vmatprep.subr.mxu0 %v1395
      %1406 = vmatpush1.msra.mxu0 %v1392
      %1407 = vmatprep.subr.mxu0 0.0
      %1408 = vmatpush1.msra.mxu0 0.0
      %1409 = vmatprep.subr.mxu0 0.0
      %1410 = vmatpush1.msra.mxu0 0.0
      %1411 = vmatprep.subr.mxu0 0.0
      %1412 = vmatpush1.msra.mxu0 0.0
      %1413 = vmatprep.subr.mxu0 0.0
      %1414 = vmatpush1.msra.mxu0 0.0
      %1415 = vmatprep.subr.mxu0 0.0
      %1416 = vmatpush1.msra.mxu0 0.0
      %1417 = vmatprep.subr.mxu0 0.0
      %1418 = vmatpush1.msra.mxu0 0.0
      %1419 = vmatprep.subr.mxu0 0.0
      %1420 = vmatpush1.msra.mxu0 0.0
      %1421 = vmatprep.subr.mxu0 0.0
      %1422 = vmatpush1.msra.mxu0 0.0
      %1423 = vmatprep.subr.mxu0 0.0
      %1424 = vmatpush1.msra.mxu0 0.0
      %1425 = vmatprep.subr.mxu0 0.0
      %1426 = vmatpush1.msra.mxu0 0.0
      %1427 = vmatprep.subr.mxu0 0.0
      %1428 = vmatpush1.msra.mxu0 0.0
      %1429 = vmatprep.subr.mxu0 0.0
      %1430 = vmatpush1.msra.mxu0 0.0
      %1431 = vmatprep.subr.mxu0 0.0
      %1432 = vmatpush1.msra.mxu0 0.0
      %1433 = vmatprep.subr.mxu0 0.0
      %1434 = vmatpush1.msra.mxu0 0.0
      %1435 = vmatprep.subr.mxu0 0.0
      %1436 = vmatpush1.msra.mxu0 0.0
      %1437 = vmatprep.subr.mxu0 0.0
      %1438 = vmatpush1.msra.mxu0 0.0
      %1439 = vmatprep.subr.mxu0 0.0
      %1440 = vmatpush1.msra.mxu0 0.0
      %1441 = vmatprep.subr.mxu0 0.0
      %1442 = vmatpush1.msra.mxu0 0.0
      %1443 = vmatprep.subr.mxu0 0.0
      %1444 = vmatpush1.msra.mxu0 0.0
      %1445 = vmatprep.subr.mxu0 0.0
      %1446 = vmatpush1.msra.mxu0 0.0
      %1447 = vmatprep.subr.mxu0 0.0
      %1448 = vmatpush1.msra.mxu0 0.0
      %1449 = vmatprep.subr.mxu0 0.0
      %1450 = vmatpush1.msra.mxu0 0.0
      %1451 = vmatprep.subr.mxu0 0.0
      %1452 = vmatpush1.msra.mxu0 0.0
      %1453 = vmatprep.subr.mxu0 0.0
      %1454 = vmatpush1.msra.mxu0 0.0
      %1455 = vmatprep.subr.mxu0 0.0
      %1456 = vmatpush1.msra.mxu0 0.0
      %1457 = vmatprep.subr.mxu0 0.0
      %1458 = vmatpush1.msra.mxu0 0.0
      %1459 = vmatprep.subr.mxu0 0.0
      %1460 = vmatpush1.msra.mxu0 0.0
      %1461 = vmatprep.mubr.f32.mxu0 0.0
      %1462 = vmatmul.mubr.f32.gmra.mrb[0].mxu0 %v1389
      %v1463 = vpop.f32.mrb[0].mxu0
      %v1464 = vadd.f32 0.0, %v1463
      %v1465 = vpop.f32.mrb[0].mxu0
      %v1466 = vadd.f32 0.0, %v1465
      %1467 = vdwg.mxu0
      %v1470 = vcombine.low %v1464, %v1466
      %1472 = vst [vmem:[#allocation2 + $0x4] sm:$0xff] %v1470
      %v1473 = vld [vmem:[#allocation2] sm:$0xff]
      %v1474 = vld [vmem:[#allocation2 + $0x8] sm:$0xf]
      %v1477 = vcombine.high %v1473, %v1473
      %1478 = vrot.lane.b32.xlu0 %v1473, 32
      %v1479 = vpop.permute.xlu0 %1478
      %1480 = vrot.lane.b32.xlu0 %v1477, 32
      %v1481 = vpop.permute.xlu0 %1480
      %1482 = vrot.lane.b32.xlu0 %v1474, 32
      %v1483 = vpop.permute.xlu0 %1482
      %vm1484 = vcmask 261120
      %v1485 = vsel %vm1484, %v1479, %v1481
      %v1486 = vsel %vm1484, %v1481, %v1483
      %1489 = vst [vmem:[#allocation3] sm:$0xf] %v1485
      %1490 = vst [vmem:[#allocation3 + $0x8] sm:$0xf] %v1486
      %v1491 = vld [vmem:[#allocation2] sm:$0xff]
      %v1492 = vld [vmem:[#allocation2 + $0x8] sm:$0xf]
      %v1495 = vcombine.low %v1491, %v1491
      %v1496 = vcombine.low %v1492, %v1492
      %1497 = vrot.lane.b32.xlu0 %v1495, 16
      %v1498 = vpop.permute.xlu0 %1497
      %1499 = vrot.lane.b32.xlu0 %v1491, 16
      %v1500 = vpop.permute.xlu0 %1499
      %1501 = vrot.lane.b32.xlu0 %v1496, 16
      %v1502 = vpop.permute.xlu0 %1501
      %v1503 = vsel %vm200, %v1498, %v1500
      %v1504 = vsel %vm200, %v1500, %v1502
      %1507 = vst [vmem:[#allocation3] sm:$0xf0] %v1503
      %1508 = vst [vmem:[#allocation3 + $0x8] sm:$0xf0] %v1504
      %v1509 = vld [vmem:[#allocation2 + $0x4] sm:$0xff]
      %v1511 = vcombine.high %v1509, %v1509
      %1513 = vst [vmem:[#allocation3 + $0x10] sm:$0xf] %v1509
      %1514 = vst [vmem:[#allocation3 + $0x18] sm:$0xf] %v1511
      %v1515 = vld [vmem:[#allocation2 + $0x4] sm:$0xff]
      %v1516 = vld [vmem:[#allocation2 + $0xc] sm:$0xf]
      %v1519 = vcombine.low %v1515, %v1515
      %v1520 = vcombine.low %v1516, %v1516
      %1521 = vrot.lane.b32.xlu0 %v1519, 112
      %v1522 = vpop.permute.xlu0 %1521
      %1523 = vrot.lane.b32.xlu0 %v1515, 112
      %v1524 = vpop.permute.xlu0 %1523
      %1525 = vrot.lane.b32.xlu0 %v1520, 112
      %v1526 = vpop.permute.xlu0 %1525
      %v1527 = vsel %vm323, %v1522, %v1524
      %v1528 = vsel %vm323, %v1524, %v1526
      %1531 = vst [vmem:[#allocation3 + $0x10] sm:$0xf0] %v1527
      %1532 = vst [vmem:[#allocation3 + $0x18] sm:$0xf0] %v1528
      %v1533 = vld [vmem:[#allocation2 + $0x4] sm:$0xff]
      %v1534 = vld [vmem:[#allocation2 + $0xc] sm:$0xf]
      %v1537 = vcombine.high %v1533, %v1533
      %1538 = vrot.lane.b32.xlu0 %v1533, 96
      %v1539 = vpop.permute.xlu0 %1538
      %1540 = vrot.lane.b32.xlu0 %v1537, 96
      %v1541 = vpop.permute.xlu0 %1540
      %1542 = vrot.lane.b32.xlu0 %v1534, 96
      %v1543 = vpop.permute.xlu0 %1542
      %vm1544 = vcmask 785408
      %v1545 = vsel %vm1544, %v1539, %v1541
      %v1546 = vsel %vm1544, %v1541, %v1543
      %1549 = vst [vmem:[#allocation3 + $0x20] sm:$0xf] %v1545
      %1550 = vst [vmem:[#allocation3 + $0x28] sm:$0xf] %v1546
      %s1551 = scalar_lea.vmem %s1, 24
      %v1552 = vld [vmem:[%s1551] sm:$0xf]
      %v1553 = vld [vmem:[#allocation3] sm:$0xff]
      %v1554 = vld [vmem:[#allocation3 + $0x8] sm:$0xff]
      %v1555 = vld [vmem:[#allocation3 + $0x10] sm:$0xff]
      %v1556 = vld [vmem:[#allocation3 + $0x18] sm:$0xff]
      %v1557 = vld [vmem:[#allocation3 + $0x20] sm:$0xff]
      %v1558 = vld [vmem:[#allocation3 + $0x28] sm:$0xff]
      %v1559 = vld [vmem:[#allocation3 + $0x30] sm:$0xff]
      %v1560 = vld [vmem:[#allocation3 + $0x38] sm:$0xff]
      %v1561 = vld [vmem:[#allocation3 + $0x40] sm:$0xf]
      %v1562 = vld [vmem:[#allocation3 + $0x48] sm:$0xf]
      %v1564 = vsel %vm418, %v1552, 0
      %v1567 = vsel %vm422, %v1561, 0
      %v1570 = vsel %vm422, %v1562, 0
      %1572 = vmatprep.subr.mxu0 %v1554
      %1573 = vmatpush1.msra.mxu0 %v1553
      %1574 = vmatprep.subr.mxu0 %v1556
      %1575 = vmatpush1.msra.mxu0 %v1555
      %1576 = vmatprep.subr.mxu0 %v1558
      %1577 = vmatpush1.msra.mxu0 %v1557
      %1578 = vmatprep.subr.mxu0 %v1560
      %1579 = vmatpush1.msra.mxu0 %v1559
      %1580 = vmatprep.subr.mxu0 %v1570
      %1581 = vmatpush1.msra.mxu0 %v1567
      %1582 = vmatprep.subr.mxu0 0.0
      %1583 = vmatpush1.msra.mxu0 0.0
      %1584 = vmatprep.subr.mxu0 0.0
      %1585 = vmatpush1.msra.mxu0 0.0
      %1586 = vmatprep.subr.mxu0 0.0
      %1587 = vmatpush1.msra.mxu0 0.0
      %1588 = vmatprep.subr.mxu0 0.0
      %1589 = vmatpush1.msra.mxu0 0.0
      %1590 = vmatprep.subr.mxu0 0.0
      %1591 = vmatpush1.msra.mxu0 0.0
      %1592 = vmatprep.subr.mxu0 0.0
      %1593 = vmatpush1.msra.mxu0 0.0
      %1594 = vmatprep.subr.mxu0 0.0
      %1595 = vmatpush1.msra.mxu0 0.0
      %1596 = vmatprep.subr.mxu0 0.0
      %1597 = vmatpush1.msra.mxu0 0.0
      %1598 = vmatprep.subr.mxu0 0.0
      %1599 = vmatpush1.msra.mxu0 0.0
      %1600 = vmatprep.subr.mxu0 0.0
      %1601 = vmatpush1.msra.mxu0 0.0
      %1602 = vmatprep.subr.mxu0 0.0
      %1603 = vmatpush1.msra.mxu0 0.0
      %1604 = vmatprep.subr.mxu0 0.0
      %1605 = vmatpush1.msra.mxu0 0.0
      %1606 = vmatprep.subr.mxu0 0.0
      %1607 = vmatpush1.msra.mxu0 0.0
      %1608 = vmatprep.subr.mxu0 0.0
      %1609 = vmatpush1.msra.mxu0 0.0
      %1610 = vmatprep.subr.mxu0 0.0
      %1611 = vmatpush1.msra.mxu0 0.0
      %1612 = vmatprep.subr.mxu0 0.0
      %1613 = vmatpush1.msra.mxu0 0.0
      %1614 = vmatprep.subr.mxu0 0.0
      %1615 = vmatpush1.msra.mxu0 0.0
      %1616 = vmatprep.subr.mxu0 0.0
      %1617 = vmatpush1.msra.mxu0 0.0
      %1618 = vmatprep.subr.mxu0 0.0
      %1619 = vmatpush1.msra.mxu0 0.0
      %1620 = vmatprep.subr.mxu0 0.0
      %1621 = vmatpush1.msra.mxu0 0.0
      %1622 = vmatprep.subr.mxu0 0.0
      %1623 = vmatpush1.msra.mxu0 0.0
      %1624 = vmatprep.subr.mxu0 0.0
      %1625 = vmatpush1.msra.mxu0 0.0
      %1626 = vmatprep.subr.mxu0 0.0
      %1627 = vmatpush1.msra.mxu0 0.0
      %1628 = vmatprep.subr.mxu0 0.0
      %1629 = vmatpush1.msra.mxu0 0.0
      %1630 = vmatprep.subr.mxu0 0.0
      %1631 = vmatpush1.msra.mxu0 0.0
      %1632 = vmatprep.subr.mxu0 0.0
      %1633 = vmatpush1.msra.mxu0 0.0
      %1634 = vmatprep.subr.mxu0 0.0
      %1635 = vmatpush1.msra.mxu0 0.0
      %1636 = vmatprep.mubr.f32.mxu0 0.0
      %1637 = vmatmul.mubr.f32.gmra.mrb[0].mxu0 %v1564
      %v1638 = vpop.f32.mrb[0].mxu0
      %v1639 = vadd.f32 0.0, %v1638
      %v1640 = vpop.f32.mrb[0].mxu0
      %v1641 = vadd.f32 0.0, %v1640
      %1642 = vdwg.mxu0
      %v1645 = vcombine.low %v1639, %v1641
      %1647 = vst [vmem:[#allocation2 + $0x4] sm:$0xff] %v1645
      %v1648 = vld [vmem:[#allocation2] sm:$0xff]
      %v1649 = vld [vmem:[#allocation2 + $0x8] sm:$0xf]
      %vm1650 = vcmp.ge.f32.partialorder %v158, 5.0
      %vm1651 = vcmp.ge.f32.partialorder %v159, 5.0
      %v1652 = vsel %vm1650, 1, 0
      %v1653 = vsel %vm1651, 1, 0
      %vm1654 = vcmp.eq.s32.totalorder %v1652, 1
      %vm1655 = vcmp.eq.s32.totalorder %v1653, 1
      %v1658 = vcombine.high %v1648, %v1648
      %1659 = vrot.lane.b32.xlu0 %v1648, 85
      %v1660 = vpop.permute.xlu0 %1659
      %1661 = vrot.lane.b32.xlu0 %v1658, 85
      %v1662 = vpop.permute.xlu0 %1661
      %1663 = vrot.lane.b32.xlu0 %v1649, 85
      %v1664 = vpop.permute.xlu0 %1663
      %vm1665 = vcmask 695296
      %v1666 = vsel %vm1665, %v1660, %v1662
      %v1667 = vsel %vm1665, %v1662, %v1664
      %v1670 = vsel %vm1654, %v1666, 0.0
      %v1671 = vsel %vm1655, %v1667, 0.0
      %1672 = vst [vmem:[#allocation3] sm:$0xf] %v1670
      %1673 = vst [vmem:[#allocation3 + $0x8] sm:$0xf] %v1671
      %v1674 = vld [vmem:[#allocation2] sm:$0xff]
      %v1675 = vld [vmem:[#allocation2 + $0x8] sm:$0xf]
      %v1678 = vcombine.low %v1674, %v1674
      %v1679 = vcombine.low %v1675, %v1675
      %1680 = vrot.lane.b32.xlu0 %v1678, 80
      %v1681 = vpop.permute.xlu0 %1680
      %1682 = vrot.lane.b32.xlu0 %v1674, 80
      %v1683 = vpop.permute.xlu0 %1682
      %1684 = vrot.lane.b32.xlu0 %v1679, 80
      %v1685 = vpop.permute.xlu0 %1684
      %v1686 = vsel %vm803, %v1681, %v1683
      %v1687 = vsel %vm803, %v1683, %v1685
      %1690 = vst [vmem:[#allocation3] sm:$0xf0] %v1686
      %1691 = vst [vmem:[#allocation3 + $0x8] sm:$0xf0] %v1687
      %v1692 = vld [vmem:[#allocation2] sm:$0xff]
      %v1693 = vld [vmem:[#allocation2 + $0x8] sm:$0xf]
      %vm1694 = vcmp.lt.f32.partialorder %v158, 11.0
      %vm1695 = vcmp.lt.f32.partialorder %v159, 11.0
      %v1696 = vsel %vm1694, 1, 0
      %v1697 = vsel %vm1695, 1, 0
      %vm1698 = vcmp.eq.s32.totalorder %v1696, 1
      %vm1699 = vcmp.eq.s32.totalorder %v1697, 1
      %v1702 = vcombine.high %v1692, %v1692
      %1703 = vrot.lane.b32.xlu0 %v1692, 75
      %v1704 = vpop.permute.xlu0 %1703
      %1705 = vrot.lane.b32.xlu0 %v1702, 75
      %v1706 = vpop.permute.xlu0 %1705
      %1707 = vrot.lane.b32.xlu0 %v1693, 75
      %v1708 = vpop.permute.xlu0 %1707
      %vm1709 = vcmask 613376
      %v1710 = vsel %vm1709, %v1704, %v1706
      %v1711 = vsel %vm1709, %v1706, %v1708
      %v1714 = vsel %vm1698, %v1710, 0.0
      %v1715 = vsel %vm1699, %v1711, 0.0
      %1716 = vst [vmem:[#allocation3 + $0x10] sm:$0xf] %v1714
      %1717 = vst [vmem:[#allocation3 + $0x18] sm:$0xf] %v1715
      %v1718 = vld [vmem:[#allocation2] sm:$0xff]
      %v1719 = vld [vmem:[#allocation2 + $0x8] sm:$0xf]
      %v1722 = vcombine.high %v1718, %v1718
      %1723 = vrot.lane.b32.xlu0 %v1718, 5
      %v1724 = vpop.permute.xlu0 %1723
      %1725 = vrot.lane.b32.xlu0 %v1722, 5
      %v1726 = vpop.permute.xlu0 %1725
      %1727 = vrot.lane.b32.xlu0 %v1719, 5
      %v1728 = vpop.permute.xlu0 %1727
      %vm1729 = vcmask 39936
      %v1730 = vsel %vm1729, %v1724, %v1726
      %v1731 = vsel %vm1729, %v1726, %v1728
      %v1734 = vsel %vm1654, %v1730, 0.0
      %v1735 = vsel %vm1655, %v1731, 0.0
      %v1738 = vrot.slane %v1734, 4
      %v1739 = vrot.slane %v1735, 4
      %1742 = vst [vmem:[#allocation3 + $0x10] sm:$0xf0] %v1738
      %1743 = vst [vmem:[#allocation3 + $0x18] sm:$0xf0] %v1739
      %v1744 = vld [vmem:[#allocation2 + $0x4] sm:$0xff]
      %v1746 = vcombine.high %v1744, %v1744
      %1748 = vst [vmem:[#allocation3 + $0x20] sm:$0xf] %v1744
      %1749 = vst [vmem:[#allocation3 + $0x28] sm:$0xf] %v1746
      %v1750 = vld [vmem:[#allocation2 + $0x4] sm:$0xff]
      %v1751 = vld [vmem:[#allocation2 + $0xc] sm:$0xf]
      %v1754 = vcombine.high %v1750, %v1750
      %1755 = vrot.lane.b32.xlu0 %v1750, 123
      %v1756 = vpop.permute.xlu0 %1755
      %1757 = vrot.lane.b32.xlu0 %v1754, 123
      %v1758 = vpop.permute.xlu0 %1757
      %1759 = vrot.lane.b32.xlu0 %v1751, 123
      %v1760 = vpop.permute.xlu0 %1759
      %vm1761 = vcmask 1006592
      %v1762 = vsel %vm1761, %v1756, %v1758
      %v1763 = vsel %vm1761, %v1758, %v1760
      %v1766 = vsel %vm1698, %v1762, 0.0
      %v1767 = vsel %vm1699, %v1763, 0.0
      %v1770 = vrot.slane %v1766, 4
      %v1771 = vrot.slane %v1767, 4
      %1774 = vst [vmem:[#allocation3 + $0x20] sm:$0xf0] %v1770
      %1775 = vst [vmem:[#allocation3 + $0x28] sm:$0xf0] %v1771
      %v1776 = vld [vmem:[#allocation2 + $0x4] sm:$0xff]
      %v1777 = vld [vmem:[#allocation2 + $0xc] sm:$0xf]
      %v1780 = vcombine.high %v1776, %v1776
      %1781 = vrot.lane.b32.xlu0 %v1776, 53
      %v1782 = vpop.permute.xlu0 %1781
      %1783 = vrot.lane.b32.xlu0 %v1780, 53
      %v1784 = vpop.permute.xlu0 %1783
      %1785 = vrot.lane.b32.xlu0 %v1777, 53
      %v1786 = vpop.permute.xlu0 %1785
      %vm1787 = vcmask 433152
      %v1788 = vsel %vm1787, %v1782, %v1784
      %v1789 = vsel %vm1787, %v1784, %v1786
      %v1792 = vsel %vm1654, %v1788, 0.0
      %v1793 = vsel %vm1655, %v1789, 0.0
      %1794 = vst [vmem:[#allocation3 + $0x30] sm:$0xf] %v1792
      %1795 = vst [vmem:[#allocation3 + $0x38] sm:$0xf] %v1793
      %v1796 = vld [vmem:[#allocation2 + $0x4] sm:$0xff]
      %v1797 = vld [vmem:[#allocation2 + $0xc] sm:$0xf]
      %v1800 = vcombine.low %v1796, %v1796
      %v1801 = vcombine.low %v1797, %v1797
      %1802 = vrot.lane.b32.xlu0 %v1800, 48
      %v1803 = vpop.permute.xlu0 %1802
      %1804 = vrot.lane.b32.xlu0 %v1796, 48
      %v1805 = vpop.permute.xlu0 %1804
      %1806 = vrot.lane.b32.xlu0 %v1801, 48
      %v1807 = vpop.permute.xlu0 %1806
      %v1808 = vsel %vm680, %v1803, %v1805
      %v1809 = vsel %vm680, %v1805, %v1807
      %1812 = vst [vmem:[#allocation3 + $0x30] sm:$0xf0] %v1808
      %1813 = vst [vmem:[#allocation3 + $0x38] sm:$0xf0] %v1809
      %v1814 = vld [vmem:[#allocation2 + $0x4] sm:$0xff]
      %v1815 = vld [vmem:[#allocation2 + $0xc] sm:$0xf]
      %v1818 = vcombine.high %v1814, %v1814
      %1819 = vrot.lane.b32.xlu0 %v1814, 43
      %v1820 = vpop.permute.xlu0 %1819
      %1821 = vrot.lane.b32.xlu0 %v1818, 43
      %v1822 = vpop.permute.xlu0 %1821
      %1823 = vrot.lane.b32.xlu0 %v1815, 43
      %v1824 = vpop.permute.xlu0 %1823
      %vm1825 = vcmask 351232
      %v1826 = vsel %vm1825, %v1820, %v1822
      %v1827 = vsel %vm1825, %v1822, %v1824
      %v1830 = vsel %vm1698, %v1826, 0.0
      %v1831 = vsel %vm1699, %v1827, 0.0
      %1832 = vst [vmem:[#allocation3 + $0x40] sm:$0xf] %v1830
      %1833 = vst [vmem:[#allocation3 + $0x48] sm:$0xf] %v1831
      %s1834 = scalar_lea.vmem %s1, 28
      %v1835 = vld [vmem:[%s1834] sm:$0xf]
      %v1836 = vld [vmem:[#allocation3] sm:$0xff]
      %v1837 = vld [vmem:[#allocation3 + $0x8] sm:$0xff]
      %v1838 = vld [vmem:[#allocation3 + $0x10] sm:$0xff]
      %v1839 = vld [vmem:[#allocation3 + $0x18] sm:$0xff]
      %v1840 = vld [vmem:[#allocation3 + $0x20] sm:$0xff]
      %v1841 = vld [vmem:[#allocation3 + $0x28] sm:$0xff]
      %v1842 = vld [vmem:[#allocation3 + $0x30] sm:$0xff]
      %v1843 = vld [vmem:[#allocation3 + $0x38] sm:$0xff]
      %v1844 = vld [vmem:[#allocation3 + $0x40] sm:$0xf]
      %v1845 = vld [vmem:[#allocation3 + $0x48] sm:$0xf]
      %v1847 = vsel %vm418, %v1835, 0
      %v1850 = vsel %vm422, %v1844, 0
      %v1853 = vsel %vm422, %v1845, 0
      %1855 = vmatprep.subr.mxu0 %v1837
      %1856 = vmatpush1.msra.mxu0 %v1836
      %1857 = vmatprep.subr.mxu0 %v1839
      %1858 = vmatpush1.msra.mxu0 %v1838
      %1859 = vmatprep.subr.mxu0 %v1841
      %1860 = vmatpush1.msra.mxu0 %v1840
      %1861 = vmatprep.subr.mxu0 %v1843
      %1862 = vmatpush1.msra.mxu0 %v1842
      %1863 = vmatprep.subr.mxu0 %v1853
      %1864 = vmatpush1.msra.mxu0 %v1850
      %1865 = vmatprep.subr.mxu0 0.0
      %1866 = vmatpush1.msra.mxu0 0.0
      %1867 = vmatprep.subr.mxu0 0.0
      %1868 = vmatpush1.msra.mxu0 0.0
      %1869 = vmatprep.subr.mxu0 0.0
      %1870 = vmatpush1.msra.mxu0 0.0
      %1871 = vmatprep.subr.mxu0 0.0
      %1872 = vmatpush1.msra.mxu0 0.0
      %1873 = vmatprep.subr.mxu0 0.0
      %1874 = vmatpush1.msra.mxu0 0.0
      %1875 = vmatprep.subr.mxu0 0.0
      %1876 = vmatpush1.msra.mxu0 0.0
      %1877 = vmatprep.subr.mxu0 0.0
      %1878 = vmatpush1.msra.mxu0 0.0
      %1879 = vmatprep.subr.mxu0 0.0
      %1880 = vmatpush1.msra.mxu0 0.0
      %1881 = vmatprep.subr.mxu0 0.0
      %1882 = vmatpush1.msra.mxu0 0.0
      %1883 = vmatprep.subr.mxu0 0.0
      %1884 = vmatpush1.msra.mxu0 0.0
      %1885 = vmatprep.subr.mxu0 0.0
      %1886 = vmatpush1.msra.mxu0 0.0
      %1887 = vmatprep.subr.mxu0 0.0
      %1888 = vmatpush1.msra.mxu0 0.0
      %1889 = vmatprep.subr.mxu0 0.0
      %1890 = vmatpush1.msra.mxu0 0.0
      %1891 = vmatprep.subr.mxu0 0.0
      %1892 = vmatpush1.msra.mxu0 0.0
      %1893 = vmatprep.subr.mxu0 0.0
      %1894 = vmatpush1.msra.mxu0 0.0
      %1895 = vmatprep.subr.mxu0 0.0
      %1896 = vmatpush1.msra.mxu0 0.0
      %1897 = vmatprep.subr.mxu0 0.0
      %1898 = vmatpush1.msra.mxu0 0.0
      %1899 = vmatprep.subr.mxu0 0.0
      %1900 = vmatpush1.msra.mxu0 0.0
      %1901 = vmatprep.subr.mxu0 0.0
      %1902 = vmatpush1.msra.mxu0 0.0
      %1903 = vmatprep.subr.mxu0 0.0
      %1904 = vmatpush1.msra.mxu0 0.0
      %1905 = vmatprep.subr.mxu0 0.0
      %1906 = vmatpush1.msra.mxu0 0.0
      %1907 = vmatprep.subr.mxu0 0.0
      %1908 = vmatpush1.msra.mxu0 0.0
      %1909 = vmatprep.subr.mxu0 0.0
      %1910 = vmatpush1.msra.mxu0 0.0
      %1911 = vmatprep.subr.mxu0 0.0
      %1912 = vmatpush1.msra.mxu0 0.0
      %1913 = vmatprep.subr.mxu0 0.0
      %1914 = vmatpush1.msra.mxu0 0.0
      %1915 = vmatprep.subr.mxu0 0.0
      %1916 = vmatpush1.msra.mxu0 0.0
      %1917 = vmatprep.subr.mxu0 0.0
      %1918 = vmatpush1.msra.mxu0 0.0
      %1919 = vmatprep.mubr.f32.mxu0 0.0
      %1920 = vmatmul.mubr.f32.gmra.mrb[0].mxu0 %v1847
      %v1921 = vpop.f32.mrb[0].mxu0
      %v1922 = vadd.f32 0.0, %v1921
      %v1923 = vpop.f32.mrb[0].mxu0
      %v1924 = vadd.f32 0.0, %v1923
      %1925 = vdwg.mxu0
      %v1928 = vcombine.low %v1922, %v1924
      %1930 = vst [vmem:[#allocation2 + $0x4] sm:$0xff] %v1928
      %v1931 = vld [vmem:[#allocation2] sm:$0xff]
      %v1932 = vld [vmem:[#allocation2 + $0x8] sm:$0xf]
      %v1935 = vcombine.high %v1931, %v1931
      %1936 = vrot.lane.b32.xlu0 %v1931, 17
      %v1937 = vpop.permute.xlu0 %1936
      %1938 = vrot.lane.b32.xlu0 %v1935, 17
      %v1939 = vpop.permute.xlu0 %1938
      %1940 = vrot.lane.b32.xlu0 %v1932, 17
      %v1941 = vpop.permute.xlu0 %1940
      %v1942 = vsel %vm179, %v1937, %v1939
      %v1943 = vsel %vm179, %v1939, %v1941
      %v1946 = vsel %vm168, %v1942, 0.0
      %v1947 = vsel %vm169, %v1943, 0.0
      %1948 = vst [vmem:[#allocation3] sm:$0xf] %v1946
      %1949 = vst [vmem:[#allocation3 + $0x8] sm:$0xf] %v1947
      %v1950 = vld [vmem:[#allocation2] sm:$0xff]
      %v1951 = vld [vmem:[#allocation2 + $0x8] sm:$0xf]
      %v1954 = vcombine.low %v1950, %v1950
      %v1955 = vcombine.low %v1951, %v1951
      %1956 = vrot.lane.b32.xlu0 %v1954, 16
      %v1957 = vpop.permute.xlu0 %1956
      %1958 = vrot.lane.b32.xlu0 %v1950, 16
      %v1959 = vpop.permute.xlu0 %1958
      %1960 = vrot.lane.b32.xlu0 %v1955, 16
      %v1961 = vpop.permute.xlu0 %1960
      %v1962 = vsel %vm200, %v1957, %v1959
      %v1963 = vsel %vm200, %v1959, %v1961
      %1966 = vst [vmem:[#allocation3] sm:$0xf0] %v1962
      %1967 = vst [vmem:[#allocation3 + $0x8] sm:$0xf0] %v1963
      %v1968 = vld [vmem:[#allocation2] sm:$0xff]
      %v1969 = vld [vmem:[#allocation2 + $0x8] sm:$0xf]
      %v1972 = vcombine.high %v1968, %v1968
      %1973 = vrot.lane.b32.xlu0 %v1968, 15
      %v1974 = vpop.permute.xlu0 %1973
      %1975 = vrot.lane.b32.xlu0 %v1972, 15
      %v1976 = vpop.permute.xlu0 %1975
      %1977 = vrot.lane.b32.xlu0 %v1969, 15
      %v1978 = vpop.permute.xlu0 %1977
      %v1979 = vsel %vm224, %v1974, %v1976
      %v1980 = vsel %vm224, %v1976, %v1978
      %v1983 = vsel %vm213, %v1979, 0.0
      %v1984 = vsel %vm214, %v1980, 0.0
      %1985 = vst [vmem:[#allocation3 + $0x10] sm:$0xf] %v1983
      %1986 = vst [vmem:[#allocation3 + $0x18] sm:$0xf] %v1984
      %v1987 = vld [vmem:[#allocation2] sm:$0xff]
      %v1988 = vld [vmem:[#allocation2 + $0x8] sm:$0xf]
      %v1991 = vcombine.high %v1987, %v1987
      %1992 = vrot.lane.b32.xlu0 %v1987, 1
      %v1993 = vpop.permute.xlu0 %1992
      %1994 = vrot.lane.b32.xlu0 %v1991, 1
      %v1995 = vpop.permute.xlu0 %1994
      %1996 = vrot.lane.b32.xlu0 %v1988, 1
      %v1997 = vpop.permute.xlu0 %1996
      %v1998 = vsel %vm244, %v1993, %v1995
      %v1999 = vsel %vm244, %v1995, %v1997
      %v2002 = vsel %vm168, %v1998, 0.0
      %v2003 = vsel %vm169, %v1999, 0.0
      %v2006 = vrot.slane %v2002, 4
      %v2007 = vrot.slane %v2003, 4
      %2010 = vst [vmem:[#allocation3 + $0x10] sm:$0xf0] %v2006
      %2011 = vst [vmem:[#allocation3 + $0x18] sm:$0xf0] %v2007
      %v2012 = vld [vmem:[#allocation2 + $0x4] sm:$0xff]
      %v2014 = vcombine.high %v2012, %v2012
      %2016 = vst [vmem:[#allocation3 + $0x20] sm:$0xf] %v2012
      %2017 = vst [vmem:[#allocation3 + $0x28] sm:$0xf] %v2014
      %v2018 = vld [vmem:[#allocation2 + $0x4] sm:$0xff]
      %v2019 = vld [vmem:[#allocation2 + $0xc] sm:$0xf]
      %v2022 = vcombine.high %v2018, %v2018
      %2023 = vrot.lane.b32.xlu0 %v2018, 127
      %v2024 = vpop.permute.xlu0 %2023
      %2025 = vrot.lane.b32.xlu0 %v2022, 127
      %v2026 = vpop.permute.xlu0 %2025
      %2027 = vrot.lane.b32.xlu0 %v2019, 127
      %v2028 = vpop.permute.xlu0 %2027
      %v2029 = vsel %vm276, %v2024, %v2026
      %v2030 = vsel %vm276, %v2026, %v2028
      %v2033 = vsel %vm213, %v2029, 0.0
      %v2034 = vsel %vm214, %v2030, 0.0
      %v2037 = vrot.slane %v2033, 4
      %v2038 = vrot.slane %v2034, 4
      %2041 = vst [vmem:[#allocation3 + $0x20] sm:$0xf0] %v2037
      %2042 = vst [vmem:[#allocation3 + $0x28] sm:$0xf0] %v2038
      %v2043 = vld [vmem:[#allocation2 + $0x4] sm:$0xff]
      %v2044 = vld [vmem:[#allocation2 + $0xc] sm:$0xf]
      %v2047 = vcombine.high %v2043, %v2043
      %2048 = vrot.lane.b32.xlu0 %v2043, 113
      %v2049 = vpop.permute.xlu0 %2048
      %2050 = vrot.lane.b32.xlu0 %v2047, 113
      %v2051 = vpop.permute.xlu0 %2050
      %2052 = vrot.lane.b32.xlu0 %v2044, 113
      %v2053 = vpop.permute.xlu0 %2052
      %v2054 = vsel %vm302, %v2049, %v2051
      %v2055 = vsel %vm302, %v2051, %v2053
      %v2058 = vsel %vm168, %v2054, 0.0
      %v2059 = vsel %vm169, %v2055, 0.0
      %2060 = vst [vmem:[#allocation3 + $0x30] sm:$0xf] %v2058
      %2061 = vst [vmem:[#allocation3 + $0x38] sm:$0xf] %v2059
      %v2062 = vld [vmem:[#allocation2 + $0x4] sm:$0xff]
      %v2063 = vld [vmem:[#allocation2 + $0xc] sm:$0xf]
      %v2066 = vcombine.low %v2062, %v2062
      %v2067 = vcombine.low %v2063, %v2063
      %2068 = vrot.lane.b32.xlu0 %v2066, 112
      %v2069 = vpop.permute.xlu0 %2068
      %2070 = vrot.lane.b32.xlu0 %v2062, 112
      %v2071 = vpop.permute.xlu0 %2070
      %2072 = vrot.lane.b32.xlu0 %v2067, 112
      %v2073 = vpop.permute.xlu0 %2072
      %v2074 = vsel %vm323, %v2069, %v2071
      %v2075 = vsel %vm323, %v2071, %v2073
      %2078 = vst [vmem:[#allocation3 + $0x30] sm:$0xf0] %v2074
      %2079 = vst [vmem:[#allocation3 + $0x38] sm:$0xf0] %v2075
      %v2080 = vld [vmem:[#allocation2 + $0x4] sm:$0xff]
      %v2081 = vld [vmem:[#allocation2 + $0xc] sm:$0xf]
      %v2084 = vcombine.high %v2080, %v2080
      %2085 = vrot.lane.b32.xlu0 %v2080, 111
      %v2086 = vpop.permute.xlu0 %2085
      %2087 = vrot.lane.b32.xlu0 %v2084, 111
      %v2088 = vpop.permute.xlu0 %2087
      %2089 = vrot.lane.b32.xlu0 %v2081, 111
      %v2090 = vpop.permute.xlu0 %2089
      %v2091 = vsel %vm341, %v2086, %v2088
      %v2092 = vsel %vm341, %v2088, %v2090
      %v2095 = vsel %vm213, %v2091, 0.0
      %v2096 = vsel %vm214, %v2092, 0.0
      %2097 = vst [vmem:[#allocation3 + $0x40] sm:$0xf] %v2095
      %2098 = vst [vmem:[#allocation3 + $0x48] sm:$0xf] %v2096
      %s2099 = scalar_lea.vmem %s1, 32
      %v2100 = vld [vmem:[%s2099] sm:$0xf]
      %v2101 = vld [vmem:[#allocation3] sm:$0xff]
      %v2102 = vld [vmem:[#allocation3 + $0x8] sm:$0xff]
      %v2103 = vld [vmem:[#allocation3 + $0x10] sm:$0xff]
      %v2104 = vld [vmem:[#allocation3 + $0x18] sm:$0xff]
      %v2105 = vld [vmem:[#allocation3 + $0x20] sm:$0xff]
      %v2106 = vld [vmem:[#allocation3 + $0x28] sm:$0xff]
      %v2107 = vld [vmem:[#allocation3 + $0x30] sm:$0xff]
      %v2108 = vld [vmem:[#allocation3 + $0x38] sm:$0xff]
      %v2109 = vld [vmem:[#allocation3 + $0x40] sm:$0xf]
      %v2110 = vld [vmem:[#allocation3 + $0x48] sm:$0xf]
      %v2112 = vsel %vm418, %v2100, 0
      %v2115 = vsel %vm422, %v2109, 0
      %v2118 = vsel %vm422, %v2110, 0
      %2120 = vmatprep.subr.mxu0 %v2102
      %2121 = vmatpush1.msra.mxu0 %v2101
      %2122 = vmatprep.subr.mxu0 %v2104
      %2123 = vmatpush1.msra.mxu0 %v2103
      %2124 = vmatprep.subr.mxu0 %v2106
      %2125 = vmatpush1.msra.mxu0 %v2105
      %2126 = vmatprep.subr.mxu0 %v2108
      %2127 = vmatpush1.msra.mxu0 %v2107
      %2128 = vmatprep.subr.mxu0 %v2118
      %2129 = vmatpush1.msra.mxu0 %v2115
      %2130 = vmatprep.subr.mxu0 0.0
      %2131 = vmatpush1.msra.mxu0 0.0
      %2132 = vmatprep.subr.mxu0 0.0
      %2133 = vmatpush1.msra.mxu0 0.0
      %2134 = vmatprep.subr.mxu0 0.0
      %2135 = vmatpush1.msra.mxu0 0.0
      %2136 = vmatprep.subr.mxu0 0.0
      %2137 = vmatpush1.msra.mxu0 0.0
      %2138 = vmatprep.subr.mxu0 0.0
      %2139 = vmatpush1.msra.mxu0 0.0
      %2140 = vmatprep.subr.mxu0 0.0
      %2141 = vmatpush1.msra.mxu0 0.0
      %2142 = vmatprep.subr.mxu0 0.0
      %2143 = vmatpush1.msra.mxu0 0.0
      %2144 = vmatprep.subr.mxu0 0.0
      %2145 = vmatpush1.msra.mxu0 0.0
      %2146 = vmatprep.subr.mxu0 0.0
      %2147 = vmatpush1.msra.mxu0 0.0
      %2148 = vmatprep.subr.mxu0 0.0
      %2149 = vmatpush1.msra.mxu0 0.0
      %2150 = vmatprep.subr.mxu0 0.0
      %2151 = vmatpush1.msra.mxu0 0.0
      %2152 = vmatprep.subr.mxu0 0.0
      %2153 = vmatpush1.msra.mxu0 0.0
      %2154 = vmatprep.subr.mxu0 0.0
      %2155 = vmatpush1.msra.mxu0 0.0
      %2156 = vmatprep.subr.mxu0 0.0
      %2157 = vmatpush1.msra.mxu0 0.0
      %2158 = vmatprep.subr.mxu0 0.0
      %2159 = vmatpush1.msra.mxu0 0.0
      %2160 = vmatprep.subr.mxu0 0.0
      %2161 = vmatpush1.msra.mxu0 0.0
      %2162 = vmatprep.subr.mxu0 0.0
      %2163 = vmatpush1.msra.mxu0 0.0
      %2164 = vmatprep.subr.mxu0 0.0
      %2165 = vmatpush1.msra.mxu0 0.0
      %2166 = vmatprep.subr.mxu0 0.0
      %2167 = vmatpush1.msra.mxu0 0.0
      %2168 = vmatprep.subr.mxu0 0.0
      %2169 = vmatpush1.msra.mxu0 0.0
      %2170 = vmatprep.subr.mxu0 0.0
      %2171 = vmatpush1.msra.mxu0 0.0
      %2172 = vmatprep.subr.mxu0 0.0
      %2173 = vmatpush1.msra.mxu0 0.0
      %2174 = vmatprep.subr.mxu0 0.0
      %2175 = vmatpush1.msra.mxu0 0.0
      %2176 = vmatprep.subr.mxu0 0.0
      %2177 = vmatpush1.msra.mxu0 0.0
      %2178 = vmatprep.subr.mxu0 0.0
      %2179 = vmatpush1.msra.mxu0 0.0
      %2180 = vmatprep.subr.mxu0 0.0
      %2181 = vmatpush1.msra.mxu0 0.0
      %2182 = vmatprep.subr.mxu0 0.0
      %2183 = vmatpush1.msra.mxu0 0.0
      %2184 = vmatprep.mubr.f32.mxu0 0.0
      %2185 = vmatmul.mubr.f32.gmra.mrb[0].mxu0 %v2112
      %v2186 = vpop.f32.mrb[0].mxu0
      %v2187 = vadd.f32 0.0, %v2186
      %v2188 = vpop.f32.mrb[0].mxu0
      %v2189 = vadd.f32 0.0, %v2188
      %2190 = vdwg.mxu0
      %v2191 = vadd.f32 %v1263, %v2187
      %v2192 = vadd.f32 %v1265, %v2189
      %2193 = vst [vmem:[#allocation2 + $0x4] sm:$0xff] %v160
      %v2194 = vld [vmem:[#allocation2] sm:$0xff]
      %v2195 = vld [vmem:[#allocation2 + $0x8] sm:$0xf]
      %v2198 = vcombine.high %v2194, %v2194
      %2199 = vrot.lane.b32.xlu0 %v2194, 3
      %v2200 = vpop.permute.xlu0 %2199
      %2201 = vrot.lane.b32.xlu0 %v2198, 3
      %v2202 = vpop.permute.xlu0 %2201
      %2203 = vrot.lane.b32.xlu0 %v2195, 3
      %v2204 = vpop.permute.xlu0 %2203
      %v2205 = vsel %vm724, %v2200, %v2202
      %v2206 = vsel %vm724, %v2202, %v2204
      %v2209 = vsel %vm648, %v2205, 0.0
      %v2210 = vsel %vm649, %v2206, 0.0
      %2211 = vst [vmem:[#allocation3] sm:$0xf] %v2209
      %2212 = vst [vmem:[#allocation3 + $0x8] sm:$0xf] %v2210
      %v2213 = vld [vmem:[#allocation2] sm:$0xff]
      %v2214 = vld [vmem:[#allocation2 + $0x8] sm:$0xf]
      %v2217 = vcombine.high %v2213, %v2213
      %2218 = vrot.lane.b32.xlu0 %v2213, 2
      %v2219 = vpop.permute.xlu0 %2218
      %2220 = vrot.lane.b32.xlu0 %v2217, 2
      %v2221 = vpop.permute.xlu0 %2220
      %2222 = vrot.lane.b32.xlu0 %v2214, 2
      %v2223 = vpop.permute.xlu0 %2222
      %v2224 = vsel %vm1285, %v2219, %v2221
      %v2225 = vsel %vm1285, %v2221, %v2223
      %v2228 = vsel %vm1274, %v2224, 0.0
      %v2229 = vsel %vm1275, %v2225, 0.0
      %v2232 = vrot.slane %v2228, 4
      %v2233 = vrot.slane %v2229, 4
      %2236 = vst [vmem:[#allocation3] sm:$0xf0] %v2232
      %2237 = vst [vmem:[#allocation3 + $0x8] sm:$0xf0] %v2233
      %v2238 = vld [vmem:[#allocation2] sm:$0xff]
      %v2239 = vld [vmem:[#allocation2 + $0x8] sm:$0xf]
      %v2242 = vcombine.high %v2238, %v2238
      %2243 = vrot.lane.b32.xlu0 %v2238, 1
      %v2244 = vpop.permute.xlu0 %2243
      %2245 = vrot.lane.b32.xlu0 %v2242, 1
      %v2246 = vpop.permute.xlu0 %2245
      %2247 = vrot.lane.b32.xlu0 %v2239, 1
      %v2248 = vpop.permute.xlu0 %2247
      %v2249 = vsel %vm244, %v2244, %v2246
      %v2250 = vsel %vm244, %v2246, %v2248
      %v2253 = vsel %vm168, %v2249, 0.0
      %v2254 = vsel %vm169, %v2250, 0.0
      %2255 = vst [vmem:[#allocation3 + $0x10] sm:$0xf] %v2253
      %2256 = vst [vmem:[#allocation3 + $0x18] sm:$0xf] %v2254
      %v2257 = vld [vmem:[#allocation2 + $0x4] sm:$0xff]
      %v2259 = vcombine.low %v2257, %v2257
      %2261 = vst [vmem:[#allocation3 + $0x10] sm:$0xf0] %v2259
      %2262 = vst [vmem:[#allocation3 + $0x18] sm:$0xf0] %v2257
      %v2263 = vld [vmem:[#allocation2 + $0x4] sm:$0xff]
      %v2264 = vld [vmem:[#allocation2 + $0xc] sm:$0xf]
      %v2267 = vcombine.high %v2263, %v2263
      %2268 = vrot.lane.b32.xlu0 %v2263, 127
      %v2269 = vpop.permute.xlu0 %2268
      %2270 = vrot.lane.b32.xlu0 %v2267, 127
      %v2271 = vpop.permute.xlu0 %2270
      %2272 = vrot.lane.b32.xlu0 %v2264, 127
      %v2273 = vpop.permute.xlu0 %2272
      %v2274 = vsel %vm276, %v2269, %v2271
      %v2275 = vsel %vm276, %v2271, %v2273
      %v2278 = vsel %vm213, %v2274, 0.0
      %v2279 = vsel %vm214, %v2275, 0.0
      %2280 = vst [vmem:[#allocation3 + $0x20] sm:$0xf] %v2278
      %2281 = vst [vmem:[#allocation3 + $0x28] sm:$0xf] %v2279
      %v2282 = vld [vmem:[#allocation2 + $0x4] sm:$0xff]
      %v2283 = vld [vmem:[#allocation2 + $0xc] sm:$0xf]
      %v2286 = vcombine.high %v2282, %v2282
      %2287 = vrot.lane.b32.xlu0 %v2282, 126
      %v2288 = vpop.permute.xlu0 %2287
      %2289 = vrot.lane.b32.xlu0 %v2286, 126
      %v2290 = vpop.permute.xlu0 %2289
      %2291 = vrot.lane.b32.xlu0 %v2283, 126
      %v2292 = vpop.permute.xlu0 %2291
      %v2293 = vsel %vm1367, %v2288, %v2290
      %v2294 = vsel %vm1367, %v2290, %v2292
      %v2297 = vsel %vm1356, %v2293, 0.0
      %v2298 = vsel %vm1357, %v2294, 0.0
      %v2301 = vrot.slane %v2297, 4
      %v2302 = vrot.slane %v2298, 4
      %2305 = vst [vmem:[#allocation3 + $0x20] sm:$0xf0] %v2301
      %2306 = vst [vmem:[#allocation3 + $0x28] sm:$0xf0] %v2302
      %v2307 = vld [vmem:[#allocation2 + $0x4] sm:$0xff]
      %v2308 = vld [vmem:[#allocation2 + $0xc] sm:$0xf]
      %v2311 = vcombine.high %v2307, %v2307
      %2312 = vrot.lane.b32.xlu0 %v2307, 125
      %v2313 = vpop.permute.xlu0 %2312
      %2314 = vrot.lane.b32.xlu0 %v2311, 125
      %v2315 = vpop.permute.xlu0 %2314
      %2316 = vrot.lane.b32.xlu0 %v2308, 125
      %v2317 = vpop.permute.xlu0 %2316
      %v2318 = vsel %vm756, %v2313, %v2315
      %v2319 = vsel %vm756, %v2315, %v2317
      %v2322 = vsel %vm693, %v2318, 0.0
      %v2323 = vsel %vm694, %v2319, 0.0
      %2324 = vst [vmem:[#allocation3 + $0x30] sm:$0xf] %v2322
      %2325 = vst [vmem:[#allocation3 + $0x38] sm:$0xf] %v2323
      %s2326 = scalar_lea.vmem %s1, 36
      %v2327 = vld [vmem:[%s2326] sm:$0xf]
      %v2328 = vld [vmem:[#allocation3] sm:$0xff]
      %v2329 = vld [vmem:[#allocation3 + $0x8] sm:$0xff]
      %v2330 = vld [vmem:[#allocation3 + $0x10] sm:$0xff]
      %v2331 = vld [vmem:[#allocation3 + $0x18] sm:$0xff]
      %v2332 = vld [vmem:[#allocation3 + $0x20] sm:$0xff]
      %v2333 = vld [vmem:[#allocation3 + $0x28] sm:$0xff]
      %v2334 = vld [vmem:[#allocation3 + $0x30] sm:$0xff]
      %v2335 = vld [vmem:[#allocation3 + $0x38] sm:$0xff]
      %v2336 = vld [vmem:[#allocation3 + $0x40] sm:$0xf]
      %v2337 = vld [vmem:[#allocation3 + $0x48] sm:$0xf]
      %v2339 = vsel %vm418, %v2327, 0
      %v2342 = vsel %vm422, %v2336, 0
      %v2345 = vsel %vm422, %v2337, 0
      %2347 = vmatprep.subr.mxu0 %v2329
      %2348 = vmatpush1.msra.mxu0 %v2328
      %2349 = vmatprep.subr.mxu0 %v2331
      %2350 = vmatpush1.msra.mxu0 %v2330
      %2351 = vmatprep.subr.mxu0 %v2333
      %2352 = vmatpush1.msra.mxu0 %v2332
      %2353 = vmatprep.subr.mxu0 %v2335
      %2354 = vmatpush1.msra.mxu0 %v2334
      %2355 = vmatprep.subr.mxu0 %v2345
      %2356 = vmatpush1.msra.mxu0 %v2342
      %2357 = vmatprep.subr.mxu0 0.0
      %2358 = vmatpush1.msra.mxu0 0.0
      %2359 = vmatprep.subr.mxu0 0.0
      %2360 = vmatpush1.msra.mxu0 0.0
      %2361 = vmatprep.subr.mxu0 0.0
      %2362 = vmatpush1.msra.mxu0 0.0
      %2363 = vmatprep.subr.mxu0 0.0
      %2364 = vmatpush1.msra.mxu0 0.0
      %2365 = vmatprep.subr.mxu0 0.0
      %2366 = vmatpush1.msra.mxu0 0.0
      %2367 = vmatprep.subr.mxu0 0.0
      %2368 = vmatpush1.msra.mxu0 0.0
      %2369 = vmatprep.subr.mxu0 0.0
      %2370 = vmatpush1.msra.mxu0 0.0
      %2371 = vmatprep.subr.mxu0 0.0
      %2372 = vmatpush1.msra.mxu0 0.0
      %2373 = vmatprep.subr.mxu0 0.0
      %2374 = vmatpush1.msra.mxu0 0.0
      %2375 = vmatprep.subr.mxu0 0.0
      %2376 = vmatpush1.msra.mxu0 0.0
      %2377 = vmatprep.subr.mxu0 0.0
      %2378 = vmatpush1.msra.mxu0 0.0
      %2379 = vmatprep.subr.mxu0 0.0
      %2380 = vmatpush1.msra.mxu0 0.0
      %2381 = vmatprep.subr.mxu0 0.0
      %2382 = vmatpush1.msra.mxu0 0.0
      %2383 = vmatprep.subr.mxu0 0.0
      %2384 = vmatpush1.msra.mxu0 0.0
      %2385 = vmatprep.subr.mxu0 0.0
      %2386 = vmatpush1.msra.mxu0 0.0
      %2387 = vmatprep.subr.mxu0 0.0
      %2388 = vmatpush1.msra.mxu0 0.0
      %2389 = vmatprep.subr.mxu0 0.0
      %2390 = vmatpush1.msra.mxu0 0.0
      %2391 = vmatprep.subr.mxu0 0.0
      %2392 = vmatpush1.msra.mxu0 0.0
      %2393 = vmatprep.subr.mxu0 0.0
      %2394 = vmatpush1.msra.mxu0 0.0
      %2395 = vmatprep.subr.mxu0 0.0
      %2396 = vmatpush1.msra.mxu0 0.0
      %2397 = vmatprep.subr.mxu0 0.0
      %2398 = vmatpush1.msra.mxu0 0.0
      %2399 = vmatprep.subr.mxu0 0.0
      %2400 = vmatpush1.msra.mxu0 0.0
      %2401 = vmatprep.subr.mxu0 0.0
      %2402 = vmatpush1.msra.mxu0 0.0
      %2403 = vmatprep.subr.mxu0 0.0
      %2404 = vmatpush1.msra.mxu0 0.0
      %2405 = vmatprep.subr.mxu0 0.0
      %2406 = vmatpush1.msra.mxu0 0.0
      %2407 = vmatprep.subr.mxu0 0.0
      %2408 = vmatpush1.msra.mxu0 0.0
      %2409 = vmatprep.subr.mxu0 0.0
      %2410 = vmatpush1.msra.mxu0 0.0
      %2411 = vmatprep.mubr.f32.mxu0 0.0
      %2412 = vmatmul.mubr.f32.gmra.mrb[0].mxu0 %v2339
      %v2413 = vpop.f32.mrb[0].mxu0
      %v2414 = vadd.f32 0.0, %v2413
      %v2415 = vpop.f32.mrb[0].mxu0
      %v2416 = vadd.f32 0.0, %v2415
      %2417 = vdwg.mxu0
      %v2420 = vcombine.low %v2414, %v2416
      %2422 = vst [vmem:[#allocation2 + $0x4] sm:$0xff] %v2420
      %v2423 = vld [vmem:[#allocation2] sm:$0xff]
      %v2424 = vld [vmem:[#allocation2 + $0x8] sm:$0xf]
      %v2427 = vcombine.high %v2423, %v2423
      %2428 = vrot.lane.b32.xlu0 %v2423, 48
      %v2429 = vpop.permute.xlu0 %2428
      %2430 = vrot.lane.b32.xlu0 %v2427, 48
      %v2431 = vpop.permute.xlu0 %2430
      %2432 = vrot.lane.b32.xlu0 %v2424, 48
      %v2433 = vpop.permute.xlu0 %2432
      %v2434 = vsel %vm680, %v2429, %v2431
      %v2435 = vsel %vm680, %v2431, %v2433
      %2438 = vst [vmem:[#allocation3] sm:$0xf] %v2434
      %2439 = vst [vmem:[#allocation3 + $0x8] sm:$0xf] %v2435
      %v2440 = vld [vmem:[#allocation2] sm:$0xff]
      %v2441 = vld [vmem:[#allocation2 + $0x8] sm:$0xf]
      %v2444 = vcombine.low %v2440, %v2440
      %v2445 = vcombine.low %v2441, %v2441
      %2446 = vrot.lane.b32.xlu0 %v2444, 32
      %v2447 = vpop.permute.xlu0 %2446
      %2448 = vrot.lane.b32.xlu0 %v2440, 32
      %v2449 = vpop.permute.xlu0 %2448
      %2450 = vrot.lane.b32.xlu0 %v2445, 32
      %v2451 = vpop.permute.xlu0 %2450
      %v2452 = vsel %vm1484, %v2447, %v2449
      %v2453 = vsel %vm1484, %v2449, %v2451
      %2456 = vst [vmem:[#allocation3] sm:$0xf0] %v2452
      %2457 = vst [vmem:[#allocation3 + $0x8] sm:$0xf0] %v2453
      %v2458 = vld [vmem:[#allocation2] sm:$0xff]
      %v2459 = vld [vmem:[#allocation2 + $0x8] sm:$0xf]
      %v2462 = vcombine.high %v2458, %v2458
      %2463 = vrot.lane.b32.xlu0 %v2458, 16
      %v2464 = vpop.permute.xlu0 %2463
      %2465 = vrot.lane.b32.xlu0 %v2462, 16
      %v2466 = vpop.permute.xlu0 %2465
      %2467 = vrot.lane.b32.xlu0 %v2459, 16
      %v2468 = vpop.permute.xlu0 %2467
      %v2469 = vsel %vm200, %v2464, %v2466
      %v2470 = vsel %vm200, %v2466, %v2468
      %2473 = vst [vmem:[#allocation3 + $0x10] sm:$0xf] %v2469
      %2474 = vst [vmem:[#allocation3 + $0x18] sm:$0xf] %v2470
      %v2475 = vld [vmem:[#allocation2 + $0x4] sm:$0xff]
      %v2477 = vcombine.low %v2475, %v2475
      %2479 = vst [vmem:[#allocation3 + $0x10] sm:$0xf0] %v2477
      %2480 = vst [vmem:[#allocation3 + $0x18] sm:$0xf0] %v2475
      %v2481 = vld [vmem:[#allocation2 + $0x4] sm:$0xff]
      %v2482 = vld [vmem:[#allocation2 + $0xc] sm:$0xf]
      %v2485 = vcombine.high %v2481, %v2481
      %2486 = vrot.lane.b32.xlu0 %v2481, 112
      %v2487 = vpop.permute.xlu0 %2486
      %2488 = vrot.lane.b32.xlu0 %v2485, 112
      %v2489 = vpop.permute.xlu0 %2488
      %2490 = vrot.lane.b32.xlu0 %v2482, 112
      %v2491 = vpop.permute.xlu0 %2490
      %v2492 = vsel %vm323, %v2487, %v2489
      %v2493 = vsel %vm323, %v2489, %v2491
      %2496 = vst [vmem:[#allocation3 + $0x20] sm:$0xf] %v2492
      %2497 = vst [vmem:[#allocation3 + $0x28] sm:$0xf] %v2493
      %v2498 = vld [vmem:[#allocation2 + $0x4] sm:$0xff]
      %v2499 = vld [vmem:[#allocation2 + $0xc] sm:$0xf]
      %v2502 = vcombine.low %v2498, %v2498
      %v2503 = vcombine.low %v2499, %v2499
      %2504 = vrot.lane.b32.xlu0 %v2502, 96
      %v2505 = vpop.permute.xlu0 %2504
      %2506 = vrot.lane.b32.xlu0 %v2498, 96
      %v2507 = vpop.permute.xlu0 %2506
      %2508 = vrot.lane.b32.xlu0 %v2503, 96
      %v2509 = vpop.permute.xlu0 %2508
      %v2510 = vsel %vm1544, %v2505, %v2507
      %v2511 = vsel %vm1544, %v2507, %v2509
      %2514 = vst [vmem:[#allocation3 + $0x20] sm:$0xf0] %v2510
      %2515 = vst [vmem:[#allocation3 + $0x28] sm:$0xf0] %v2511
      %v2516 = vld [vmem:[#allocation2 + $0x4] sm:$0xff]
      %v2517 = vld [vmem:[#allocation2 + $0xc] sm:$0xf]
      %v2520 = vcombine.high %v2516, %v2516
      %2521 = vrot.lane.b32.xlu0 %v2516, 80
      %v2522 = vpop.permute.xlu0 %2521
      %2523 = vrot.lane.b32.xlu0 %v2520, 80
      %v2524 = vpop.permute.xlu0 %2523
      %2525 = vrot.lane.b32.xlu0 %v2517, 80
      %v2526 = vpop.permute.xlu0 %2525
      %v2527 = vsel %vm803, %v2522, %v2524
      %v2528 = vsel %vm803, %v2524, %v2526
      %2531 = vst [vmem:[#allocation3 + $0x30] sm:$0xf] %v2527
      %2532 = vst [vmem:[#allocation3 + $0x38] sm:$0xf] %v2528
      %s2533 = scalar_lea.vmem %s1, 40
      %v2534 = vld [vmem:[%s2533] sm:$0xf]
      %v2535 = vld [vmem:[#allocation3] sm:$0xff]
      %v2536 = vld [vmem:[#allocation3 + $0x8] sm:$0xff]
      %v2537 = vld [vmem:[#allocation3 + $0x10] sm:$0xff]
      %v2538 = vld [vmem:[#allocation3 + $0x18] sm:$0xff]
      %v2539 = vld [vmem:[#allocation3 + $0x20] sm:$0xff]
      %v2540 = vld [vmem:[#allocation3 + $0x28] sm:$0xff]
      %v2541 = vld [vmem:[#allocation3 + $0x30] sm:$0xff]
      %v2542 = vld [vmem:[#allocation3 + $0x38] sm:$0xff]
      %v2543 = vld [vmem:[#allocation3 + $0x40] sm:$0xf]
      %v2544 = vld [vmem:[#allocation3 + $0x48] sm:$0xf]
      %v2546 = vsel %vm418, %v2534, 0
      %v2549 = vsel %vm422, %v2543, 0
      %v2552 = vsel %vm422, %v2544, 0
      %2554 = vmatprep.subr.mxu0 %v2536
      %2555 = vmatpush1.msra.mxu0 %v2535
      %2556 = vmatprep.subr.mxu0 %v2538
      %2557 = vmatpush1.msra.mxu0 %v2537
      %2558 = vmatprep.subr.mxu0 %v2540
      %2559 = vmatpush1.msra.mxu0 %v2539
      %2560 = vmatprep.subr.mxu0 %v2542
      %2561 = vmatpush1.msra.mxu0 %v2541
      %2562 = vmatprep.subr.mxu0 %v2552
      %2563 = vmatpush1.msra.mxu0 %v2549
      %2564 = vmatprep.subr.mxu0 0.0
      %2565 = vmatpush1.msra.mxu0 0.0
      %2566 = vmatprep.subr.mxu0 0.0
      %2567 = vmatpush1.msra.mxu0 0.0
      %2568 = vmatprep.subr.mxu0 0.0
      %2569 = vmatpush1.msra.mxu0 0.0
      %2570 = vmatprep.subr.mxu0 0.0
      %2571 = vmatpush1.msra.mxu0 0.0
      %2572 = vmatprep.subr.mxu0 0.0
      %2573 = vmatpush1.msra.mxu0 0.0
      %2574 = vmatprep.subr.mxu0 0.0
      %2575 = vmatpush1.msra.mxu0 0.0
      %2576 = vmatprep.subr.mxu0 0.0
      %2577 = vmatpush1.msra.mxu0 0.0
      %2578 = vmatprep.subr.mxu0 0.0
      %2579 = vmatpush1.msra.mxu0 0.0
      %2580 = vmatprep.subr.mxu0 0.0
      %2581 = vmatpush1.msra.mxu0 0.0
      %2582 = vmatprep.subr.mxu0 0.0
      %2583 = vmatpush1.msra.mxu0 0.0
      %2584 = vmatprep.subr.mxu0 0.0
      %2585 = vmatpush1.msra.mxu0 0.0
      %2586 = vmatprep.subr.mxu0 0.0
      %2587 = vmatpush1.msra.mxu0 0.0
      %2588 = vmatprep.subr.mxu0 0.0
      %2589 = vmatpush1.msra.mxu0 0.0
      %2590 = vmatprep.subr.mxu0 0.0
      %2591 = vmatpush1.msra.mxu0 0.0
      %2592 = vmatprep.subr.mxu0 0.0
      %2593 = vmatpush1.msra.mxu0 0.0
      %2594 = vmatprep.subr.mxu0 0.0
      %2595 = vmatpush1.msra.mxu0 0.0
      %2596 = vmatprep.subr.mxu0 0.0
      %2597 = vmatpush1.msra.mxu0 0.0
      %2598 = vmatprep.subr.mxu0 0.0
      %2599 = vmatpush1.msra.mxu0 0.0
      %2600 = vmatprep.subr.mxu0 0.0
      %2601 = vmatpush1.msra.mxu0 0.0
      %2602 = vmatprep.subr.mxu0 0.0
      %2603 = vmatpush1.msra.mxu0 0.0
      %2604 = vmatprep.subr.mxu0 0.0
      %2605 = vmatpush1.msra.mxu0 0.0
      %2606 = vmatprep.subr.mxu0 0.0
      %2607 = vmatpush1.msra.mxu0 0.0
      %2608 = vmatprep.subr.mxu0 0.0
      %2609 = vmatpush1.msra.mxu0 0.0
      %2610 = vmatprep.subr.mxu0 0.0
      %2611 = vmatpush1.msra.mxu0 0.0
      %2612 = vmatprep.subr.mxu0 0.0
      %2613 = vmatpush1.msra.mxu0 0.0
      %2614 = vmatprep.subr.mxu0 0.0
      %2615 = vmatpush1.msra.mxu0 0.0
      %2616 = vmatprep.subr.mxu0 0.0
      %2617 = vmatpush1.msra.mxu0 0.0
      %2618 = vmatprep.mubr.f32.mxu0 0.0
      %2619 = vmatmul.mubr.f32.gmra.mrb[0].mxu0 %v2546
      %v2620 = vpop.f32.mrb[0].mxu0
      %v2621 = vadd.f32 0.0, %v2620
      %v2622 = vpop.f32.mrb[0].mxu0
      %v2623 = vadd.f32 0.0, %v2622
      %2624 = vdwg.mxu0
      %v2627 = vcombine.low %v2621, %v2623
      %2629 = vst [vmem:[#allocation2 + $0x4] sm:$0xff] %v2627
      %v2630 = vld [vmem:[#allocation2] sm:$0xff]
      %v2631 = vld [vmem:[#allocation2 + $0x8] sm:$0xf]
      %vm2632 = vcmp.ge.f32.partialorder %v158, 7.0
      %vm2633 = vcmp.ge.f32.partialorder %v159, 7.0
      %v2634 = vsel %vm2632, 1, 0
      %v2635 = vsel %vm2633, 1, 0
      %vm2636 = vcmp.eq.s32.totalorder %v2634, 1
      %vm2637 = vcmp.eq.s32.totalorder %v2635, 1
      %v2640 = vcombine.high %v2630, %v2630
      %2641 = vrot.lane.b32.xlu0 %v2630, 119
      %v2642 = vpop.permute.xlu0 %2641
      %2643 = vrot.lane.b32.xlu0 %v2640, 119
      %v2644 = vpop.permute.xlu0 %2643
      %2645 = vrot.lane.b32.xlu0 %v2631, 119
      %v2646 = vpop.permute.xlu0 %2645
      %vm2647 = vcmask 973824
      %v2648 = vsel %vm2647, %v2642, %v2644
      %v2649 = vsel %vm2647, %v2644, %v2646
      %v2652 = vsel %vm2636, %v2648, 0.0
      %v2653 = vsel %vm2637, %v2649, 0.0
      %2654 = vst [vmem:[#allocation3] sm:$0xf] %v2652
      %2655 = vst [vmem:[#allocation3 + $0x8] sm:$0xf] %v2653
      %v2656 = vld [vmem:[#allocation2] sm:$0xff]
      %v2657 = vld [vmem:[#allocation2 + $0x8] sm:$0xf]
      %v2660 = vcombine.low %v2656, %v2656
      %v2661 = vcombine.low %v2657, %v2657
      %2662 = vrot.lane.b32.xlu0 %v2660, 112
      %v2663 = vpop.permute.xlu0 %2662
      %2664 = vrot.lane.b32.xlu0 %v2656, 112
      %v2665 = vpop.permute.xlu0 %2664
      %2666 = vrot.lane.b32.xlu0 %v2661, 112
      %v2667 = vpop.permute.xlu0 %2666
      %v2668 = vsel %vm323, %v2663, %v2665
      %v2669 = vsel %vm323, %v2665, %v2667
      %2672 = vst [vmem:[#allocation3] sm:$0xf0] %v2668
      %2673 = vst [vmem:[#allocation3 + $0x8] sm:$0xf0] %v2669
      %v2674 = vld [vmem:[#allocation2] sm:$0xff]
      %v2675 = vld [vmem:[#allocation2 + $0x8] sm:$0xf]
      %vm2676 = vcmp.lt.f32.partialorder %v158, 9.0
      %vm2677 = vcmp.lt.f32.partialorder %v159, 9.0
      %v2678 = vsel %vm2676, 1, 0
      %v2679 = vsel %vm2677, 1, 0
      %vm2680 = vcmp.eq.s32.totalorder %v2678, 1
      %vm2681 = vcmp.eq.s32.totalorder %v2679, 1
      %v2684 = vcombine.high %v2674, %v2674
      %2685 = vrot.lane.b32.xlu0 %v2674, 105
      %v2686 = vpop.permute.xlu0 %2685
      %2687 = vrot.lane.b32.xlu0 %v2684, 105
      %v2688 = vpop.permute.xlu0 %2687
      %2689 = vrot.lane.b32.xlu0 %v2675, 105
      %v2690 = vpop.permute.xlu0 %2689
      %vm2691 = vcmask 859136
      %v2692 = vsel %vm2691, %v2686, %v2688
      %v2693 = vsel %vm2691, %v2688, %v2690
      %v2696 = vsel %vm2680, %v2692, 0.0
      %v2697 = vsel %vm2681, %v2693, 0.0
      %2698 = vst [vmem:[#allocation3 + $0x10] sm:$0xf] %v2696
      %2699 = vst [vmem:[#allocation3 + $0x18] sm:$0xf] %v2697
      %v2700 = vld [vmem:[#allocation2] sm:$0xff]
      %v2701 = vld [vmem:[#allocation2 + $0x8] sm:$0xf]
      %v2704 = vcombine.high %v2700, %v2700
      %2705 = vrot.lane.b32.xlu0 %v2700, 7
      %v2706 = vpop.permute.xlu0 %2705
      %2707 = vrot.lane.b32.xlu0 %v2704, 7
      %v2708 = vpop.permute.xlu0 %2707
      %2709 = vrot.lane.b32.xlu0 %v2701, 7
      %v2710 = vpop.permute.xlu0 %2709
      %vm2711 = vcmask 56320
      %v2712 = vsel %vm2711, %v2706, %v2708
      %v2713 = vsel %vm2711, %v2708, %v2710
      %v2716 = vsel %vm2636, %v2712, 0.0
      %v2717 = vsel %vm2637, %v2713, 0.0
      %v2720 = vrot.slane %v2716, 4
      %v2721 = vrot.slane %v2717, 4
      %2724 = vst [vmem:[#allocation3 + $0x10] sm:$0xf0] %v2720
      %2725 = vst [vmem:[#allocation3 + $0x18] sm:$0xf0] %v2721
      %v2726 = vld [vmem:[#allocation2 + $0x4] sm:$0xff]
      %v2728 = vcombine.high %v2726, %v2726
      %2730 = vst [vmem:[#allocation3 + $0x20] sm:$0xf] %v2726
      %2731 = vst [vmem:[#allocation3 + $0x28] sm:$0xf] %v2728
      %v2732 = vld [vmem:[#allocation2 + $0x4] sm:$0xff]
      %v2733 = vld [vmem:[#allocation2 + $0xc] sm:$0xf]
      %v2736 = vcombine.high %v2732, %v2732
      %2737 = vrot.lane.b32.xlu0 %v2732, 121
      %v2738 = vpop.permute.xlu0 %2737
      %2739 = vrot.lane.b32.xlu0 %v2736, 121
      %v2740 = vpop.permute.xlu0 %2739
      %2741 = vrot.lane.b32.xlu0 %v2733, 121
      %v2742 = vpop.permute.xlu0 %2741
      %vm2743 = vcmask 990208
      %v2744 = vsel %vm2743, %v2738, %v2740
      %v2745 = vsel %vm2743, %v2740, %v2742
      %v2748 = vsel %vm2680, %v2744, 0.0
      %v2749 = vsel %vm2681, %v2745, 0.0
      %v2752 = vrot.slane %v2748, 4
      %v2753 = vrot.slane %v2749, 4
      %2756 = vst [vmem:[#allocation3 + $0x20] sm:$0xf0] %v2752
      %2757 = vst [vmem:[#allocation3 + $0x28] sm:$0xf0] %v2753
      %v2758 = vld [vmem:[#allocation2 + $0x4] sm:$0xff]
      %v2759 = vld [vmem:[#allocation2 + $0xc] sm:$0xf]
      %v2762 = vcombine.high %v2758, %v2758
      %2763 = vrot.lane.b32.xlu0 %v2758, 23
      %v2764 = vpop.permute.xlu0 %2763
      %2765 = vrot.lane.b32.xlu0 %v2762, 23
      %v2766 = vpop.permute.xlu0 %2765
      %2767 = vrot.lane.b32.xlu0 %v2759, 23
      %v2768 = vpop.permute.xlu0 %2767
      %vm2769 = vcmask 187392
      %v2770 = vsel %vm2769, %v2764, %v2766
      %v2771 = vsel %vm2769, %v2766, %v2768
      %v2774 = vsel %vm2636, %v2770, 0.0
      %v2775 = vsel %vm2637, %v2771, 0.0
      %2776 = vst [vmem:[#allocation3 + $0x30] sm:$0xf] %v2774
      %2777 = vst [vmem:[#allocation3 + $0x38] sm:$0xf] %v2775
      %v2778 = vld [vmem:[#allocation2 + $0x4] sm:$0xff]
      %v2779 = vld [vmem:[#allocation2 + $0xc] sm:$0xf]
      %v2782 = vcombine.low %v2778, %v2778
      %v2783 = vcombine.low %v2779, %v2779
      %2784 = vrot.lane.b32.xlu0 %v2782, 16
      %v2785 = vpop.permute.xlu0 %2784
      %2786 = vrot.lane.b32.xlu0 %v2778, 16
      %v2787 = vpop.permute.xlu0 %2786
      %2788 = vrot.lane.b32.xlu0 %v2783, 16
      %v2789 = vpop.permute.xlu0 %2788
      %v2790 = vsel %vm200, %v2785, %v2787
      %v2791 = vsel %vm200, %v2787, %v2789
      %2794 = vst [vmem:[#allocation3 + $0x30] sm:$0xf0] %v2790
      %2795 = vst [vmem:[#allocation3 + $0x38] sm:$0xf0] %v2791
      %v2796 = vld [vmem:[#allocation2 + $0x4] sm:$0xff]
      %v2797 = vld [vmem:[#allocation2 + $0xc] sm:$0xf]
      %v2800 = vcombine.high %v2796, %v2796
      %2801 = vrot.lane.b32.xlu0 %v2796, 9
      %v2802 = vpop.permute.xlu0 %2801
      %2803 = vrot.lane.b32.xlu0 %v2800, 9
      %v2804 = vpop.permute.xlu0 %2803
      %2805 = vrot.lane.b32.xlu0 %v2797, 9
      %v2806 = vpop.permute.xlu0 %2805
      %vm2807 = vcmask 72704
      %v2808 = vsel %vm2807, %v2802, %v2804
      %v2809 = vsel %vm2807, %v2804, %v2806
      %v2812 = vsel %vm2680, %v2808, 0.0
      %v2813 = vsel %vm2681, %v2809, 0.0
      %2814 = vst [vmem:[#allocation3 + $0x40] sm:$0xf] %v2812
      %2815 = vst [vmem:[#allocation3 + $0x48] sm:$0xf] %v2813
      %s2816 = scalar_lea.vmem %s1, 44
      %v2817 = vld [vmem:[%s2816] sm:$0xf]
      %v2818 = vld [vmem:[#allocation3] sm:$0xff]
      %v2819 = vld [vmem:[#allocation3 + $0x8] sm:$0xff]
      %v2820 = vld [vmem:[#allocation3 + $0x10] sm:$0xff]
      %v2821 = vld [vmem:[#allocation3 + $0x18] sm:$0xff]
      %v2822 = vld [vmem:[#allocation3 + $0x20] sm:$0xff]
      %v2823 = vld [vmem:[#allocation3 + $0x28] sm:$0xff]
      %v2824 = vld [vmem:[#allocation3 + $0x30] sm:$0xff]
      %v2825 = vld [vmem:[#allocation3 + $0x38] sm:$0xff]
      %v2826 = vld [vmem:[#allocation3 + $0x40] sm:$0xf]
      %v2827 = vld [vmem:[#allocation3 + $0x48] sm:$0xf]
      %v2829 = vsel %vm418, %v2817, 0
      %v2832 = vsel %vm422, %v2826, 0
      %v2835 = vsel %vm422, %v2827, 0
      %2837 = vmatprep.subr.mxu0 %v2819
      %2838 = vmatpush1.msra.mxu0 %v2818
      %2839 = vmatprep.subr.mxu0 %v2821
      %2840 = vmatpush1.msra.mxu0 %v2820
      %2841 = vmatprep.subr.mxu0 %v2823
      %2842 = vmatpush1.msra.mxu0 %v2822
      %2843 = vmatprep.subr.mxu0 %v2825
      %2844 = vmatpush1.msra.mxu0 %v2824
      %2845 = vmatprep.subr.mxu0 %v2835
      %2846 = vmatpush1.msra.mxu0 %v2832
      %2847 = vmatprep.subr.mxu0 0.0
      %2848 = vmatpush1.msra.mxu0 0.0
      %2849 = vmatprep.subr.mxu0 0.0
      %2850 = vmatpush1.msra.mxu0 0.0
      %2851 = vmatprep.subr.mxu0 0.0
      %2852 = vmatpush1.msra.mxu0 0.0
      %2853 = vmatprep.subr.mxu0 0.0
      %2854 = vmatpush1.msra.mxu0 0.0
      %2855 = vmatprep.subr.mxu0 0.0
      %2856 = vmatpush1.msra.mxu0 0.0
      %2857 = vmatprep.subr.mxu0 0.0
      %2858 = vmatpush1.msra.mxu0 0.0
      %2859 = vmatprep.subr.mxu0 0.0
      %2860 = vmatpush1.msra.mxu0 0.0
      %2861 = vmatprep.subr.mxu0 0.0
      %2862 = vmatpush1.msra.mxu0 0.0
      %2863 = vmatprep.subr.mxu0 0.0
      %2864 = vmatpush1.msra.mxu0 0.0
      %2865 = vmatprep.subr.mxu0 0.0
      %2866 = vmatpush1.msra.mxu0 0.0
      %2867 = vmatprep.subr.mxu0 0.0
      %2868 = vmatpush1.msra.mxu0 0.0
      %2869 = vmatprep.subr.mxu0 0.0
      %2870 = vmatpush1.msra.mxu0 0.0
      %2871 = vmatprep.subr.mxu0 0.0
      %2872 = vmatpush1.msra.mxu0 0.0
      %2873 = vmatprep.subr.mxu0 0.0
      %2874 = vmatpush1.msra.mxu0 0.0
      %2875 = vmatprep.subr.mxu0 0.0
      %2876 = vmatpush1.msra.mxu0 0.0
      %2877 = vmatprep.subr.mxu0 0.0
      %2878 = vmatpush1.msra.mxu0 0.0
      %2879 = vmatprep.subr.mxu0 0.0
      %2880 = vmatpush1.msra.mxu0 0.0
      %2881 = vmatprep.subr.mxu0 0.0
      %2882 = vmatpush1.msra.mxu0 0.0
      %2883 = vmatprep.subr.mxu0 0.0
      %2884 = vmatpush1.msra.mxu0 0.0
      %2885 = vmatprep.subr.mxu0 0.0
      %2886 = vmatpush1.msra.mxu0 0.0
      %2887 = vmatprep.subr.mxu0 0.0
      %2888 = vmatpush1.msra.mxu0 0.0
      %2889 = vmatprep.subr.mxu0 0.0
      %2890 = vmatpush1.msra.mxu0 0.0
      %2891 = vmatprep.subr.mxu0 0.0
      %2892 = vmatpush1.msra.mxu0 0.0
      %2893 = vmatprep.subr.mxu0 0.0
      %2894 = vmatpush1.msra.mxu0 0.0
      %2895 = vmatprep.subr.mxu0 0.0
      %2896 = vmatpush1.msra.mxu0 0.0
      %2897 = vmatprep.subr.mxu0 0.0
      %2898 = vmatpush1.msra.mxu0 0.0
      %2899 = vmatprep.subr.mxu0 0.0
      %2900 = vmatpush1.msra.mxu0 0.0
      %2901 = vmatprep.mubr.f32.mxu0 0.0
      %2902 = vmatmul.mubr.f32.gmra.mrb[0].mxu0 %v2829
      %v2903 = vpop.f32.mrb[0].mxu0
      %v2904 = vadd.f32 0.0, %v2903
      %v2905 = vpop.f32.mrb[0].mxu0
      %v2906 = vadd.f32 0.0, %v2905
      %2907 = vdwg.mxu0
      %v2910 = vcombine.low %v2904, %v2906
      %2912 = vst [vmem:[#allocation2 + $0x4] sm:$0xff] %v2910
      %v2913 = vld [vmem:[#allocation2] sm:$0xff]
      %v2914 = vld [vmem:[#allocation2 + $0x8] sm:$0xf]
      %v2917 = vcombine.high %v2913, %v2913
      %2918 = vrot.lane.b32.xlu0 %v2913, 17
      %v2919 = vpop.permute.xlu0 %2918
      %2920 = vrot.lane.b32.xlu0 %v2917, 17
      %v2921 = vpop.permute.xlu0 %2920
      %2922 = vrot.lane.b32.xlu0 %v2914, 17
      %v2923 = vpop.permute.xlu0 %2922
      %v2924 = vsel %vm179, %v2919, %v2921
      %v2925 = vsel %vm179, %v2921, %v2923
      %v2928 = vsel %vm168, %v2924, 0.0
      %v2929 = vsel %vm169, %v2925, 0.0
      %2930 = vst [vmem:[#allocation3] sm:$0xf] %v2928
      %2931 = vst [vmem:[#allocation3 + $0x8] sm:$0xf] %v2929
      %v2932 = vld [vmem:[#allocation2] sm:$0xff]
      %v2933 = vld [vmem:[#allocation2 + $0x8] sm:$0xf]
      %v2936 = vcombine.low %v2932, %v2932
      %v2937 = vcombine.low %v2933, %v2933
      %2938 = vrot.lane.b32.xlu0 %v2936, 16
      %v2939 = vpop.permute.xlu0 %2938
      %2940 = vrot.lane.b32.xlu0 %v2932, 16
      %v2941 = vpop.permute.xlu0 %2940
      %2942 = vrot.lane.b32.xlu0 %v2937, 16
      %v2943 = vpop.permute.xlu0 %2942
      %v2944 = vsel %vm200, %v2939, %v2941
      %v2945 = vsel %vm200, %v2941, %v2943
      %2948 = vst [vmem:[#allocation3] sm:$0xf0] %v2944
      %2949 = vst [vmem:[#allocation3 + $0x8] sm:$0xf0] %v2945
      %v2950 = vld [vmem:[#allocation2] sm:$0xff]
      %v2951 = vld [vmem:[#allocation2 + $0x8] sm:$0xf]
      %v2954 = vcombine.high %v2950, %v2950
      %2955 = vrot.lane.b32.xlu0 %v2950, 15
      %v2956 = vpop.permute.xlu0 %2955
      %2957 = vrot.lane.b32.xlu0 %v2954, 15
      %v2958 = vpop.permute.xlu0 %2957
      %2959 = vrot.lane.b32.xlu0 %v2951, 15
      %v2960 = vpop.permute.xlu0 %2959
      %v2961 = vsel %vm224, %v2956, %v2958
      %v2962 = vsel %vm224, %v2958, %v2960
      %v2965 = vsel %vm213, %v2961, 0.0
      %v2966 = vsel %vm214, %v2962, 0.0
      %2967 = vst [vmem:[#allocation3 + $0x10] sm:$0xf] %v2965
      %2968 = vst [vmem:[#allocation3 + $0x18] sm:$0xf] %v2966
      %v2969 = vld [vmem:[#allocation2] sm:$0xff]
      %v2970 = vld [vmem:[#allocation2 + $0x8] sm:$0xf]
      %v2973 = vcombine.high %v2969, %v2969
      %2974 = vrot.lane.b32.xlu0 %v2969, 1
      %v2975 = vpop.permute.xlu0 %2974
      %2976 = vrot.lane.b32.xlu0 %v2973, 1
      %v2977 = vpop.permute.xlu0 %2976
      %2978 = vrot.lane.b32.xlu0 %v2970, 1
      %v2979 = vpop.permute.xlu0 %2978
      %v2980 = vsel %vm244, %v2975, %v2977
      %v2981 = vsel %vm244, %v2977, %v2979
      %v2984 = vsel %vm168, %v2980, 0.0
      %v2985 = vsel %vm169, %v2981, 0.0
      %v2988 = vrot.slane %v2984, 4
      %v2989 = vrot.slane %v2985, 4
      %2992 = vst [vmem:[#allocation3 + $0x10] sm:$0xf0] %v2988
      %2993 = vst [vmem:[#allocation3 + $0x18] sm:$0xf0] %v2989
      %v2994 = vld [vmem:[#allocation2 + $0x4] sm:$0xff]
      %v2996 = vcombine.high %v2994, %v2994
      %2998 = vst [vmem:[#allocation3 + $0x20] sm:$0xf] %v2994
      %2999 = vst [vmem:[#allocation3 + $0x28] sm:$0xf] %v2996
      %v3000 = vld [vmem:[#allocation2 + $0x4] sm:$0xff]
      %v3001 = vld [vmem:[#allocation2 + $0xc] sm:$0xf]
      %v3004 = vcombine.high %v3000, %v3000
      %3005 = vrot.lane.b32.xlu0 %v3000, 127
      %v3006 = vpop.permute.xlu0 %3005
      %3007 = vrot.lane.b32.xlu0 %v3004, 127
      %v3008 = vpop.permute.xlu0 %3007
      %3009 = vrot.lane.b32.xlu0 %v3001, 127
      %v3010 = vpop.permute.xlu0 %3009
      %v3011 = vsel %vm276, %v3006, %v3008
      %v3012 = vsel %vm276, %v3008, %v3010
      %v3015 = vsel %vm213, %v3011, 0.0
      %v3016 = vsel %vm214, %v3012, 0.0
      %v3019 = vrot.slane %v3015, 4
      %v3020 = vrot.slane %v3016, 4
      %3023 = vst [vmem:[#allocation3 + $0x20] sm:$0xf0] %v3019
      %3024 = vst [vmem:[#allocation3 + $0x28] sm:$0xf0] %v3020
      %v3025 = vld [vmem:[#allocation2 + $0x4] sm:$0xff]
      %v3026 = vld [vmem:[#allocation2 + $0xc] sm:$0xf]
      %v3029 = vcombine.high %v3025, %v3025
      %3030 = vrot.lane.b32.xlu0 %v3025, 113
      %v3031 = vpop.permute.xlu0 %3030
      %3032 = vrot.lane.b32.xlu0 %v3029, 113
      %v3033 = vpop.permute.xlu0 %3032
      %3034 = vrot.lane.b32.xlu0 %v3026, 113
      %v3035 = vpop.permute.xlu0 %3034
      %v3036 = vsel %vm302, %v3031, %v3033
      %v3037 = vsel %vm302, %v3033, %v3035
      %v3040 = vsel %vm168, %v3036, 0.0
      %v3041 = vsel %vm169, %v3037, 0.0
      %3042 = vst [vmem:[#allocation3 + $0x30] sm:$0xf] %v3040
      %3043 = vst [vmem:[#allocation3 + $0x38] sm:$0xf] %v3041
      %v3044 = vld [vmem:[#allocation2 + $0x4] sm:$0xff]
      %v3045 = vld [vmem:[#allocation2 + $0xc] sm:$0xf]
      %v3048 = vcombine.low %v3044, %v3044
      %v3049 = vcombine.low %v3045, %v3045
      %3050 = vrot.lane.b32.xlu0 %v3048, 112
      %v3051 = vpop.permute.xlu0 %3050
      %3052 = vrot.lane.b32.xlu0 %v3044, 112
      %v3053 = vpop.permute.xlu0 %3052
      %3054 = vrot.lane.b32.xlu0 %v3049, 112
      %v3055 = vpop.permute.xlu0 %3054
      %v3056 = vsel %vm323, %v3051, %v3053
      %v3057 = vsel %vm323, %v3053, %v3055
      %3060 = vst [vmem:[#allocation3 + $0x30] sm:$0xf0] %v3056
      %3061 = vst [vmem:[#allocation3 + $0x38] sm:$0xf0] %v3057
      %v3062 = vld [vmem:[#allocation2 + $0x4] sm:$0xff]
      %v3063 = vld [vmem:[#allocation2 + $0xc] sm:$0xf]
      %v3066 = vcombine.high %v3062, %v3062
      %3067 = vrot.lane.b32.xlu0 %v3062, 111
      %v3068 = vpop.permute.xlu0 %3067
      %3069 = vrot.lane.b32.xlu0 %v3066, 111
      %v3070 = vpop.permute.xlu0 %3069
      %3071 = vrot.lane.b32.xlu0 %v3063, 111
      %v3072 = vpop.permute.xlu0 %3071
      %v3073 = vsel %vm341, %v3068, %v3070
      %v3074 = vsel %vm341, %v3070, %v3072
      %v3077 = vsel %vm213, %v3073, 0.0
      %v3078 = vsel %vm214, %v3074, 0.0
      %3079 = vst [vmem:[#allocation3 + $0x40] sm:$0xf] %v3077
      %3080 = vst [vmem:[#allocation3 + $0x48] sm:$0xf] %v3078
      %s3081 = scalar_lea.vmem %s1, 48
      %v3082 = vld [vmem:[%s3081] sm:$0xf]
      %v3083 = vld [vmem:[#allocation3] sm:$0xff]
      %v3084 = vld [vmem:[#allocation3 + $0x8] sm:$0xff]
      %v3085 = vld [vmem:[#allocation3 + $0x10] sm:$0xff]
      %v3086 = vld [vmem:[#allocation3 + $0x18] sm:$0xff]
      %v3087 = vld [vmem:[#allocation3 + $0x20] sm:$0xff]
      %v3088 = vld [vmem:[#allocation3 + $0x28] sm:$0xff]
      %v3089 = vld [vmem:[#allocation3 + $0x30] sm:$0xff]
      %v3090 = vld [vmem:[#allocation3 + $0x38] sm:$0xff]
      %v3091 = vld [vmem:[#allocation3 + $0x40] sm:$0xf]
      %v3092 = vld [vmem:[#allocation3 + $0x48] sm:$0xf]
      %v3094 = vsel %vm418, %v3082, 0
      %v3097 = vsel %vm422, %v3091, 0
      %v3100 = vsel %vm422, %v3092, 0
      %3102 = vmatprep.subr.mxu0 %v3084
      %3103 = vmatpush1.msra.mxu0 %v3083
      %3104 = vmatprep.subr.mxu0 %v3086
      %3105 = vmatpush1.msra.mxu0 %v3085
      %3106 = vmatprep.subr.mxu0 %v3088
      %3107 = vmatpush1.msra.mxu0 %v3087
      %3108 = vmatprep.subr.mxu0 %v3090
      %3109 = vmatpush1.msra.mxu0 %v3089
      %3110 = vmatprep.subr.mxu0 %v3100
      %3111 = vmatpush1.msra.mxu0 %v3097
      %3112 = vmatprep.subr.mxu0 0.0
      %3113 = vmatpush1.msra.mxu0 0.0
      %3114 = vmatprep.subr.mxu0 0.0
      %3115 = vmatpush1.msra.mxu0 0.0
      %3116 = vmatprep.subr.mxu0 0.0
      %3117 = vmatpush1.msra.mxu0 0.0
      %3118 = vmatprep.subr.mxu0 0.0
      %3119 = vmatpush1.msra.mxu0 0.0
      %3120 = vmatprep.subr.mxu0 0.0
      %3121 = vmatpush1.msra.mxu0 0.0
      %3122 = vmatprep.subr.mxu0 0.0
      %3123 = vmatpush1.msra.mxu0 0.0
      %3124 = vmatprep.subr.mxu0 0.0
      %3125 = vmatpush1.msra.mxu0 0.0
      %3126 = vmatprep.subr.mxu0 0.0
      %3127 = vmatpush1.msra.mxu0 0.0
      %3128 = vmatprep.subr.mxu0 0.0
      %3129 = vmatpush1.msra.mxu0 0.0
      %3130 = vmatprep.subr.mxu0 0.0
      %3131 = vmatpush1.msra.mxu0 0.0
      %3132 = vmatprep.subr.mxu0 0.0
      %3133 = vmatpush1.msra.mxu0 0.0
      %3134 = vmatprep.subr.mxu0 0.0
      %3135 = vmatpush1.msra.mxu0 0.0
      %3136 = vmatprep.subr.mxu0 0.0
      %3137 = vmatpush1.msra.mxu0 0.0
      %3138 = vmatprep.subr.mxu0 0.0
      %3139 = vmatpush1.msra.mxu0 0.0
      %3140 = vmatprep.subr.mxu0 0.0
      %3141 = vmatpush1.msra.mxu0 0.0
      %3142 = vmatprep.subr.mxu0 0.0
      %3143 = vmatpush1.msra.mxu0 0.0
      %3144 = vmatprep.subr.mxu0 0.0
      %3145 = vmatpush1.msra.mxu0 0.0
      %3146 = vmatprep.subr.mxu0 0.0
      %3147 = vmatpush1.msra.mxu0 0.0
      %3148 = vmatprep.subr.mxu0 0.0
      %3149 = vmatpush1.msra.mxu0 0.0
      %3150 = vmatprep.subr.mxu0 0.0
      %3151 = vmatpush1.msra.mxu0 0.0
      %3152 = vmatprep.subr.mxu0 0.0
      %3153 = vmatpush1.msra.mxu0 0.0
      %3154 = vmatprep.subr.mxu0 0.0
      %3155 = vmatpush1.msra.mxu0 0.0
      %3156 = vmatprep.subr.mxu0 0.0
      %3157 = vmatpush1.msra.mxu0 0.0
      %3158 = vmatprep.subr.mxu0 0.0
      %3159 = vmatpush1.msra.mxu0 0.0
      %3160 = vmatprep.subr.mxu0 0.0
      %3161 = vmatpush1.msra.mxu0 0.0
      %3162 = vmatprep.subr.mxu0 0.0
      %3163 = vmatpush1.msra.mxu0 0.0
      %3164 = vmatprep.subr.mxu0 0.0
      %3165 = vmatpush1.msra.mxu0 0.0
      %3166 = vmatprep.mubr.f32.mxu0 0.0
      %3167 = vmatmul.mubr.f32.gmra.mrb[0].mxu0 %v3094
      %v3168 = vpop.f32.mrb[0].mxu0
      %v3169 = vadd.f32 0.0, %v3168
      %v3170 = vpop.f32.mrb[0].mxu0
      %v3171 = vadd.f32 0.0, %v3170
      %3172 = vdwg.mxu0
      %v3173 = vadd.f32 %v2191, %v3169
      %v3174 = vadd.f32 %v2192, %v3171
      %v3175 = vmax.f32 %v3173, 0.0
      %v3176 = vmax.f32 %v3174, 0.0
      %v3179 = vcombine.low %v3175, %v3176
      %3181 = vst [vmem:[%s143] sm:$0xff] %v3179
      %p3182 = scmp.lt.s32.totalorder %s13, 1
      %s3183 = scalar_select %p3182, %s13, 1
      %s3184 = smul.addr %s3183, 2
      %s3185 = smul.addr %s3184, 4
      %s3186 = scalar_lea.vmem %s2, %s3185
      // Predicated region
      $region29: #{spff_forward.1} parent=27 // pred_check
        %p3187 = pneg %p78
      $region30: #{spff_forward.1} parent=27 // pred_check_branch
        %3189 = sbr.rel (%p3187) target = $region32
      $region31: #{spff_forward.1} parent=27 // pred_region
        _
      $region32: #{spff_forward.1} parent=27 // pred_fallthru
        _
    $region28: #{spff_forward.1} parent=5 // pred_fallthru
      _
    %p3190 = scmp.le.s32.totalorder 2, %s8
    // Predicated region
    $region33: #{spff_forward.1} parent=5 // pred_check
      %p3191 = pneg %p3190
    $region34: #{spff_forward.1} parent=5 // pred_check_branch
      %3193 = sbr.rel (%p3191) target = $region36
    $region35: #{spff_forward.1} parent=5 // pred_region
      %s3194 = ssub.s32 %s8, 2
      // Predicated region
      $region37: #{spff_forward.1} parent=35 // pred_check
        %p3195 = pneg %p84
      $region38: #{spff_forward.1} parent=35 // pred_check_branch
        %3197 = sbr.rel (%p3195) target = $region40
      $region39: #{spff_forward.1} parent=35 // pred_region
        %p3198 = scmp.lt.s32.totalorder %s14, 1
        %s3199 = scalar_select %p3198, %s14, 1
        %s3200 = smul.addr %s3199, 2
        %s3201 = smul.addr %s3200, 4
        %s3202 = scalar_lea.vmem %s2, %s3201
      $region40: #{spff_forward.1} parent=35 // pred_fallthru
        _
    $region36: #{spff_forward.1} parent=5 // pred_fallthru
      _
  $region6: #{spff_forward.1} parent=0 // loop_footer
    %s12 = sadd.s32 1, %s8
  $region7: #{spff_forward.1} parent=0 // loop_footer_branch
    %7 = sbr.rel target = $region3
  $region8: #{spff_forward.1} parent=0 // loop_exit
    _

</llo_original>
